<compile_context>
chip_gen: v7x
topology: tpu7x:2x2x1
jax: 0.10.0
libtpu: 0.0.40
codegen_flags: <defaults>
</compile_context>

<pallas_src>
import functools

import jax
import jax.numpy as jnp
from jax.experimental import pallas as pl
from jax.experimental.pallas import tpu as pltpu

# ----------------------------- config ---------------------------------------
VOCAB = 100
TYPE_VOCAB = 2
MAX_POS = 16
HIDDEN = 32
HEADS = 4
HEAD_DIM = HIDDEN // HEADS
INTER = 64
LAYERS = 2
NUM_CLASSES = 4
PAD_CLASSES = 128          # lane-dense classifier output, sliced back to 4
LN_EPS = 1e-12             # BERT default
SMALL_ROWS = 8             # packed per-layer 1-row params -> one (8,128) tile
SMALL_LANES = 128


# ----------------------------- in-kernel helpers -----------------------------
def _layernorm(x, g, b, eps=LN_EPS):
    mu = jnp.mean(x, axis=-1, keepdims=True)
    var = jnp.mean((x - mu) ** 2, axis=-1, keepdims=True)
    return (x - mu) * jax.lax.rsqrt(var + eps) * g + b


# ----------------------------- the fused kernel ------------------------------
def _ayato_kernel(
    # inputs
    x0_ref, mask_ref, embln_ref,
    wqkv_ref, wo_ref, wi_ref, wf_ref, small_ref,
    pool_w_ref, pool_b_ref, fc_w_ref, fc_b_ref,
    # output
    out_ref,
    *, batch, seq,
):
    tokens = batch * seq
    scale = 1.0 / (HEAD_DIM ** 0.5)
    bf16 = jnp.bfloat16

    # ---- embedding LayerNorm (embedding sum computed host-side) -------------
    x = _layernorm(x0_ref[...], embln_ref[0:1, :], embln_ref[1:2, :])

    # additive mask, replicated once for all heads: (HEADS*B, 1, S)
    mask3 = jnp.concatenate([mask_ref[...][:, None, :]] * HEADS, axis=0)

    # ---- encoder layers (unrolled: miniature config, weights fit VMEM) ------
    for l in range(LAYERS):
        sp = small_ref[l]                              # (8, 128) packed params
        bqkv  = sp[0:1, :3 * HIDDEN]
        bo    = sp[1:2, :HIDDEN]
        ln1_g = sp[2:3, :HIDDEN]
        ln1_b = sp[3:4, :HIDDEN]
        bi    = sp[4:5, :INTER]
        bff   = sp[5:6, :HIDDEN]
        ln2_g = sp[6:7, :HIDDEN]
        ln2_b = sp[7:8, :HIDDEN]

        # fused QKV projection: one matmul, bias fused, single bf16 cast,
        # single reshape of the fused output.
        x_bf = x.astype(bf16)
        qkv = jnp.dot(x_bf, wqkv_ref[l], preferred_element_type=jnp.float32) + bqkv
        qkv = qkv.astype(bf16).reshape(batch, seq, 3 * HIDDEN)

        # per-head score matmuls (static lane slices), ONE stacked softmax
        s_list = []
        for h in range(HEADS):
            qh = qkv[:, :, h * HEAD_DIM:(h + 1) * HEAD_DIM]
            kh = qkv[:, :, HIDDEN + h * HEAD_DIM:HIDDEN + (h + 1) * HEAD_DIM]
            s_list.append(jnp.einsum("bqd,bkd->bqk", qh, kh,
                                     preferred_element_type=jnp.float32))
        s = jnp.concatenate(s_list, axis=0) * scale + mask3     # (H*B, Sq, Sk)
        s = s - jnp.max(s, axis=-1, keepdims=True)
        p = jnp.exp(s)
        p = p * pl.reciprocal(jnp.sum(p, axis=-1, keepdims=True), approx=True)
        p_bf = p.astype(bf16)

        # per-head context, merge heads along lanes, ONE output projection
        ctx_list = []
        for h in range(HEADS):
            vh = qkv[:, :, 2 * HIDDEN + h * HEAD_DIM:2 * HIDDEN + (h + 1) * HEAD_DIM]
            ctx_list.append(jnp.einsum("bqk,bkd->bqd",
                                       p_bf[h * batch:(h + 1) * batch], vh,
                                       preferred_element_type=jnp.float32))
        ctx = jnp.concatenate(ctx_list, axis=-1).reshape(tokens, HIDDEN)

        attn = jnp.dot(ctx.astype(bf16), wo_ref[l],
                       preferred_element_type=jnp.float32) + bo
        xa = _layernorm(x + attn, ln1_g, ln1_b)

        # FFN: up-proj + GELU + down-proj, residual + LayerNorm 2
        # TODO(synk): HF BERT uses exact erf-GELU; tanh-approx GELU used here.
        ff = jax.nn.gelu(jnp.dot(xa.astype(bf16), wi_ref[l],
                                 preferred_element_type=jnp.float32) + bi,
                         approximate=True)
        ff = jnp.dot(ff.astype(bf16), wf_ref[l],
                     preferred_element_type=jnp.float32) + bff
        x = _layernorm(xa + ff, ln2_g, ln2_b)

    # ---- pooler ([CLS] -> dense + tanh) + classifier (lane-padded output) ---
    cls = x.reshape(batch, seq, HIDDEN)[:, 0, :]                  # (B, H)
    pooled = jnp.tanh(jnp.dot(cls.astype(bf16), pool_w_ref[...],
                              preferred_element_type=jnp.float32) + pool_b_ref[...])
    out_ref[...] = (jnp.dot(pooled.astype(bf16), fc_w_ref[...],
                            preferred_element_type=jnp.float32)
                    + fc_b_ref[...]).astype(out_ref.dtype)


# ----------------------------- parameters ------------------------------------
def init_params(key):
    ks = iter(jax.random.split(key, 64))

    def w(shape):
        return jax.random.normal(next(ks), shape, jnp.float32) * 0.02

    zeros = lambda s: jnp.zeros(s, jnp.float32)
    ones = lambda s: jnp.ones(s, jnp.float32)

    params = {
        "word_emb": w((VOCAB, HIDDEN)),
        "pos_emb": w((MAX_POS, HIDDEN)),
        "type_emb": w((TYPE_VOCAB, HIDDEN)),
        "emb_ln_g": ones((HIDDEN,)),
        "emb_ln_b": zeros((HIDDEN,)),
        "layers": [],
        "pool_w": w((HIDDEN, HIDDEN)),
        "pool_b": zeros((HIDDEN,)),
        "fc_w": w((HIDDEN, NUM_CLASSES)),
        "fc_b": zeros((NUM_CLASSES,)),
    }
    for _ in range(LAYERS):
        params["layers"].append({
            "wq": w((HIDDEN, HIDDEN)), "bq": zeros((HIDDEN,)),
            "wk": w((HIDDEN, HIDDEN)), "bk": zeros((HIDDEN,)),
            "wv": w((HIDDEN, HIDDEN)), "bv": zeros((HIDDEN,)),
            "wo": w((HIDDEN, HIDDEN)), "bo": zeros((HIDDEN,)),
            "ln1_g": ones((HIDDEN,)), "ln1_b": zeros((HIDDEN,)),
            "wi": w((HIDDEN, INTER)), "bi": zeros((INTER,)),
            "wf": w((INTER, HIDDEN)), "bf": zeros((HIDDEN,)),
            "ln2_g": ones((HIDDEN,)), "ln2_b": zeros((HIDDEN,)),
        })
    return params


def pack_params(p):
    """Host-side packing:
       - wq|wk|wv fused column-wise into one (LAYERS, H, 3H) bf16 tensor
       - all per-layer 1-row vectors packed into one (LAYERS, 8, 128) f32 tile
       - classifier weights lane-padded to 128 output columns."""
    bf16 = jnp.bfloat16
    layers = p["layers"]

    def small_rows(lp):
        def row(v):
            v = v.reshape(-1).astype(jnp.float32)
            return jnp.pad(v, (0, SMALL_LANES - v.shape[0]))
        return jnp.stack([
            row(jnp.concatenate([lp["bq"], lp["bk"], lp["bv"]])),   # row 0: bqkv
            row(lp["bo"]),                                          # row 1
            row(lp["ln1_g"]), row(lp["ln1_b"]),                     # rows 2-3
            row(lp["bi"]),                                          # row 4
            row(lp["bf"]),                                          # row 5
            row(lp["ln2_g"]), row(lp["ln2_b"]),                     # rows 6-7
        ])

    wqkv = jnp.stack([jnp.concatenate([lp["wq"], lp["wk"], lp["wv"]], axis=1)
                      for lp in layers]).astype(bf16)               # (L, H, 3H)
    wo = jnp.stack([lp["wo"] for lp in layers]).astype(bf16)        # (L, H, H)
    wi = jnp.stack([lp["wi"] for lp in layers]).astype(bf16)        # (L, H, I)
    wf = jnp.stack([lp["wf"] for lp in layers]).astype(bf16)        # (L, I, H)
    small = jnp.stack([small_rows(lp) for lp in layers])            # (L, 8, 128)

    fc_w = jnp.pad(p["fc_w"], ((0, 0), (0, PAD_CLASSES - NUM_CLASSES)))
    fc_b = jnp.pad(p["fc_b"], (0, PAD_CLASSES - NUM_CLASSES))

    return {
        "word_emb": p["word_emb"], "pos_emb": p["pos_emb"], "type_emb": p["type_emb"],
        "embln": jnp.stack([p["emb_ln_g"], p["emb_ln_b"]]),         # (2, H)
        "wqkv": wqkv, "wo": wo, "wi": wi, "wf": wf, "small": small,
        "pool_w": p["pool_w"].astype(bf16),
        "pool_b": p["pool_b"].reshape(1, HIDDEN),
        "fc_w": fc_w.astype(bf16),
        "fc_b": fc_b.reshape(1, PAD_CLASSES),
    }


# ----------------------------- forward pass ----------------------------------
def ayato_forward(packed, input_ids, attention_mask):
    bb, ss = input_ids.shape

    # embeddings (gather is JAX glue; LayerNorm happens inside the kernel)
    we = packed["word_emb"][input_ids]                        # (B, S, H)
    pe = packed["pos_emb"][:ss][None, :, :]                   # (1, S, H)
    te = packed["type_emb"][0][None, None, :]                 # token_type_ids == 0
    x0 = (we + pe + te).reshape(bb * ss, HIDDEN)

    # extended additive attention mask, kept at (B, S)
    ext = (1.0 - attention_mask.astype(jnp.float32)) * -10000.0

    kernel = functools.partial(_ayato_kernel, batch=bb, seq=ss)

    full2 = lambda shape: pl.BlockSpec(shape, lambda i: (0, 0))
    full3 = lambda shape: pl.BlockSpec(shape, lambda i: (0, 0, 0))

    in_specs = [
        full2((bb * ss, HIDDEN)),                  # x0 (embedding sum)
        full2((bb, ss)),                           # additive mask
        full2((2, HIDDEN)),                        # embedding LN gamma/beta
        full3((LAYERS, HIDDEN, 3 * HIDDEN)),       # fused wqkv (bf16)
        full3((LAYERS, HIDDEN, HIDDEN)),           # wo (bf16)
        full3((LAYERS, HIDDEN, INTER)),            # wi (bf16)
        full3((LAYERS, INTER, HIDDEN)),            # wf (bf16)
        full3((LAYERS, SMALL_ROWS, SMALL_LANES)),  # packed small params (f32)
        full2((HIDDEN, HIDDEN)),                   # pool_w (bf16)
        full2((1, HIDDEN)),                        # pool_b
        full2((HIDDEN, PAD_CLASSES)),              # fc_w lane-padded (bf16)
        full2((1, PAD_CLASSES)),                   # fc_b lane-padded
    ]

    logits_pad = pl.pallas_call(
        kernel,
        out_shape=jax.ShapeDtypeStruct((bb, PAD_CLASSES), jnp.float32),
        grid_spec=pltpu.PrefetchScalarGridSpec(
            num_scalar_prefetch=0,
            grid=(1,),                               # single step; layers unrolled
            in_specs=in_specs,
            out_specs=pl.BlockSpec((bb, PAD_CLASSES), lambda i: (0, 0)),
        ),
        compiler_params=pltpu.CompilerParams(
            dimension_semantics=("arbitrary",),
        ),
    )(
        x0, ext, packed["embln"],
        packed["wqkv"], packed["wo"], packed["wi"], packed["wf"], packed["small"],
        packed["pool_w"], packed["pool_b"], packed["fc_w"], packed["fc_b"],
    )
    return logits_pad[:, :NUM_CLASSES]                        # (B, 4)


# ----------------------------- main ------------------------------------------
if __name__ == "__main__":
    key = jax.random.PRNGKey(0)
    pkey, ikey = jax.random.split(key)

    params = init_params(pkey)
    packed = pack_params(params)

    B, S = 2, 8
    input_ids = jax.random.randint(ikey, (B, S), 0, VOCAB, dtype=jnp.int32)
    attention_mask = jnp.array(
        [[1, 1, 1, 1, 1, 1, 1, 1],
         [1, 1, 1, 1, 1, 0, 0, 0]], dtype=jnp.int32
    )

    fwd = jax.jit(ayato_forward)
    logits = jax.block_until_ready(fwd(packed, input_ids, attention_mask))

    assert logits.shape == (B, NUM_CLASSES)
    assert bool(jnp.all(jnp.isfinite(logits)))
    print("KERNEL_OK")
</pallas_src>

<mosaic_0001>
module attributes {stable_mosaic.version = 11 : i64} {
  func.func @_ayato_kernel(%arg0: i32, %arg1: memref<16x32xf32, #tpu.memory_space<vmem>>, %arg2: memref<2x8xf32, #tpu.memory_space<vmem>>, %arg3: memref<2x32xf32, #tpu.memory_space<vmem>>, %arg4: memref<2x32x96xbf16, #tpu.memory_space<vmem>>, %arg5: memref<2x32x32xbf16, #tpu.memory_space<vmem>>, %arg6: memref<2x32x64xbf16, #tpu.memory_space<vmem>>, %arg7: memref<2x64x32xbf16, #tpu.memory_space<vmem>>, %arg8: memref<2x8x128xf32, #tpu.memory_space<vmem>>, %arg9: memref<32x32xbf16, #tpu.memory_space<vmem>>, %arg10: memref<1x32xf32, #tpu.memory_space<vmem>>, %arg11: memref<32x128xbf16, #tpu.memory_space<vmem>>, %arg12: memref<1x128xf32, #tpu.memory_space<vmem>>, %arg13: memref<2x128xf32, #tpu.memory_space<vmem>>) attributes {dimension_semantics = [#tpu.dimension_semantics<arbitrary>], iteration_bounds = array<i64: 1>, scalar_prefetch = 0 : i64, scratch_operands = 0 : i64, tpu.core_type = #tpu.core_type<tc>, window_params = [{pipeline_mode = #tpu.pipeline_mode<synchronous>, transform_indices = @transform_0, window_bounds = array<i64: 16, 32>}, {pipeline_mode = #tpu.pipeline_mode<synchronous>, transform_indices = @transform_1, window_bounds = array<i64: 2, 8>}, {pipeline_mode = #tpu.pipeline_mode<synchronous>, transform_indices = @transform_2, window_bounds = array<i64: 2, 32>}, {pipeline_mode = #tpu.pipeline_mode<synchronous>, transform_indices = @transform_3, window_bounds = array<i64: 2, 32, 96>}, {pipeline_mode = #tpu.pipeline_mode<synchronous>, transform_indices = @transform_4, window_bounds = array<i64: 2, 32, 32>}, {pipeline_mode = #tpu.pipeline_mode<synchronous>, transform_indices = @transform_5, window_bounds = array<i64: 2, 32, 64>}, {pipeline_mode = #tpu.pipeline_mode<synchronous>, transform_indices = @transform_6, window_bounds = array<i64: 2, 64, 32>}, {pipeline_mode = #tpu.pipeline_mode<synchronous>, transform_indices = @transform_7, window_bounds = array<i64: 2, 8, 128>}, {pipeline_mode = #tpu.pipeline_mode<synchronous>, transform_indices = @transform_8, window_bounds = array<i64: 32, 32>}, {pipeline_mode = #tpu.pipeline_mode<synchronous>, transform_indices = @transform_9, window_bounds = array<i64: 1, 32>}, {pipeline_mode = #tpu.pipeline_mode<synchronous>, transform_indices = @transform_10, window_bounds = array<i64: 32, 128>}, {pipeline_mode = #tpu.pipeline_mode<synchronous>, transform_indices = @transform_11, window_bounds = array<i64: 1, 128>}, {pipeline_mode = #tpu.pipeline_mode<synchronous>, transform_indices = @transform_12, window_bounds = array<i64: 2, 128>}]} {
    %c0 = arith.constant 0 : index
    %c0_0 = arith.constant 0 : index
    %0 = vector.load %arg1[%c0, %c0_0] : memref<16x32xf32, #tpu.memory_space<vmem>>, vector<16x32xf32>
    %c0_1 = arith.constant 0 : index
    %c0_2 = arith.constant 0 : index
    %1 = vector.load %arg3[%c0_1, %c0_2] : memref<2x32xf32, #tpu.memory_space<vmem>>, vector<1x32xf32>
    %c1 = arith.constant 1 : index
    %c0_3 = arith.constant 0 : index
    %2 = vector.load %arg3[%c1, %c0_3] : memref<2x32xf32, #tpu.memory_space<vmem>>, vector<1x32xf32>
    %cst = arith.constant dense<0.000000e+00> : vector<16xf32>
    %3 = vector.multi_reduction <add>, %0, %cst [1] : vector<16x32xf32> to vector<16xf32>
    %4 = vector.shape_cast %3 : vector<16xf32> to vector<16x1xf32>
    %cst_4 = arith.constant 3.200000e+01 : f32
    %5 = vector.broadcast %cst_4 : f32 to vector<16x1xf32>
    %6 = arith.divf %4, %5 : vector<16x1xf32>
    %7 = vector.broadcast %6 : vector<16x1xf32> to vector<16x32xf32>
    %8 = arith.subf %0, %7 : vector<16x32xf32>
    %9 = arith.mulf %8, %8 : vector<16x32xf32>
    %cst_5 = arith.constant dense<0.000000e+00> : vector<16xf32>
    %10 = vector.multi_reduction <add>, %9, %cst_5 [1] : vector<16x32xf32> to vector<16xf32>
    %11 = vector.shape_cast %10 : vector<16xf32> to vector<16x1xf32>
    %cst_6 = arith.constant 3.200000e+01 : f32
    %12 = vector.broadcast %cst_6 : f32 to vector<16x1xf32>
    %13 = arith.divf %11, %12 : vector<16x1xf32>
    %14 = vector.broadcast %6 : vector<16x1xf32> to vector<16x32xf32>
    %15 = arith.subf %0, %14 : vector<16x32xf32>
    %cst_7 = arith.constant 9.99999996E-13 : f32
    %16 = vector.broadcast %cst_7 : f32 to vector<16x1xf32>
    %17 = arith.addf %13, %16 : vector<16x1xf32>
    %18 = math.rsqrt %17 : vector<16x1xf32>
    %19 = vector.broadcast %18 : vector<16x1xf32> to vector<16x32xf32>
    %20 = arith.mulf %15, %19 : vector<16x32xf32>
    %21 = vector.broadcast %1 : vector<1x32xf32> to vector<16x32xf32>
    %22 = arith.mulf %20, %21 : vector<16x32xf32>
    %23 = vector.broadcast %2 : vector<1x32xf32> to vector<16x32xf32>
    %24 = arith.addf %22, %23 : vector<16x32xf32>
    %c0_8 = arith.constant 0 : index
    %c0_9 = arith.constant 0 : index
    %25 = vector.load %arg2[%c0_8, %c0_9] : memref<2x8xf32, #tpu.memory_space<vmem>>, vector<2x8xf32>
    %26 = vector.shape_cast %25 : vector<2x8xf32> to vector<2x1x8xf32>
    %27 = tpu.concatenate %26, %26, %26, %26 in 0 : vector<2x1x8xf32>, vector<2x1x8xf32>, vector<2x1x8xf32>, vector<2x1x8xf32> -> vector<8x1x8xf32>
    %c0_10 = arith.constant 0 : index
    %c0_11 = arith.constant 0 : index
    %c0_12 = arith.constant 0 : index
    %28 = vector.load %arg8[%c0_10, %c0_11, %c0_12] : memref<2x8x128xf32, #tpu.memory_space<vmem>>, vector<1x8x128xf32>
    %29 = vector.shape_cast %28 : vector<1x8x128xf32> to vector<8x128xf32>
    %30 = vector.extract_strided_slice %29 {offsets = [0, 0], sizes = [1, 96], strides = [1, 1]} : vector<8x128xf32> to vector<1x96xf32>
    %31 = vector.extract_strided_slice %29 {offsets = [1, 0], sizes = [1, 32], strides = [1, 1]} : vector<8x128xf32> to vector<1x32xf32>
    %32 = vector.extract_strided_slice %29 {offsets = [2, 0], sizes = [1, 32], strides = [1, 1]} : vector<8x128xf32> to vector<1x32xf32>
    %33 = vector.extract_strided_slice %29 {offsets = [3, 0], sizes = [1, 32], strides = [1, 1]} : vector<8x128xf32> to vector<1x32xf32>
    %34 = vector.extract_strided_slice %29 {offsets = [4, 0], sizes = [1, 64], strides = [1, 1]} : vector<8x128xf32> to vector<1x64xf32>
    %35 = vector.extract_strided_slice %29 {offsets = [5, 0], sizes = [1, 32], strides = [1, 1]} : vector<8x128xf32> to vector<1x32xf32>
    %36 = vector.extract_strided_slice %29 {offsets = [6, 0], sizes = [1, 32], strides = [1, 1]} : vector<8x128xf32> to vector<1x32xf32>
    %37 = vector.extract_strided_slice %29 {offsets = [7, 0], sizes = [1, 32], strides = [1, 1]} : vector<8x128xf32> to vector<1x32xf32>
    %38 = arith.truncf %24 : vector<16x32xf32> to vector<16x32xbf16>
    %c0_13 = arith.constant 0 : index
    %c0_14 = arith.constant 0 : index
    %c0_15 = arith.constant 0 : index
    %39 = vector.load %arg4[%c0_13, %c0_14, %c0_15] : memref<2x32x96xbf16, #tpu.memory_space<vmem>>, vector<1x32x96xbf16>
    %40 = vector.shape_cast %39 : vector<1x32x96xbf16> to vector<32x96xbf16>
    %cst_16 = arith.constant dense<0.000000e+00> : vector<16x96xf32>
    %41 = tpu.matmul %38, %40, %cst_16 {dimension_numbers = #tpu.dot_dimension_numbers<[1], [0], [0], [1], [0, 0, 1, 1], [], []>} : vector<16x32xbf16>, vector<32x96xbf16>, vector<16x96xf32> -> vector<16x96xf32>
    %42 = vector.broadcast %30 : vector<1x96xf32> to vector<16x96xf32>
    %43 = arith.addf %41, %42 : vector<16x96xf32>
    %44 = arith.truncf %43 : vector<16x96xf32> to vector<16x96xbf16>
    %45 = vector.shape_cast %44 : vector<16x96xbf16> to vector<2x8x96xbf16>
    %46 = vector.extract_strided_slice %45 {offsets = [0, 0, 0], sizes = [2, 8, 8], strides = [1, 1, 1]} : vector<2x8x96xbf16> to vector<2x8x8xbf16>
    %47 = vector.extract_strided_slice %45 {offsets = [0, 0, 32], sizes = [2, 8, 8], strides = [1, 1, 1]} : vector<2x8x96xbf16> to vector<2x8x8xbf16>
    "tpu.trace_start"() <{level = 10 : i32, message = "bqd,bkd->bqk"}> : () -> ()
    %cst_17 = arith.constant dense<0.000000e+00> : vector<2x8x8xf32>
    %48 = tpu.matmul %46, %47, %cst_17 {dimension_numbers = #tpu.dot_dimension_numbers<[2], [2], [1], [1], [0, 0, 0, 1, 1, 1], [0], [0]>} : vector<2x8x8xbf16>, vector<2x8x8xbf16>, vector<2x8x8xf32> -> vector<2x8x8xf32>
    "tpu.trace_stop"() : () -> ()
    %49 = vector.extract_strided_slice %45 {offsets = [0, 0, 8], sizes = [2, 8, 8], strides = [1, 1, 1]} : vector<2x8x96xbf16> to vector<2x8x8xbf16>
    %50 = vector.extract_strided_slice %45 {offsets = [0, 0, 40], sizes = [2, 8, 8], strides = [1, 1, 1]} : vector<2x8x96xbf16> to vector<2x8x8xbf16>
    "tpu.trace_start"() <{level = 10 : i32, message = "bqd,bkd->bqk"}> : () -> ()
    %cst_18 = arith.constant dense<0.000000e+00> : vector<2x8x8xf32>
    %51 = tpu.matmul %49, %50, %cst_18 {dimension_numbers = #tpu.dot_dimension_numbers<[2], [2], [1], [1], [0, 0, 0, 1, 1, 1], [0], [0]>} : vector<2x8x8xbf16>, vector<2x8x8xbf16>, vector<2x8x8xf32> -> vector<2x8x8xf32>
    "tpu.trace_stop"() : () -> ()
    %52 = vector.extract_strided_slice %45 {offsets = [0, 0, 16], sizes = [2, 8, 8], strides = [1, 1, 1]} : vector<2x8x96xbf16> to vector<2x8x8xbf16>
    %53 = vector.extract_strided_slice %45 {offsets = [0, 0, 48], sizes = [2, 8, 8], strides = [1, 1, 1]} : vector<2x8x96xbf16> to vector<2x8x8xbf16>
    "tpu.trace_start"() <{level = 10 : i32, message = "bqd,bkd->bqk"}> : () -> ()
    %cst_19 = arith.constant dense<0.000000e+00> : vector<2x8x8xf32>
    %54 = tpu.matmul %52, %53, %cst_19 {dimension_numbers = #tpu.dot_dimension_numbers<[2], [2], [1], [1], [0, 0, 0, 1, 1, 1], [0], [0]>} : vector<2x8x8xbf16>, vector<2x8x8xbf16>, vector<2x8x8xf32> -> vector<2x8x8xf32>
    "tpu.trace_stop"() : () -> ()
    %55 = vector.extract_strided_slice %45 {offsets = [0, 0, 24], sizes = [2, 8, 8], strides = [1, 1, 1]} : vector<2x8x96xbf16> to vector<2x8x8xbf16>
    %56 = vector.extract_strided_slice %45 {offsets = [0, 0, 56], sizes = [2, 8, 8], strides = [1, 1, 1]} : vector<2x8x96xbf16> to vector<2x8x8xbf16>
    "tpu.trace_start"() <{level = 10 : i32, message = "bqd,bkd->bqk"}> : () -> ()
    %cst_20 = arith.constant dense<0.000000e+00> : vector<2x8x8xf32>
    %57 = tpu.matmul %55, %56, %cst_20 {dimension_numbers = #tpu.dot_dimension_numbers<[2], [2], [1], [1], [0, 0, 0, 1, 1, 1], [0], [0]>} : vector<2x8x8xbf16>, vector<2x8x8xbf16>, vector<2x8x8xf32> -> vector<2x8x8xf32>
    "tpu.trace_stop"() : () -> ()
    %58 = tpu.concatenate %48, %51, %54, %57 in 0 : vector<2x8x8xf32>, vector<2x8x8xf32>, vector<2x8x8xf32>, vector<2x8x8xf32> -> vector<8x8x8xf32>
    %cst_21 = arith.constant 0.353553385 : f32
    %59 = vector.broadcast %cst_21 : f32 to vector<8x8x8xf32>
    %60 = arith.mulf %58, %59 : vector<8x8x8xf32>
    %61 = vector.broadcast %27 : vector<8x1x8xf32> to vector<8x8x8xf32>
    %62 = arith.addf %60, %61 : vector<8x8x8xf32>
    %cst_22 = arith.constant dense<0xFF800000> : vector<8x8xf32>
    %63 = vector.multi_reduction <maximumf>, %62, %cst_22 [2] : vector<8x8x8xf32> to vector<8x8xf32>
    %64 = vector.shape_cast %63 : vector<8x8xf32> to vector<8x8x1xf32>
    %65 = vector.broadcast %64 : vector<8x8x1xf32> to vector<8x8x8xf32>
    %66 = arith.subf %62, %65 : vector<8x8x8xf32>
    %67 = math.exp %66 : vector<8x8x8xf32>
    %cst_23 = arith.constant dense<0.000000e+00> : vector<8x8xf32>
    %68 = vector.multi_reduction <add>, %67, %cst_23 [2] : vector<8x8x8xf32> to vector<8x8xf32>
    %69 = vector.shape_cast %68 : vector<8x8xf32> to vector<8x8x1xf32>
    %70 = tpu.reciprocal %69 {approx = true} : vector<8x8x1xf32> -> vector<8x8x1xf32>
    %71 = vector.broadcast %70 : vector<8x8x1xf32> to vector<8x8x8xf32>
    %72 = arith.mulf %67, %71 : vector<8x8x8xf32>
    %73 = arith.truncf %72 : vector<8x8x8xf32> to vector<8x8x8xbf16>
    %74 = vector.extract_strided_slice %45 {offsets = [0, 0, 64], sizes = [2, 8, 8], strides = [1, 1, 1]} : vector<2x8x96xbf16> to vector<2x8x8xbf16>
    %75 = vector.extract_strided_slice %73 {offsets = [0, 0, 0], sizes = [2, 8, 8], strides = [1, 1, 1]} : vector<8x8x8xbf16> to vector<2x8x8xbf16>
    "tpu.trace_start"() <{level = 10 : i32, message = "bqk,bkd->bqd"}> : () -> ()
    %cst_24 = arith.constant dense<0.000000e+00> : vector<2x8x8xf32>
    %76 = tpu.matmul %75, %74, %cst_24 {dimension_numbers = #tpu.dot_dimension_numbers<[2], [1], [1], [2], [0, 0, 0, 1, 1, 2], [0], [0]>} : vector<2x8x8xbf16>, vector<2x8x8xbf16>, vector<2x8x8xf32> -> vector<2x8x8xf32>
    "tpu.trace_stop"() : () -> ()
    %77 = vector.extract_strided_slice %45 {offsets = [0, 0, 72], sizes = [2, 8, 8], strides = [1, 1, 1]} : vector<2x8x96xbf16> to vector<2x8x8xbf16>
    %78 = vector.extract_strided_slice %73 {offsets = [2, 0, 0], sizes = [2, 8, 8], strides = [1, 1, 1]} : vector<8x8x8xbf16> to vector<2x8x8xbf16>
    "tpu.trace_start"() <{level = 10 : i32, message = "bqk,bkd->bqd"}> : () -> ()
    %cst_25 = arith.constant dense<0.000000e+00> : vector<2x8x8xf32>
    %79 = tpu.matmul %78, %77, %cst_25 {dimension_numbers = #tpu.dot_dimension_numbers<[2], [1], [1], [2], [0, 0, 0, 1, 1, 2], [0], [0]>} : vector<2x8x8xbf16>, vector<2x8x8xbf16>, vector<2x8x8xf32> -> vector<2x8x8xf32>
    "tpu.trace_stop"() : () -> ()
    %80 = vector.extract_strided_slice %45 {offsets = [0, 0, 80], sizes = [2, 8, 8], strides = [1, 1, 1]} : vector<2x8x96xbf16> to vector<2x8x8xbf16>
    %81 = vector.extract_strided_slice %73 {offsets = [4, 0, 0], sizes = [2, 8, 8], strides = [1, 1, 1]} : vector<8x8x8xbf16> to vector<2x8x8xbf16>
    "tpu.trace_start"() <{level = 10 : i32, message = "bqk,bkd->bqd"}> : () -> ()
    %cst_26 = arith.constant dense<0.000000e+00> : vector<2x8x8xf32>
    %82 = tpu.matmul %81, %80, %cst_26 {dimension_numbers = #tpu.dot_dimension_numbers<[2], [1], [1], [2], [0, 0, 0, 1, 1, 2], [0], [0]>} : vector<2x8x8xbf16>, vector<2x8x8xbf16>, vector<2x8x8xf32> -> vector<2x8x8xf32>
    "tpu.trace_stop"() : () -> ()
    %83 = vector.extract_strided_slice %45 {offsets = [0, 0, 88], sizes = [2, 8, 8], strides = [1, 1, 1]} : vector<2x8x96xbf16> to vector<2x8x8xbf16>
    %84 = vector.extract_strided_slice %73 {offsets = [6, 0, 0], sizes = [2, 8, 8], strides = [1, 1, 1]} : vector<8x8x8xbf16> to vector<2x8x8xbf16>
    "tpu.trace_start"() <{level = 10 : i32, message = "bqk,bkd->bqd"}> : () -> ()
    %cst_27 = arith.constant dense<0.000000e+00> : vector<2x8x8xf32>
    %85 = tpu.matmul %84, %83, %cst_27 {dimension_numbers = #tpu.dot_dimension_numbers<[2], [1], [1], [2], [0, 0, 0, 1, 1, 2], [0], [0]>} : vector<2x8x8xbf16>, vector<2x8x8xbf16>, vector<2x8x8xf32> -> vector<2x8x8xf32>
    "tpu.trace_stop"() : () -> ()
    %86 = tpu.concatenate %76, %79, %82, %85 in 2 : vector<2x8x8xf32>, vector<2x8x8xf32>, vector<2x8x8xf32>, vector<2x8x8xf32> -> vector<2x8x32xf32>
    %87 = vector.shape_cast %86 : vector<2x8x32xf32> to vector<16x32xf32>
    %88 = arith.truncf %87 : vector<16x32xf32> to vector<16x32xbf16>
    %c0_28 = arith.constant 0 : index
    %c0_29 = arith.constant 0 : index
    %c0_30 = arith.constant 0 : index
    %89 = vector.load %arg5[%c0_28, %c0_29, %c0_30] : memref<2x32x32xbf16, #tpu.memory_space<vmem>>, vector<1x32x32xbf16>
    %90 = vector.shape_cast %89 : vector<1x32x32xbf16> to vector<32x32xbf16>
    %cst_31 = arith.constant dense<0.000000e+00> : vector<16x32xf32>
    %91 = tpu.matmul %88, %90, %cst_31 {dimension_numbers = #tpu.dot_dimension_numbers<[1], [0], [0], [1], [0, 0, 1, 1], [], []>} : vector<16x32xbf16>, vector<32x32xbf16>, vector<16x32xf32> -> vector<16x32xf32>
    %92 = vector.broadcast %31 : vector<1x32xf32> to vector<16x32xf32>
    %93 = arith.addf %91, %92 : vector<16x32xf32>
    %94 = arith.addf %24, %93 : vector<16x32xf32>
    %cst_32 = arith.constant dense<0.000000e+00> : vector<16xf32>
    %95 = vector.multi_reduction <add>, %94, %cst_32 [1] : vector<16x32xf32> to vector<16xf32>
    %96 = vector.shape_cast %95 : vector<16xf32> to vector<16x1xf32>
    %cst_33 = arith.constant 3.200000e+01 : f32
    %97 = vector.broadcast %cst_33 : f32 to vector<16x1xf32>
    %98 = arith.divf %96, %97 : vector<16x1xf32>
    %99 = vector.broadcast %98 : vector<16x1xf32> to vector<16x32xf32>
    %100 = arith.subf %94, %99 : vector<16x32xf32>
    %101 = arith.mulf %100, %100 : vector<16x32xf32>
    %cst_34 = arith.constant dense<0.000000e+00> : vector<16xf32>
    %102 = vector.multi_reduction <add>, %101, %cst_34 [1] : vector<16x32xf32> to vector<16xf32>
    %103 = vector.shape_cast %102 : vector<16xf32> to vector<16x1xf32>
    %cst_35 = arith.constant 3.200000e+01 : f32
    %104 = vector.broadcast %cst_35 : f32 to vector<16x1xf32>
    %105 = arith.divf %103, %104 : vector<16x1xf32>
    %106 = vector.broadcast %98 : vector<16x1xf32> to vector<16x32xf32>
    %107 = arith.subf %94, %106 : vector<16x32xf32>
    %cst_36 = arith.constant 9.99999996E-13 : f32
    %108 = vector.broadcast %cst_36 : f32 to vector<16x1xf32>
    %109 = arith.addf %105, %108 : vector<16x1xf32>
    %110 = math.rsqrt %109 : vector<16x1xf32>
    %111 = vector.broadcast %110 : vector<16x1xf32> to vector<16x32xf32>
    %112 = arith.mulf %107, %111 : vector<16x32xf32>
    %113 = vector.broadcast %32 : vector<1x32xf32> to vector<16x32xf32>
    %114 = arith.mulf %112, %113 : vector<16x32xf32>
    %115 = vector.broadcast %33 : vector<1x32xf32> to vector<16x32xf32>
    %116 = arith.addf %114, %115 : vector<16x32xf32>
    %117 = arith.truncf %116 : vector<16x32xf32> to vector<16x32xbf16>
    %c0_37 = arith.constant 0 : index
    %c0_38 = arith.constant 0 : index
    %c0_39 = arith.constant 0 : index
    %118 = vector.load %arg6[%c0_37, %c0_38, %c0_39] : memref<2x32x64xbf16, #tpu.memory_space<vmem>>, vector<1x32x64xbf16>
    %119 = vector.shape_cast %118 : vector<1x32x64xbf16> to vector<32x64xbf16>
    %cst_40 = arith.constant dense<0.000000e+00> : vector<16x64xf32>
    %120 = tpu.matmul %117, %119, %cst_40 {dimension_numbers = #tpu.dot_dimension_numbers<[1], [0], [0], [1], [0, 0, 1, 1], [], []>} : vector<16x32xbf16>, vector<32x64xbf16>, vector<16x64xf32> -> vector<16x64xf32>
    %121 = vector.broadcast %34 : vector<1x64xf32> to vector<16x64xf32>
    %122 = arith.addf %120, %121 : vector<16x64xf32>
    %123 = arith.mulf %122, %122 : vector<16x64xf32>
    %124 = arith.mulf %122, %123 : vector<16x64xf32>
    %cst_41 = arith.constant 4.471500e-02 : f32
    %125 = vector.broadcast %cst_41 : f32 to vector<16x64xf32>
    %126 = arith.mulf %125, %124 : vector<16x64xf32>
    %127 = arith.addf %122, %126 : vector<16x64xf32>
    %cst_42 = arith.constant 0.797884583 : f32
    %128 = vector.broadcast %cst_42 : f32 to vector<16x64xf32>
    %129 = arith.mulf %128, %127 : vector<16x64xf32>
    %130 = math.tanh %129 : vector<16x64xf32>
    %cst_43 = arith.constant 1.000000e+00 : f32
    %131 = vector.broadcast %cst_43 : f32 to vector<16x64xf32>
    %132 = arith.addf %131, %130 : vector<16x64xf32>
    %cst_44 = arith.constant 5.000000e-01 : f32
    %133 = vector.broadcast %cst_44 : f32 to vector<16x64xf32>
    %134 = arith.mulf %133, %132 : vector<16x64xf32>
    %135 = arith.mulf %122, %134 : vector<16x64xf32>
    %136 = arith.truncf %135 : vector<16x64xf32> to vector<16x64xbf16>
    %c0_45 = arith.constant 0 : index
    %c0_46 = arith.constant 0 : index
    %c0_47 = arith.constant 0 : index
    %137 = vector.load %arg7[%c0_45, %c0_46, %c0_47] : memref<2x64x32xbf16, #tpu.memory_space<vmem>>, vector<1x64x32xbf16>
    %138 = vector.shape_cast %137 : vector<1x64x32xbf16> to vector<64x32xbf16>
    %cst_48 = arith.constant dense<0.000000e+00> : vector<16x32xf32>
    %139 = tpu.matmul %136, %138, %cst_48 {dimension_numbers = #tpu.dot_dimension_numbers<[1], [0], [0], [1], [0, 0, 1, 1], [], []>} : vector<16x64xbf16>, vector<64x32xbf16>, vector<16x32xf32> -> vector<16x32xf32>
    %140 = vector.broadcast %35 : vector<1x32xf32> to vector<16x32xf32>
    %141 = arith.addf %139, %140 : vector<16x32xf32>
    %142 = arith.addf %116, %141 : vector<16x32xf32>
    %cst_49 = arith.constant dense<0.000000e+00> : vector<16xf32>
    %143 = vector.multi_reduction <add>, %142, %cst_49 [1] : vector<16x32xf32> to vector<16xf32>
    %144 = vector.shape_cast %143 : vector<16xf32> to vector<16x1xf32>
    %cst_50 = arith.constant 3.200000e+01 : f32
    %145 = vector.broadcast %cst_50 : f32 to vector<16x1xf32>
    %146 = arith.divf %144, %145 : vector<16x1xf32>
    %147 = vector.broadcast %146 : vector<16x1xf32> to vector<16x32xf32>
    %148 = arith.subf %142, %147 : vector<16x32xf32>
    %149 = arith.mulf %148, %148 : vector<16x32xf32>
    %cst_51 = arith.constant dense<0.000000e+00> : vector<16xf32>
    %150 = vector.multi_reduction <add>, %149, %cst_51 [1] : vector<16x32xf32> to vector<16xf32>
    %151 = vector.shape_cast %150 : vector<16xf32> to vector<16x1xf32>
    %cst_52 = arith.constant 3.200000e+01 : f32
    %152 = vector.broadcast %cst_52 : f32 to vector<16x1xf32>
    %153 = arith.divf %151, %152 : vector<16x1xf32>
    %154 = vector.broadcast %146 : vector<16x1xf32> to vector<16x32xf32>
    %155 = arith.subf %142, %154 : vector<16x32xf32>
    %cst_53 = arith.constant 9.99999996E-13 : f32
    %156 = vector.broadcast %cst_53 : f32 to vector<16x1xf32>
    %157 = arith.addf %153, %156 : vector<16x1xf32>
    %158 = math.rsqrt %157 : vector<16x1xf32>
    %159 = vector.broadcast %158 : vector<16x1xf32> to vector<16x32xf32>
    %160 = arith.mulf %155, %159 : vector<16x32xf32>
    %161 = vector.broadcast %36 : vector<1x32xf32> to vector<16x32xf32>
    %162 = arith.mulf %160, %161 : vector<16x32xf32>
    %163 = vector.broadcast %37 : vector<1x32xf32> to vector<16x32xf32>
    %164 = arith.addf %162, %163 : vector<16x32xf32>
    %c1_54 = arith.constant 1 : index
    %c0_55 = arith.constant 0 : index
    %c0_56 = arith.constant 0 : index
    %165 = vector.load %arg8[%c1_54, %c0_55, %c0_56] : memref<2x8x128xf32, #tpu.memory_space<vmem>>, vector<1x8x128xf32>
    %166 = vector.shape_cast %165 : vector<1x8x128xf32> to vector<8x128xf32>
    %167 = vector.extract_strided_slice %166 {offsets = [0, 0], sizes = [1, 96], strides = [1, 1]} : vector<8x128xf32> to vector<1x96xf32>
    %168 = vector.extract_strided_slice %166 {offsets = [1, 0], sizes = [1, 32], strides = [1, 1]} : vector<8x128xf32> to vector<1x32xf32>
    %169 = vector.extract_strided_slice %166 {offsets = [2, 0], sizes = [1, 32], strides = [1, 1]} : vector<8x128xf32> to vector<1x32xf32>
    %170 = vector.extract_strided_slice %166 {offsets = [3, 0], sizes = [1, 32], strides = [1, 1]} : vector<8x128xf32> to vector<1x32xf32>
    %171 = vector.extract_strided_slice %166 {offsets = [4, 0], sizes = [1, 64], strides = [1, 1]} : vector<8x128xf32> to vector<1x64xf32>
    %172 = vector.extract_strided_slice %166 {offsets = [5, 0], sizes = [1, 32], strides = [1, 1]} : vector<8x128xf32> to vector<1x32xf32>
    %173 = vector.extract_strided_slice %166 {offsets = [6, 0], sizes = [1, 32], strides = [1, 1]} : vector<8x128xf32> to vector<1x32xf32>
    %174 = vector.extract_strided_slice %166 {offsets = [7, 0], sizes = [1, 32], strides = [1, 1]} : vector<8x128xf32> to vector<1x32xf32>
    %175 = arith.truncf %164 : vector<16x32xf32> to vector<16x32xbf16>
    %c1_57 = arith.constant 1 : index
    %c0_58 = arith.constant 0 : index
    %c0_59 = arith.constant 0 : index
    %176 = vector.load %arg4[%c1_57, %c0_58, %c0_59] : memref<2x32x96xbf16, #tpu.memory_space<vmem>>, vector<1x32x96xbf16>
    %177 = vector.shape_cast %176 : vector<1x32x96xbf16> to vector<32x96xbf16>
    %cst_60 = arith.constant dense<0.000000e+00> : vector<16x96xf32>
    %178 = tpu.matmul %175, %177, %cst_60 {dimension_numbers = #tpu.dot_dimension_numbers<[1], [0], [0], [1], [0, 0, 1, 1], [], []>} : vector<16x32xbf16>, vector<32x96xbf16>, vector<16x96xf32> -> vector<16x96xf32>
    %179 = vector.broadcast %167 : vector<1x96xf32> to vector<16x96xf32>
    %180 = arith.addf %178, %179 : vector<16x96xf32>
    %181 = arith.truncf %180 : vector<16x96xf32> to vector<16x96xbf16>
    %182 = vector.shape_cast %181 : vector<16x96xbf16> to vector<2x8x96xbf16>
    %183 = vector.extract_strided_slice %182 {offsets = [0, 0, 0], sizes = [2, 8, 8], strides = [1, 1, 1]} : vector<2x8x96xbf16> to vector<2x8x8xbf16>
    %184 = vector.extract_strided_slice %182 {offsets = [0, 0, 32], sizes = [2, 8, 8], strides = [1, 1, 1]} : vector<2x8x96xbf16> to vector<2x8x8xbf16>
    "tpu.trace_start"() <{level = 10 : i32, message = "bqd,bkd->bqk"}> : () -> ()
    %cst_61 = arith.constant dense<0.000000e+00> : vector<2x8x8xf32>
    %185 = tpu.matmul %183, %184, %cst_61 {dimension_numbers = #tpu.dot_dimension_numbers<[2], [2], [1], [1], [0, 0, 0, 1, 1, 1], [0], [0]>} : vector<2x8x8xbf16>, vector<2x8x8xbf16>, vector<2x8x8xf32> -> vector<2x8x8xf32>
    "tpu.trace_stop"() : () -> ()
    %186 = vector.extract_strided_slice %182 {offsets = [0, 0, 8], sizes = [2, 8, 8], strides = [1, 1, 1]} : vector<2x8x96xbf16> to vector<2x8x8xbf16>
    %187 = vector.extract_strided_slice %182 {offsets = [0, 0, 40], sizes = [2, 8, 8], strides = [1, 1, 1]} : vector<2x8x96xbf16> to vector<2x8x8xbf16>
    "tpu.trace_start"() <{level = 10 : i32, message = "bqd,bkd->bqk"}> : () -> ()
    %cst_62 = arith.constant dense<0.000000e+00> : vector<2x8x8xf32>
    %188 = tpu.matmul %186, %187, %cst_62 {dimension_numbers = #tpu.dot_dimension_numbers<[2], [2], [1], [1], [0, 0, 0, 1, 1, 1], [0], [0]>} : vector<2x8x8xbf16>, vector<2x8x8xbf16>, vector<2x8x8xf32> -> vector<2x8x8xf32>
    "tpu.trace_stop"() : () -> ()
    %189 = vector.extract_strided_slice %182 {offsets = [0, 0, 16], sizes = [2, 8, 8], strides = [1, 1, 1]} : vector<2x8x96xbf16> to vector<2x8x8xbf16>
    %190 = vector.extract_strided_slice %182 {offsets = [0, 0, 48], sizes = [2, 8, 8], strides = [1, 1, 1]} : vector<2x8x96xbf16> to vector<2x8x8xbf16>
    "tpu.trace_start"() <{level = 10 : i32, message = "bqd,bkd->bqk"}> : () -> ()
    %cst_63 = arith.constant dense<0.000000e+00> : vector<2x8x8xf32>
    %191 = tpu.matmul %189, %190, %cst_63 {dimension_numbers = #tpu.dot_dimension_numbers<[2], [2], [1], [1], [0, 0, 0, 1, 1, 1], [0], [0]>} : vector<2x8x8xbf16>, vector<2x8x8xbf16>, vector<2x8x8xf32> -> vector<2x8x8xf32>
    "tpu.trace_stop"() : () -> ()
    %192 = vector.extract_strided_slice %182 {offsets = [0, 0, 24], sizes = [2, 8, 8], strides = [1, 1, 1]} : vector<2x8x96xbf16> to vector<2x8x8xbf16>
    %193 = vector.extract_strided_slice %182 {offsets = [0, 0, 56], sizes = [2, 8, 8], strides = [1, 1, 1]} : vector<2x8x96xbf16> to vector<2x8x8xbf16>
    "tpu.trace_start"() <{level = 10 : i32, message = "bqd,bkd->bqk"}> : () -> ()
    %cst_64 = arith.constant dense<0.000000e+00> : vector<2x8x8xf32>
    %194 = tpu.matmul %192, %193, %cst_64 {dimension_numbers = #tpu.dot_dimension_numbers<[2], [2], [1], [1], [0, 0, 0, 1, 1, 1], [0], [0]>} : vector<2x8x8xbf16>, vector<2x8x8xbf16>, vector<2x8x8xf32> -> vector<2x8x8xf32>
    "tpu.trace_stop"() : () -> ()
    %195 = tpu.concatenate %185, %188, %191, %194 in 0 : vector<2x8x8xf32>, vector<2x8x8xf32>, vector<2x8x8xf32>, vector<2x8x8xf32> -> vector<8x8x8xf32>
    %cst_65 = arith.constant 0.353553385 : f32
    %196 = vector.broadcast %cst_65 : f32 to vector<8x8x8xf32>
    %197 = arith.mulf %195, %196 : vector<8x8x8xf32>
    %198 = vector.broadcast %27 : vector<8x1x8xf32> to vector<8x8x8xf32>
    %199 = arith.addf %197, %198 : vector<8x8x8xf32>
    %cst_66 = arith.constant dense<0xFF800000> : vector<8x8xf32>
    %200 = vector.multi_reduction <maximumf>, %199, %cst_66 [2] : vector<8x8x8xf32> to vector<8x8xf32>
    %201 = vector.shape_cast %200 : vector<8x8xf32> to vector<8x8x1xf32>
    %202 = vector.broadcast %201 : vector<8x8x1xf32> to vector<8x8x8xf32>
    %203 = arith.subf %199, %202 : vector<8x8x8xf32>
    %204 = math.exp %203 : vector<8x8x8xf32>
    %cst_67 = arith.constant dense<0.000000e+00> : vector<8x8xf32>
    %205 = vector.multi_reduction <add>, %204, %cst_67 [2] : vector<8x8x8xf32> to vector<8x8xf32>
    %206 = vector.shape_cast %205 : vector<8x8xf32> to vector<8x8x1xf32>
    %207 = tpu.reciprocal %206 {approx = true} : vector<8x8x1xf32> -> vector<8x8x1xf32>
    %208 = vector.broadcast %207 : vector<8x8x1xf32> to vector<8x8x8xf32>
    %209 = arith.mulf %204, %208 : vector<8x8x8xf32>
    %210 = arith.truncf %209 : vector<8x8x8xf32> to vector<8x8x8xbf16>
    %211 = vector.extract_strided_slice %182 {offsets = [0, 0, 64], sizes = [2, 8, 8], strides = [1, 1, 1]} : vector<2x8x96xbf16> to vector<2x8x8xbf16>
    %212 = vector.extract_strided_slice %210 {offsets = [0, 0, 0], sizes = [2, 8, 8], strides = [1, 1, 1]} : vector<8x8x8xbf16> to vector<2x8x8xbf16>
    "tpu.trace_start"() <{level = 10 : i32, message = "bqk,bkd->bqd"}> : () -> ()
    %cst_68 = arith.constant dense<0.000000e+00> : vector<2x8x8xf32>
    %213 = tpu.matmul %212, %211, %cst_68 {dimension_numbers = #tpu.dot_dimension_numbers<[2], [1], [1], [2], [0, 0, 0, 1, 1, 2], [0], [0]>} : vector<2x8x8xbf16>, vector<2x8x8xbf16>, vector<2x8x8xf32> -> vector<2x8x8xf32>
    "tpu.trace_stop"() : () -> ()
    %214 = vector.extract_strided_slice %182 {offsets = [0, 0, 72], sizes = [2, 8, 8], strides = [1, 1, 1]} : vector<2x8x96xbf16> to vector<2x8x8xbf16>
    %215 = vector.extract_strided_slice %210 {offsets = [2, 0, 0], sizes = [2, 8, 8], strides = [1, 1, 1]} : vector<8x8x8xbf16> to vector<2x8x8xbf16>
    "tpu.trace_start"() <{level = 10 : i32, message = "bqk,bkd->bqd"}> : () -> ()
    %cst_69 = arith.constant dense<0.000000e+00> : vector<2x8x8xf32>
    %216 = tpu.matmul %215, %214, %cst_69 {dimension_numbers = #tpu.dot_dimension_numbers<[2], [1], [1], [2], [0, 0, 0, 1, 1, 2], [0], [0]>} : vector<2x8x8xbf16>, vector<2x8x8xbf16>, vector<2x8x8xf32> -> vector<2x8x8xf32>
    "tpu.trace_stop"() : () -> ()
    %217 = vector.extract_strided_slice %182 {offsets = [0, 0, 80], sizes = [2, 8, 8], strides = [1, 1, 1]} : vector<2x8x96xbf16> to vector<2x8x8xbf16>
    %218 = vector.extract_strided_slice %210 {offsets = [4, 0, 0], sizes = [2, 8, 8], strides = [1, 1, 1]} : vector<8x8x8xbf16> to vector<2x8x8xbf16>
    "tpu.trace_start"() <{level = 10 : i32, message = "bqk,bkd->bqd"}> : () -> ()
    %cst_70 = arith.constant dense<0.000000e+00> : vector<2x8x8xf32>
    %219 = tpu.matmul %218, %217, %cst_70 {dimension_numbers = #tpu.dot_dimension_numbers<[2], [1], [1], [2], [0, 0, 0, 1, 1, 2], [0], [0]>} : vector<2x8x8xbf16>, vector<2x8x8xbf16>, vector<2x8x8xf32> -> vector<2x8x8xf32>
    "tpu.trace_stop"() : () -> ()
    %220 = vector.extract_strided_slice %182 {offsets = [0, 0, 88], sizes = [2, 8, 8], strides = [1, 1, 1]} : vector<2x8x96xbf16> to vector<2x8x8xbf16>
    %221 = vector.extract_strided_slice %210 {offsets = [6, 0, 0], sizes = [2, 8, 8], strides = [1, 1, 1]} : vector<8x8x8xbf16> to vector<2x8x8xbf16>
    "tpu.trace_start"() <{level = 10 : i32, message = "bqk,bkd->bqd"}> : () -> ()
    %cst_71 = arith.constant dense<0.000000e+00> : vector<2x8x8xf32>
    %222 = tpu.matmul %221, %220, %cst_71 {dimension_numbers = #tpu.dot_dimension_numbers<[2], [1], [1], [2], [0, 0, 0, 1, 1, 2], [0], [0]>} : vector<2x8x8xbf16>, vector<2x8x8xbf16>, vector<2x8x8xf32> -> vector<2x8x8xf32>
    "tpu.trace_stop"() : () -> ()
    %223 = tpu.concatenate %213, %216, %219, %222 in 2 : vector<2x8x8xf32>, vector<2x8x8xf32>, vector<2x8x8xf32>, vector<2x8x8xf32> -> vector<2x8x32xf32>
    %224 = vector.shape_cast %223 : vector<2x8x32xf32> to vector<16x32xf32>
    %225 = arith.truncf %224 : vector<16x32xf32> to vector<16x32xbf16>
    %c1_72 = arith.constant 1 : index
    %c0_73 = arith.constant 0 : index
    %c0_74 = arith.constant 0 : index
    %226 = vector.load %arg5[%c1_72, %c0_73, %c0_74] : memref<2x32x32xbf16, #tpu.memory_space<vmem>>, vector<1x32x32xbf16>
    %227 = vector.shape_cast %226 : vector<1x32x32xbf16> to vector<32x32xbf16>
    %cst_75 = arith.constant dense<0.000000e+00> : vector<16x32xf32>
    %228 = tpu.matmul %225, %227, %cst_75 {dimension_numbers = #tpu.dot_dimension_numbers<[1], [0], [0], [1], [0, 0, 1, 1], [], []>} : vector<16x32xbf16>, vector<32x32xbf16>, vector<16x32xf32> -> vector<16x32xf32>
    %229 = vector.broadcast %168 : vector<1x32xf32> to vector<16x32xf32>
    %230 = arith.addf %228, %229 : vector<16x32xf32>
    %231 = arith.addf %164, %230 : vector<16x32xf32>
    %cst_76 = arith.constant dense<0.000000e+00> : vector<16xf32>
    %232 = vector.multi_reduction <add>, %231, %cst_76 [1] : vector<16x32xf32> to vector<16xf32>
    %233 = vector.shape_cast %232 : vector<16xf32> to vector<16x1xf32>
    %cst_77 = arith.constant 3.200000e+01 : f32
    %234 = vector.broadcast %cst_77 : f32 to vector<16x1xf32>
    %235 = arith.divf %233, %234 : vector<16x1xf32>
    %236 = vector.broadcast %235 : vector<16x1xf32> to vector<16x32xf32>
    %237 = arith.subf %231, %236 : vector<16x32xf32>
    %238 = arith.mulf %237, %237 : vector<16x32xf32>
    %cst_78 = arith.constant dense<0.000000e+00> : vector<16xf32>
    %239 = vector.multi_reduction <add>, %238, %cst_78 [1] : vector<16x32xf32> to vector<16xf32>
    %240 = vector.shape_cast %239 : vector<16xf32> to vector<16x1xf32>
    %cst_79 = arith.constant 3.200000e+01 : f32
    %241 = vector.broadcast %cst_79 : f32 to vector<16x1xf32>
    %242 = arith.divf %240, %241 : vector<16x1xf32>
    %243 = vector.broadcast %235 : vector<16x1xf32> to vector<16x32xf32>
    %244 = arith.subf %231, %243 : vector<16x32xf32>
    %cst_80 = arith.constant 9.99999996E-13 : f32
    %245 = vector.broadcast %cst_80 : f32 to vector<16x1xf32>
    %246 = arith.addf %242, %245 : vector<16x1xf32>
    %247 = math.rsqrt %246 : vector<16x1xf32>
    %248 = vector.broadcast %247 : vector<16x1xf32> to vector<16x32xf32>
    %249 = arith.mulf %244, %248 : vector<16x32xf32>
    %250 = vector.broadcast %169 : vector<1x32xf32> to vector<16x32xf32>
    %251 = arith.mulf %249, %250 : vector<16x32xf32>
    %252 = vector.broadcast %170 : vector<1x32xf32> to vector<16x32xf32>
    %253 = arith.addf %251, %252 : vector<16x32xf32>
    %254 = arith.truncf %253 : vector<16x32xf32> to vector<16x32xbf16>
    %c1_81 = arith.constant 1 : index
    %c0_82 = arith.constant 0 : index
    %c0_83 = arith.constant 0 : index
    %255 = vector.load %arg6[%c1_81, %c0_82, %c0_83] : memref<2x32x64xbf16, #tpu.memory_space<vmem>>, vector<1x32x64xbf16>
    %256 = vector.shape_cast %255 : vector<1x32x64xbf16> to vector<32x64xbf16>
    %cst_84 = arith.constant dense<0.000000e+00> : vector<16x64xf32>
    %257 = tpu.matmul %254, %256, %cst_84 {dimension_numbers = #tpu.dot_dimension_numbers<[1], [0], [0], [1], [0, 0, 1, 1], [], []>} : vector<16x32xbf16>, vector<32x64xbf16>, vector<16x64xf32> -> vector<16x64xf32>
    %258 = vector.broadcast %171 : vector<1x64xf32> to vector<16x64xf32>
    %259 = arith.addf %257, %258 : vector<16x64xf32>
    %260 = arith.mulf %259, %259 : vector<16x64xf32>
    %261 = arith.mulf %259, %260 : vector<16x64xf32>
    %cst_85 = arith.constant 4.471500e-02 : f32
    %262 = vector.broadcast %cst_85 : f32 to vector<16x64xf32>
    %263 = arith.mulf %262, %261 : vector<16x64xf32>
    %264 = arith.addf %259, %263 : vector<16x64xf32>
    %cst_86 = arith.constant 0.797884583 : f32
    %265 = vector.broadcast %cst_86 : f32 to vector<16x64xf32>
    %266 = arith.mulf %265, %264 : vector<16x64xf32>
    %267 = math.tanh %266 : vector<16x64xf32>
    %cst_87 = arith.constant 1.000000e+00 : f32
    %268 = vector.broadcast %cst_87 : f32 to vector<16x64xf32>
    %269 = arith.addf %268, %267 : vector<16x64xf32>
    %cst_88 = arith.constant 5.000000e-01 : f32
    %270 = vector.broadcast %cst_88 : f32 to vector<16x64xf32>
    %271 = arith.mulf %270, %269 : vector<16x64xf32>
    %272 = arith.mulf %259, %271 : vector<16x64xf32>
    %273 = arith.truncf %272 : vector<16x64xf32> to vector<16x64xbf16>
    %c1_89 = arith.constant 1 : index
    %c0_90 = arith.constant 0 : index
    %c0_91 = arith.constant 0 : index
    %274 = vector.load %arg7[%c1_89, %c0_90, %c0_91] : memref<2x64x32xbf16, #tpu.memory_space<vmem>>, vector<1x64x32xbf16>
    %275 = vector.shape_cast %274 : vector<1x64x32xbf16> to vector<64x32xbf16>
    %cst_92 = arith.constant dense<0.000000e+00> : vector<16x32xf32>
    %276 = tpu.matmul %273, %275, %cst_92 {dimension_numbers = #tpu.dot_dimension_numbers<[1], [0], [0], [1], [0, 0, 1, 1], [], []>} : vector<16x64xbf16>, vector<64x32xbf16>, vector<16x32xf32> -> vector<16x32xf32>
    %277 = vector.broadcast %172 : vector<1x32xf32> to vector<16x32xf32>
    %278 = arith.addf %276, %277 : vector<16x32xf32>
    %279 = arith.addf %253, %278 : vector<16x32xf32>
    %cst_93 = arith.constant dense<0.000000e+00> : vector<16xf32>
    %280 = vector.multi_reduction <add>, %279, %cst_93 [1] : vector<16x32xf32> to vector<16xf32>
    %281 = vector.shape_cast %280 : vector<16xf32> to vector<16x1xf32>
    %cst_94 = arith.constant 3.200000e+01 : f32
    %282 = vector.broadcast %cst_94 : f32 to vector<16x1xf32>
    %283 = arith.divf %281, %282 : vector<16x1xf32>
    %284 = vector.broadcast %283 : vector<16x1xf32> to vector<16x32xf32>
    %285 = arith.subf %279, %284 : vector<16x32xf32>
    %286 = arith.mulf %285, %285 : vector<16x32xf32>
    %cst_95 = arith.constant dense<0.000000e+00> : vector<16xf32>
    %287 = vector.multi_reduction <add>, %286, %cst_95 [1] : vector<16x32xf32> to vector<16xf32>
    %288 = vector.shape_cast %287 : vector<16xf32> to vector<16x1xf32>
    %cst_96 = arith.constant 3.200000e+01 : f32
    %289 = vector.broadcast %cst_96 : f32 to vector<16x1xf32>
    %290 = arith.divf %288, %289 : vector<16x1xf32>
    %291 = vector.broadcast %283 : vector<16x1xf32> to vector<16x32xf32>
    %292 = arith.subf %279, %291 : vector<16x32xf32>
    %cst_97 = arith.constant 9.99999996E-13 : f32
    %293 = vector.broadcast %cst_97 : f32 to vector<16x1xf32>
    %294 = arith.addf %290, %293 : vector<16x1xf32>
    %295 = math.rsqrt %294 : vector<16x1xf32>
    %296 = vector.broadcast %295 : vector<16x1xf32> to vector<16x32xf32>
    %297 = arith.mulf %292, %296 : vector<16x32xf32>
    %298 = vector.broadcast %173 : vector<1x32xf32> to vector<16x32xf32>
    %299 = arith.mulf %297, %298 : vector<16x32xf32>
    %300 = vector.broadcast %174 : vector<1x32xf32> to vector<16x32xf32>
    %301 = arith.addf %299, %300 : vector<16x32xf32>
    %302 = vector.shape_cast %301 : vector<16x32xf32> to vector<2x8x32xf32>
    %303 = vector.extract_strided_slice %302 {offsets = [0, 0, 0], sizes = [2, 1, 32], strides = [1, 1, 1]} : vector<2x8x32xf32> to vector<2x1x32xf32>
    %304 = vector.shape_cast %303 : vector<2x1x32xf32> to vector<2x32xf32>
    %305 = arith.truncf %304 : vector<2x32xf32> to vector<2x32xbf16>
    %c0_98 = arith.constant 0 : index
    %c0_99 = arith.constant 0 : index
    %306 = vector.load %arg9[%c0_98, %c0_99] : memref<32x32xbf16, #tpu.memory_space<vmem>>, vector<32x32xbf16>
    %cst_100 = arith.constant dense<0.000000e+00> : vector<2x32xf32>
    %307 = tpu.matmul %305, %306, %cst_100 {dimension_numbers = #tpu.dot_dimension_numbers<[1], [0], [0], [1], [0, 0, 1, 1], [], []>} : vector<2x32xbf16>, vector<32x32xbf16>, vector<2x32xf32> -> vector<2x32xf32>
    %c0_101 = arith.constant 0 : index
    %c0_102 = arith.constant 0 : index
    %308 = vector.load %arg10[%c0_101, %c0_102] : memref<1x32xf32, #tpu.memory_space<vmem>>, vector<1x32xf32>
    %309 = vector.broadcast %308 : vector<1x32xf32> to vector<2x32xf32>
    %310 = arith.addf %307, %309 : vector<2x32xf32>
    %311 = math.tanh %310 : vector<2x32xf32>
    %312 = arith.truncf %311 : vector<2x32xf32> to vector<2x32xbf16>
    %c0_103 = arith.constant 0 : index
    %c0_104 = arith.constant 0 : index
    %313 = vector.load %arg11[%c0_103, %c0_104] : memref<32x128xbf16, #tpu.memory_space<vmem>>, vector<32x128xbf16>
    %cst_105 = arith.constant dense<0.000000e+00> : vector<2x128xf32>
    %314 = tpu.matmul %312, %313, %cst_105 {dimension_numbers = #tpu.dot_dimension_numbers<[1], [0], [0], [1], [0, 0, 1, 1], [], []>} : vector<2x32xbf16>, vector<32x128xbf16>, vector<2x128xf32> -> vector<2x128xf32>
    %c0_106 = arith.constant 0 : index
    %c0_107 = arith.constant 0 : index
    %315 = vector.load %arg12[%c0_106, %c0_107] : memref<1x128xf32, #tpu.memory_space<vmem>>, vector<1x128xf32>
    %316 = vector.broadcast %315 : vector<1x128xf32> to vector<2x128xf32>
    %317 = arith.addf %314, %316 : vector<2x128xf32>
    %c0_108 = arith.constant 0 : index
    %c0_109 = arith.constant 0 : index
    %318 = vector.load %arg13[%c0_108, %c0_109] : memref<2x128xf32, #tpu.memory_space<vmem>>, vector<2x128xf32>
    tpu.vector_store %arg13[%c0_108, %c0_109], %317 {strides = array<i32>} : memref<2x128xf32, #tpu.memory_space<vmem>>, vector<2x128xf32>,
    return
  }
  func.func @transform_0(%arg0: i32) -> (i32, i32) {
    %c0_i32 = arith.constant 0 : i32
    %c0_i32_0 = arith.constant 0 : i32
    %c0_i32_1 = arith.constant 0 : i32
    return %c0_i32, %c0_i32_0 : i32, i32
  }
  func.func @transform_1(%arg0: i32) -> (i32, i32) {
    %c0_i32 = arith.constant 0 : i32
    %c0_i32_0 = arith.constant 0 : i32
    %c0_i32_1 = arith.constant 0 : i32
    return %c0_i32, %c0_i32_0 : i32, i32
  }
  func.func @transform_2(%arg0: i32) -> (i32, i32) {
    %c0_i32 = arith.constant 0 : i32
    %c0_i32_0 = arith.constant 0 : i32
    %c0_i32_1 = arith.constant 0 : i32
    return %c0_i32, %c0_i32_0 : i32, i32
  }
  func.func @transform_3(%arg0: i32) -> (i32, i32, i32) {
    %c0_i32 = arith.constant 0 : i32
    %c0_i32_0 = arith.constant 0 : i32
    %c0_i32_1 = arith.constant 0 : i32
    %c0_i32_2 = arith.constant 0 : i32
    return %c0_i32, %c0_i32_0, %c0_i32_1 : i32, i32, i32
  }
  func.func @transform_4(%arg0: i32) -> (i32, i32, i32) {
    %c0_i32 = arith.constant 0 : i32
    %c0_i32_0 = arith.constant 0 : i32
    %c0_i32_1 = arith.constant 0 : i32
    %c0_i32_2 = arith.constant 0 : i32
    return %c0_i32, %c0_i32_0, %c0_i32_1 : i32, i32, i32
  }
  func.func @transform_5(%arg0: i32) -> (i32, i32, i32) {
    %c0_i32 = arith.constant 0 : i32
    %c0_i32_0 = arith.constant 0 : i32
    %c0_i32_1 = arith.constant 0 : i32
    %c0_i32_2 = arith.constant 0 : i32
    return %c0_i32, %c0_i32_0, %c0_i32_1 : i32, i32, i32
  }
  func.func @transform_6(%arg0: i32) -> (i32, i32, i32) {
    %c0_i32 = arith.constant 0 : i32
    %c0_i32_0 = arith.constant 0 : i32
    %c0_i32_1 = arith.constant 0 : i32
    %c0_i32_2 = arith.constant 0 : i32
    return %c0_i32, %c0_i32_0, %c0_i32_1 : i32, i32, i32
  }
  func.func @transform_7(%arg0: i32) -> (i32, i32, i32) {
    %c0_i32 = arith.constant 0 : i32
    %c0_i32_0 = arith.constant 0 : i32
    %c0_i32_1 = arith.constant 0 : i32
    %c0_i32_2 = arith.constant 0 : i32
    return %c0_i32, %c0_i32_0, %c0_i32_1 : i32, i32, i32
  }
  func.func @transform_8(%arg0: i32) -> (i32, i32) {
    %c0_i32 = arith.constant 0 : i32
    %c0_i32_0 = arith.constant 0 : i32
    %c0_i32_1 = arith.constant 0 : i32
    return %c0_i32, %c0_i32_0 : i32, i32
  }
  func.func @transform_9(%arg0: i32) -> (i32, i32) {
    %c0_i32 = arith.constant 0 : i32
    %c0_i32_0 = arith.constant 0 : i32
    %c0_i32_1 = arith.constant 0 : i32
    return %c0_i32, %c0_i32_0 : i32, i32
  }
  func.func @transform_10(%arg0: i32) -> (i32, i32) {
    %c0_i32 = arith.constant 0 : i32
    %c0_i32_0 = arith.constant 0 : i32
    %c0_i32_1 = arith.constant 0 : i32
    return %c0_i32, %c0_i32_0 : i32, i32
  }
  func.func @transform_11(%arg0: i32) -> (i32, i32) {
    %c0_i32 = arith.constant 0 : i32
    %c0_i32_0 = arith.constant 0 : i32
    %c0_i32_1 = arith.constant 0 : i32
    return %c0_i32, %c0_i32_0 : i32, i32
  }
  func.func @transform_12(%arg0: i32) -> (i32, i32) {
    %c0_i32 = arith.constant 0 : i32
    %c0_i32_0 = arith.constant 0 : i32
    %c0_i32_1 = arith.constant 0 : i32
    return %c0_i32, %c0_i32_0 : i32, i32
  }
}

</mosaic_0001>

<llo_original>
// kernel: ayato_forward.1
$region0: #{ayato_forward.1}
  #allocation0 [shape = 'u32[]', space=smem, size = 0x4, offset = 0x4, fixed_abs, tag = 'smem constant byte address 0x4 - core index']
  #allocation1 [shape = 'u32[144,128]{1,0:T(1,128)}', space=vmem, size = 0x12000, scoped, tag = 'internal scratch']
  %s0 = inlined_call_operand.vmem [shape: f32[16,32], index: 0, kind: input, shape index: {}]
  %s1 = inlined_call_operand.vmem [shape: f32[2,8], index: 1, kind: input, shape index: {}]
  %s2 = inlined_call_operand.vmem [shape: f32[2,32], index: 2, kind: input, shape index: {}]
  %s3 = inlined_call_operand.vmem [shape: bf16[2,32,96], index: 3, kind: input, shape index: {}]
  %s4 = inlined_call_operand.vmem [shape: bf16[2,32,32], index: 4, kind: input, shape index: {}]
  %s5 = inlined_call_operand.vmem [shape: bf16[2,32,64], index: 5, kind: input, shape index: {}]
  %s6 = inlined_call_operand.vmem [shape: bf16[2,64,32], index: 6, kind: input, shape index: {}]
  %s7 = inlined_call_operand.vmem [shape: f32[2,8,128], index: 7, kind: input, shape index: {}]
  %s8 = inlined_call_operand.vmem [shape: bf16[32,32], index: 8, kind: input, shape index: {}]
  %s9 = inlined_call_operand.vmem [shape: f32[1,32], index: 9, kind: input, shape index: {}]
  %s10 = inlined_call_operand.vmem [shape: bf16[32,128], index: 10, kind: input, shape index: {}]
  %s11 = inlined_call_operand.vmem [shape: f32[1,128], index: 11, kind: input, shape index: {}]
  %s12 = inlined_call_operand.hbm [shape: f32[2,128], index: 12, kind: output, shape index: {}]
  %s13 = sld [smem:[#allocation0]]
  $region58: #{ayato_forward.1} parent=0
    _
  %s15 = ssub.s32 1, %s13
  %s16 = scalar_select 0, %s15, %s13
  $region1: #{ayato_forward.1} parent=0
    #allocation2 [shape = 'u8[1024]{0}', space=vmem, size = 0x400, scoped, tag = 'output window, operand 0, single buffered']
    #allocation3 [shape = 's32[1]{0}', space=sflag, size = 0x4, scoped, tag = 'scoped memory for ayato_forward.1']
    %17 = vsyncpa [#allocation3], 0
    // Predicated region
    $region2: #{ayato_forward.1} parent=1 // pred_check
      _
    $region3: #{ayato_forward.1} parent=1 // pred_check_branch
      %19 = sbr.rel (0) target = $region5
    $region4: #{ayato_forward.1} parent=1 // pred_region
      _
    $region5: #{ayato_forward.1} parent=1 // pred_fallthru
      _
    // Predicated region
    $region6: #{ayato_forward.1} parent=1 // pred_check
      _
    $region7: #{ayato_forward.1} parent=1 // pred_check_branch
      %21 = sbr.rel (0) target = $region9
    $region8: #{ayato_forward.1} parent=1 // pred_region
      _
    $region9: #{ayato_forward.1} parent=1 // pred_fallthru
      _
    // Predicated region
    $region10: #{ayato_forward.1} parent=1 // pred_check
      _
    $region11: #{ayato_forward.1} parent=1 // pred_check_branch
      %23 = sbr.rel (0) target = $region13
    $region12: #{ayato_forward.1} parent=1 // pred_region
      _
    $region13: #{ayato_forward.1} parent=1 // pred_fallthru
      _
    // Predicated region
    $region14: #{ayato_forward.1} parent=1 // pred_check
      _
    $region15: #{ayato_forward.1} parent=1 // pred_check_branch
      %25 = sbr.rel (0) target = $region17
    $region16: #{ayato_forward.1} parent=1 // pred_region
      _
    $region17: #{ayato_forward.1} parent=1 // pred_fallthru
      _
    // Predicated region
    $region18: #{ayato_forward.1} parent=1 // pred_check
      _
    $region19: #{ayato_forward.1} parent=1 // pred_check_branch
      %27 = sbr.rel (0) target = $region21
    $region20: #{ayato_forward.1} parent=1 // pred_region
      _
    $region21: #{ayato_forward.1} parent=1 // pred_fallthru
      _
    // Predicated region
    $region22: #{ayato_forward.1} parent=1 // pred_check
      _
    $region23: #{ayato_forward.1} parent=1 // pred_check_branch
      %29 = sbr.rel (0) target = $region25
    $region24: #{ayato_forward.1} parent=1 // pred_region
      _
    $region25: #{ayato_forward.1} parent=1 // pred_fallthru
      _
    // Predicated region
    $region26: #{ayato_forward.1} parent=1 // pred_check
      _
    $region27: #{ayato_forward.1} parent=1 // pred_check_branch
      %31 = sbr.rel (0) target = $region29
    $region28: #{ayato_forward.1} parent=1 // pred_region
      _
    $region29: #{ayato_forward.1} parent=1 // pred_fallthru
      _
    // Predicated region
    $region30: #{ayato_forward.1} parent=1 // pred_check
      _
    $region31: #{ayato_forward.1} parent=1 // pred_check_branch
      %33 = sbr.rel (0) target = $region33
    $region32: #{ayato_forward.1} parent=1 // pred_region
      _
    $region33: #{ayato_forward.1} parent=1 // pred_fallthru
      _
    // Predicated region
    $region34: #{ayato_forward.1} parent=1 // pred_check
      _
    $region35: #{ayato_forward.1} parent=1 // pred_check_branch
      %35 = sbr.rel (0) target = $region37
    $region36: #{ayato_forward.1} parent=1 // pred_region
      _
    $region37: #{ayato_forward.1} parent=1 // pred_fallthru
      _
    // Predicated region
    $region38: #{ayato_forward.1} parent=1 // pred_check
      _
    $region39: #{ayato_forward.1} parent=1 // pred_check_branch
      %37 = sbr.rel (0) target = $region41
    $region40: #{ayato_forward.1} parent=1 // pred_region
      _
    $region41: #{ayato_forward.1} parent=1 // pred_fallthru
      _
    // Predicated region
    $region42: #{ayato_forward.1} parent=1 // pred_check
      _
    $region43: #{ayato_forward.1} parent=1 // pred_check_branch
      %39 = sbr.rel (0) target = $region45
    $region44: #{ayato_forward.1} parent=1 // pred_region
      _
    $region45: #{ayato_forward.1} parent=1 // pred_fallthru
      _
    // Predicated region
    $region46: #{ayato_forward.1} parent=1 // pred_check
      _
    $region47: #{ayato_forward.1} parent=1 // pred_check_branch
      %41 = sbr.rel (0) target = $region49
    $region48: #{ayato_forward.1} parent=1 // pred_region
      _
    $region49: #{ayato_forward.1} parent=1 // pred_fallthru
      _
    %v43 = vld [vmem:[%s0] sm:$0xff]
    %v44 = vld [vmem:[%s0 + $0x8] sm:$0xff]
    %v45 = vld [vmem:[%s2] sm:$0x1]
    %v46 = vld [vmem:[%s2 + $0x1] sm:$0x1]
    %vm47 = vcmask 261120
    %v48 = vsel %vm47, %v43, 0.0
    %49 = vadd.xlane.f32.xlu0 %v48
    %v50 = vpop.xlane.xlu0 %49
    %v51 = vsel %vm47, %v44, 0.0
    %52 = vadd.xlane.f32.xlu0 %v51
    %v53 = vpop.xlane.xlu0 %52
    %v54 = vrcp.pop 32.0
    %v55 = vmul.f32 %v50, %v54
    %v56 = vmul.f32 %v53, %v54
    %v57 = vsub.f32 %v43, %v55
    %v58 = vsub.f32 %v44, %v56
    %v59 = vmul.f32 %v57, %v57
    %v60 = vmul.f32 %v58, %v58
    %v61 = vsel %vm47, %v59, 0.0
    %62 = vadd.xlane.f32.xlu0 %v61
    %v63 = vpop.xlane.xlu0 %62
    %v64 = vsel %vm47, %v60, 0.0
    %65 = vadd.xlane.f32.xlu0 %v64
    %v66 = vpop.xlane.xlu0 %65
    %v67 = vmul.f32 %v63, %v54
    %v68 = vmul.f32 %v66, %v54
    %v69 = vadd.f32 %v67, 1e-12
    %v70 = vadd.f32 %v68, 1e-12
    %v71 = vrsqrt.pop %v69
    %v72 = vrsqrt.pop %v70
    %v73 = vmul.f32 %v57, %v71
    %v74 = vmul.f32 %v58, %v72
    %v75 = vlaneseq
    %v76 = vshrl.u32 %v75, 7
    %v77 = vsub.s32 0, %v76
    %v78 = vrot.slane %v45, %v77
    %v79 = vmul.f32 %v73, %v78
    %v80 = vmul.f32 %v74, %v78
    %v81 = vlaneseq
    %v82 = vshrl.u32 %v81, 7
    %v83 = vsub.s32 0, %v82
    %v84 = vrot.slane %v46, %v83
    %v85 = vadd.f32 %v79, %v84
    %v86 = vadd.f32 %v80, %v84
    %v87 = vld [vmem:[%s1] sm:$0x3]
    %v90 = vunpack.c.l.s4 1966171168
    %v91 = vunpack.c.0.s8 %v90
    %v92 = vlaneseq
    %v93 = vshrl.u32 %v92, 7
    %v94 = vsub.s32 %v91, %v93
    %v95 = vrot.slane %v87, %v94
    %v96 = vcombine.high %v95, %v95
    %v98 = vunpack.c.l.s4 1966171168
    %v99 = vunpack.c.0.s8 %v98
    %v100 = vlaneseq
    %v101 = vshrl.u32 %v100, 7
    %v102 = vsub.s32 %v99, %v101
    %v103 = vrot.slane %v95, %v102
    %v105 = vunpack.c.l.s4 1966171168
    %v106 = vunpack.c.0.s8 %v105
    %v107 = vlaneseq
    %v108 = vshrl.u32 %v107, 7
    %v109 = vsub.s32 %v106, %v108
    %v110 = vrot.slane %v96, %v109
    %v111 = vld [vmem:[%s7] sm:$0xff]
    %v112 = vpack.c.bf16 %v86, %v85
    %v113 = vld [vmem:[%s3] sm:$0xf]
    %v114 = vld [vmem:[%s3 + $0x4] sm:$0xf]
    %v115 = vld [vmem:[%s3 + $0x8] sm:$0xf]
    %v116 = vld [vmem:[%s3 + $0xc] sm:$0xf]
    %v117 = vlaneseq
    %v118 = vshrl.u32 %v117, 7
    %v119 = vsub.s32 0, %v118
    %v120 = vrot.slane %v111, %v119
    %v125 = vunpack.c.l.b16 %v113
    %v126 = vunpack.c.l.b16 %v114
    %v127 = vunpack.c.l.b16 %v115
    %v128 = vunpack.c.l.b16 %v116
    %v129 = vpack.c.b16 %v126, %v125
    %v130 = vpack.c.b16 %v128, %v127
    %v134 = vsel %vm47, %v112, 0
    %136 = vmatprep.subr.bf16.mxu0 0
    %137 = vmatpush1.bf16.msra.mxu0 %v129
    %138 = vmatprep.subr.bf16.mxu0 0
    %139 = vmatpush1.bf16.msra.mxu0 %v130
    %140 = vmatprep.subr.bf16.mxu0 0
    %141 = vmatpush1.bf16.msra.mxu0 0
    %142 = vmatprep.subr.bf16.mxu0 0
    %143 = vmatpush1.bf16.msra.mxu0 0
    %144 = vmatprep.subr.bf16.mxu0 0
    %145 = vmatpush1.bf16.msra.mxu0 0
    %146 = vmatprep.subr.bf16.mxu0 0
    %147 = vmatpush1.bf16.msra.mxu0 0
    %148 = vmatprep.subr.bf16.mxu0 0
    %149 = vmatpush1.bf16.msra.mxu0 0
    %150 = vmatprep.subr.bf16.mxu0 0
    %151 = vmatpush1.bf16.msra.mxu0 0
    %152 = vmatprep.subr.bf16.mxu0 0
    %153 = vmatpush1.bf16.msra.mxu0 0
    %154 = vmatprep.subr.bf16.mxu0 0
    %155 = vmatpush1.bf16.msra.mxu0 0
    %156 = vmatprep.subr.bf16.mxu0 0
    %157 = vmatpush1.bf16.msra.mxu0 0
    %158 = vmatprep.subr.bf16.mxu0 0
    %159 = vmatpush1.bf16.msra.mxu0 0
    %160 = vmatprep.subr.bf16.mxu0 0
    %161 = vmatpush1.bf16.msra.mxu0 0
    %162 = vmatprep.subr.bf16.mxu0 0
    %163 = vmatpush1.bf16.msra.mxu0 0
    %164 = vmatprep.subr.bf16.mxu0 0
    %165 = vmatpush1.bf16.msra.mxu0 0
    %166 = vmatprep.subr.bf16.mxu0 0
    %167 = vmatpush1.bf16.msra.mxu0 0
    %168 = vmatprep.mubr.bf16.mxu0 0
    %169 = vmatmul.mubr.bf16.gmra.mrb[0].mxu0 %v134
    %v170 = vpop.f32.mrb[0].mxu0
    %v171 = vadd.f32 %v120, %v170
    %v172 = vpop.f32.mrb[0].mxu0
    %v173 = vpop.f32.mrb[0].mxu0
    %v174 = vadd.f32 %v120, %v173
    %v175 = vpop.f32.mrb[0].mxu0
    %176 = vdwg.mxu0
    %v177 = vpack.c.bf16 %v174, %v171
    %v179 = vunpack.c.l.b16 %v177
    %v180 = vunpack.c.h.b16 %v177
    %v181 = vpack.c.b16 %v179, %v179
    %v182 = vpack.c.b16 %v180, %v180
    %183 = vrot.lane.b32.xlu0 %v181, 96
    %v184 = vpop.permute.xlu0 %183
    %vm185 = vcmask 64512
    %v187 = vsel %vm185, %v181, 0
    %v190 = vsel %vm185, %v184, 0
    %192 = vmatprep.subr.bf16.mxu0 0
    %193 = vmatpush1.bf16.xpose.msra.mxu0 %v190
    %194 = vmatprep.subr.bf16.mxu0 0
    %195 = vmatpush1.bf16.xpose.msra.mxu0 0
    %196 = vmatprep.subr.bf16.mxu0 0
    %197 = vmatpush1.bf16.xpose.msra.mxu0 0
    %198 = vmatprep.subr.bf16.mxu0 0
    %199 = vmatpush1.bf16.xpose.msra.mxu0 0
    %200 = vmatprep.subr.bf16.mxu0 0
    %201 = vmatpush1.bf16.xpose.msra.mxu0 0
    %202 = vmatprep.subr.bf16.mxu0 0
    %203 = vmatpush1.bf16.xpose.msra.mxu0 0
    %204 = vmatprep.subr.bf16.mxu0 0
    %205 = vmatpush1.bf16.xpose.msra.mxu0 0
    %206 = vmatprep.subr.bf16.mxu0 0
    %207 = vmatpush1.bf16.xpose.msra.mxu0 0
    %208 = vmatprep.subr.bf16.mxu0 0
    %209 = vmatpush1.bf16.xpose.msra.mxu0 0
    %210 = vmatprep.subr.bf16.mxu0 0
    %211 = vmatpush1.bf16.xpose.msra.mxu0 0
    %212 = vmatprep.subr.bf16.mxu0 0
    %213 = vmatpush1.bf16.xpose.msra.mxu0 0
    %214 = vmatprep.subr.bf16.mxu0 0
    %215 = vmatpush1.bf16.xpose.msra.mxu0 0
    %216 = vmatprep.subr.bf16.mxu0 0
    %217 = vmatpush1.bf16.xpose.msra.mxu0 0
    %218 = vmatprep.subr.bf16.mxu0 0
    %219 = vmatpush1.bf16.xpose.msra.mxu0 0
    %220 = vmatprep.subr.bf16.mxu0 0
    %221 = vmatpush1.bf16.xpose.msra.mxu0 0
    %222 = vmatprep.subr.bf16.mxu0 0
    %223 = vmatpush1.bf16.xpose.msra.mxu0 0
    %224 = vmatprep.mubr.bf16.mxu0 0
    %225 = vmatmul.mubr.bf16.gmra.mrb[0].mxu0 %v187
    %v226 = vpop.f32.mrb[0].mxu0
    %v227 = vadd.f32 0.0, %v226
    %v228 = vpop.f32.mrb[0].mxu0
    %v229 = vpop.f32.mrb[0].mxu0
    %v230 = vpop.f32.mrb[0].mxu0
    %231 = vdwg.mxu0
    %232 = vrot.lane.b32.xlu0 %v182, 96
    %v233 = vpop.permute.xlu0 %232
    %v235 = vsel %vm185, %v182, 0
    %v238 = vsel %vm185, %v233, 0
    %240 = vmatprep.subr.bf16.mxu0 0
    %241 = vmatpush1.bf16.xpose.msra.mxu0 %v238
    %242 = vmatprep.subr.bf16.mxu0 0
    %243 = vmatpush1.bf16.xpose.msra.mxu0 0
    %244 = vmatprep.subr.bf16.mxu0 0
    %245 = vmatpush1.bf16.xpose.msra.mxu0 0
    %246 = vmatprep.subr.bf16.mxu0 0
    %247 = vmatpush1.bf16.xpose.msra.mxu0 0
    %248 = vmatprep.subr.bf16.mxu0 0
    %249 = vmatpush1.bf16.xpose.msra.mxu0 0
    %250 = vmatprep.subr.bf16.mxu0 0
    %251 = vmatpush1.bf16.xpose.msra.mxu0 0
    %252 = vmatprep.subr.bf16.mxu0 0
    %253 = vmatpush1.bf16.xpose.msra.mxu0 0
    %254 = vmatprep.subr.bf16.mxu0 0
    %255 = vmatpush1.bf16.xpose.msra.mxu0 0
    %256 = vmatprep.subr.bf16.mxu0 0
    %257 = vmatpush1.bf16.xpose.msra.mxu0 0
    %258 = vmatprep.subr.bf16.mxu0 0
    %259 = vmatpush1.bf16.xpose.msra.mxu0 0
    %260 = vmatprep.subr.bf16.mxu0 0
    %261 = vmatpush1.bf16.xpose.msra.mxu0 0
    %262 = vmatprep.subr.bf16.mxu0 0
    %263 = vmatpush1.bf16.xpose.msra.mxu0 0
    %264 = vmatprep.subr.bf16.mxu0 0
    %265 = vmatpush1.bf16.xpose.msra.mxu0 0
    %266 = vmatprep.subr.bf16.mxu0 0
    %267 = vmatpush1.bf16.xpose.msra.mxu0 0
    %268 = vmatprep.subr.bf16.mxu0 0
    %269 = vmatpush1.bf16.xpose.msra.mxu0 0
    %270 = vmatprep.subr.bf16.mxu0 0
    %271 = vmatpush1.bf16.xpose.msra.mxu0 0
    %272 = vmatprep.mubr.bf16.mxu0 0
    %273 = vmatmul.mubr.bf16.gmra.mrb[0].mxu0 %v235
    %v274 = vpop.f32.mrb[0].mxu0
    %v275 = vadd.f32 0.0, %v274
    %v276 = vpop.f32.mrb[0].mxu0
    %v277 = vpop.f32.mrb[0].mxu0
    %v278 = vpop.f32.mrb[0].mxu0
    %279 = vdwg.mxu0
    %280 = vrot.lane.b32.xlu0 %v181, 120
    %v281 = vpop.permute.xlu0 %280
    %282 = vrot.lane.b32.xlu0 %v181, 88
    %v283 = vpop.permute.xlu0 %282
    %v285 = vsel %vm185, %v281, 0
    %v288 = vsel %vm185, %v283, 0
    %290 = vmatprep.subr.bf16.mxu0 0
    %291 = vmatpush1.bf16.xpose.msra.mxu0 %v288
    %292 = vmatprep.subr.bf16.mxu0 0
    %293 = vmatpush1.bf16.xpose.msra.mxu0 0
    %294 = vmatprep.subr.bf16.mxu0 0
    %295 = vmatpush1.bf16.xpose.msra.mxu0 0
    %296 = vmatprep.subr.bf16.mxu0 0
    %297 = vmatpush1.bf16.xpose.msra.mxu0 0
    %298 = vmatprep.subr.bf16.mxu0 0
    %299 = vmatpush1.bf16.xpose.msra.mxu0 0
    %300 = vmatprep.subr.bf16.mxu0 0
    %301 = vmatpush1.bf16.xpose.msra.mxu0 0
    %302 = vmatprep.subr.bf16.mxu0 0
    %303 = vmatpush1.bf16.xpose.msra.mxu0 0
    %304 = vmatprep.subr.bf16.mxu0 0
    %305 = vmatpush1.bf16.xpose.msra.mxu0 0
    %306 = vmatprep.subr.bf16.mxu0 0
    %307 = vmatpush1.bf16.xpose.msra.mxu0 0
    %308 = vmatprep.subr.bf16.mxu0 0
    %309 = vmatpush1.bf16.xpose.msra.mxu0 0
    %310 = vmatprep.subr.bf16.mxu0 0
    %311 = vmatpush1.bf16.xpose.msra.mxu0 0
    %312 = vmatprep.subr.bf16.mxu0 0
    %313 = vmatpush1.bf16.xpose.msra.mxu0 0
    %314 = vmatprep.subr.bf16.mxu0 0
    %315 = vmatpush1.bf16.xpose.msra.mxu0 0
    %316 = vmatprep.subr.bf16.mxu0 0
    %317 = vmatpush1.bf16.xpose.msra.mxu0 0
    %318 = vmatprep.subr.bf16.mxu0 0
    %319 = vmatpush1.bf16.xpose.msra.mxu0 0
    %320 = vmatprep.subr.bf16.mxu0 0
    %321 = vmatpush1.bf16.xpose.msra.mxu0 0
    %322 = vmatprep.mubr.bf16.mxu0 0
    %323 = vmatmul.mubr.bf16.gmra.mrb[0].mxu0 %v285
    %v324 = vpop.f32.mrb[0].mxu0
    %v325 = vadd.f32 0.0, %v324
    %v326 = vpop.f32.mrb[0].mxu0
    %v327 = vpop.f32.mrb[0].mxu0
    %v328 = vpop.f32.mrb[0].mxu0
    %329 = vdwg.mxu0
    %330 = vrot.lane.b32.xlu0 %v182, 120
    %v331 = vpop.permute.xlu0 %330
    %332 = vrot.lane.b32.xlu0 %v182, 88
    %v333 = vpop.permute.xlu0 %332
    %v335 = vsel %vm185, %v331, 0
    %v338 = vsel %vm185, %v333, 0
    %340 = vmatprep.subr.bf16.mxu0 0
    %341 = vmatpush1.bf16.xpose.msra.mxu0 %v338
    %342 = vmatprep.subr.bf16.mxu0 0
    %343 = vmatpush1.bf16.xpose.msra.mxu0 0
    %344 = vmatprep.subr.bf16.mxu0 0
    %345 = vmatpush1.bf16.xpose.msra.mxu0 0
    %346 = vmatprep.subr.bf16.mxu0 0
    %347 = vmatpush1.bf16.xpose.msra.mxu0 0
    %348 = vmatprep.subr.bf16.mxu0 0
    %349 = vmatpush1.bf16.xpose.msra.mxu0 0
    %350 = vmatprep.subr.bf16.mxu0 0
    %351 = vmatpush1.bf16.xpose.msra.mxu0 0
    %352 = vmatprep.subr.bf16.mxu0 0
    %353 = vmatpush1.bf16.xpose.msra.mxu0 0
    %354 = vmatprep.subr.bf16.mxu0 0
    %355 = vmatpush1.bf16.xpose.msra.mxu0 0
    %356 = vmatprep.subr.bf16.mxu0 0
    %357 = vmatpush1.bf16.xpose.msra.mxu0 0
    %358 = vmatprep.subr.bf16.mxu0 0
    %359 = vmatpush1.bf16.xpose.msra.mxu0 0
    %360 = vmatprep.subr.bf16.mxu0 0
    %361 = vmatpush1.bf16.xpose.msra.mxu0 0
    %362 = vmatprep.subr.bf16.mxu0 0
    %363 = vmatpush1.bf16.xpose.msra.mxu0 0
    %364 = vmatprep.subr.bf16.mxu0 0
    %365 = vmatpush1.bf16.xpose.msra.mxu0 0
    %366 = vmatprep.subr.bf16.mxu0 0
    %367 = vmatpush1.bf16.xpose.msra.mxu0 0
    %368 = vmatprep.subr.bf16.mxu0 0
    %369 = vmatpush1.bf16.xpose.msra.mxu0 0
    %370 = vmatprep.subr.bf16.mxu0 0
    %371 = vmatpush1.bf16.xpose.msra.mxu0 0
    %372 = vmatprep.mubr.bf16.mxu0 0
    %373 = vmatmul.mubr.bf16.gmra.mrb[0].mxu0 %v335
    %v374 = vpop.f32.mrb[0].mxu0
    %v375 = vadd.f32 0.0, %v374
    %v376 = vpop.f32.mrb[0].mxu0
    %v377 = vpop.f32.mrb[0].mxu0
    %v378 = vpop.f32.mrb[0].mxu0
    %379 = vdwg.mxu0
    %380 = vrot.lane.b32.xlu0 %v181, 112
    %v381 = vpop.permute.xlu0 %380
    %382 = vrot.lane.b32.xlu0 %v181, 80
    %v383 = vpop.permute.xlu0 %382
    %v385 = vsel %vm185, %v381, 0
    %v388 = vsel %vm185, %v383, 0
    %390 = vmatprep.subr.bf16.mxu0 0
    %391 = vmatpush1.bf16.xpose.msra.mxu0 %v388
    %392 = vmatprep.subr.bf16.mxu0 0
    %393 = vmatpush1.bf16.xpose.msra.mxu0 0
    %394 = vmatprep.subr.bf16.mxu0 0
    %395 = vmatpush1.bf16.xpose.msra.mxu0 0
    %396 = vmatprep.subr.bf16.mxu0 0
    %397 = vmatpush1.bf16.xpose.msra.mxu0 0
    %398 = vmatprep.subr.bf16.mxu0 0
    %399 = vmatpush1.bf16.xpose.msra.mxu0 0
    %400 = vmatprep.subr.bf16.mxu0 0
    %401 = vmatpush1.bf16.xpose.msra.mxu0 0
    %402 = vmatprep.subr.bf16.mxu0 0
    %403 = vmatpush1.bf16.xpose.msra.mxu0 0
    %404 = vmatprep.subr.bf16.mxu0 0
    %405 = vmatpush1.bf16.xpose.msra.mxu0 0
    %406 = vmatprep.subr.bf16.mxu0 0
    %407 = vmatpush1.bf16.xpose.msra.mxu0 0
    %408 = vmatprep.subr.bf16.mxu0 0
    %409 = vmatpush1.bf16.xpose.msra.mxu0 0
    %410 = vmatprep.subr.bf16.mxu0 0
    %411 = vmatpush1.bf16.xpose.msra.mxu0 0
    %412 = vmatprep.subr.bf16.mxu0 0
    %413 = vmatpush1.bf16.xpose.msra.mxu0 0
    %414 = vmatprep.subr.bf16.mxu0 0
    %415 = vmatpush1.bf16.xpose.msra.mxu0 0
    %416 = vmatprep.subr.bf16.mxu0 0
    %417 = vmatpush1.bf16.xpose.msra.mxu0 0
    %418 = vmatprep.subr.bf16.mxu0 0
    %419 = vmatpush1.bf16.xpose.msra.mxu0 0
    %420 = vmatprep.subr.bf16.mxu0 0
    %421 = vmatpush1.bf16.xpose.msra.mxu0 0
    %422 = vmatprep.mubr.bf16.mxu0 0
    %423 = vmatmul.mubr.bf16.gmra.mrb[0].mxu0 %v385
    %v424 = vpop.f32.mrb[0].mxu0
    %v425 = vadd.f32 0.0, %v424
    %v426 = vpop.f32.mrb[0].mxu0
    %v427 = vpop.f32.mrb[0].mxu0
    %v428 = vpop.f32.mrb[0].mxu0
    %429 = vdwg.mxu0
    %430 = vrot.lane.b32.xlu0 %v182, 112
    %v431 = vpop.permute.xlu0 %430
    %432 = vrot.lane.b32.xlu0 %v182, 80
    %v433 = vpop.permute.xlu0 %432
    %v435 = vsel %vm185, %v431, 0
    %v438 = vsel %vm185, %v433, 0
    %440 = vmatprep.subr.bf16.mxu0 0
    %441 = vmatpush1.bf16.xpose.msra.mxu0 %v438
    %442 = vmatprep.subr.bf16.mxu0 0
    %443 = vmatpush1.bf16.xpose.msra.mxu0 0
    %444 = vmatprep.subr.bf16.mxu0 0
    %445 = vmatpush1.bf16.xpose.msra.mxu0 0
    %446 = vmatprep.subr.bf16.mxu0 0
    %447 = vmatpush1.bf16.xpose.msra.mxu0 0
    %448 = vmatprep.subr.bf16.mxu0 0
    %449 = vmatpush1.bf16.xpose.msra.mxu0 0
    %450 = vmatprep.subr.bf16.mxu0 0
    %451 = vmatpush1.bf16.xpose.msra.mxu0 0
    %452 = vmatprep.subr.bf16.mxu0 0
    %453 = vmatpush1.bf16.xpose.msra.mxu0 0
    %454 = vmatprep.subr.bf16.mxu0 0
    %455 = vmatpush1.bf16.xpose.msra.mxu0 0
    %456 = vmatprep.subr.bf16.mxu0 0
    %457 = vmatpush1.bf16.xpose.msra.mxu0 0
    %458 = vmatprep.subr.bf16.mxu0 0
    %459 = vmatpush1.bf16.xpose.msra.mxu0 0
    %460 = vmatprep.subr.bf16.mxu0 0
    %461 = vmatpush1.bf16.xpose.msra.mxu0 0
    %462 = vmatprep.subr.bf16.mxu0 0
    %463 = vmatpush1.bf16.xpose.msra.mxu0 0
    %464 = vmatprep.subr.bf16.mxu0 0
    %465 = vmatpush1.bf16.xpose.msra.mxu0 0
    %466 = vmatprep.subr.bf16.mxu0 0
    %467 = vmatpush1.bf16.xpose.msra.mxu0 0
    %468 = vmatprep.subr.bf16.mxu0 0
    %469 = vmatpush1.bf16.xpose.msra.mxu0 0
    %470 = vmatprep.subr.bf16.mxu0 0
    %471 = vmatpush1.bf16.xpose.msra.mxu0 0
    %472 = vmatprep.mubr.bf16.mxu0 0
    %473 = vmatmul.mubr.bf16.gmra.mrb[0].mxu0 %v435
    %v474 = vpop.f32.mrb[0].mxu0
    %v475 = vadd.f32 0.0, %v474
    %v476 = vpop.f32.mrb[0].mxu0
    %v477 = vpop.f32.mrb[0].mxu0
    %v478 = vpop.f32.mrb[0].mxu0
    %479 = vdwg.mxu0
    %480 = vrot.lane.b32.xlu0 %v181, 104
    %v481 = vpop.permute.xlu0 %480
    %482 = vrot.lane.b32.xlu0 %v181, 72
    %v483 = vpop.permute.xlu0 %482
    %v485 = vsel %vm185, %v481, 0
    %v488 = vsel %vm185, %v483, 0
    %490 = vmatprep.subr.bf16.mxu0 0
    %491 = vmatpush1.bf16.xpose.msra.mxu0 %v488
    %492 = vmatprep.subr.bf16.mxu0 0
    %493 = vmatpush1.bf16.xpose.msra.mxu0 0
    %494 = vmatprep.subr.bf16.mxu0 0
    %495 = vmatpush1.bf16.xpose.msra.mxu0 0
    %496 = vmatprep.subr.bf16.mxu0 0
    %497 = vmatpush1.bf16.xpose.msra.mxu0 0
    %498 = vmatprep.subr.bf16.mxu0 0
    %499 = vmatpush1.bf16.xpose.msra.mxu0 0
    %500 = vmatprep.subr.bf16.mxu0 0
    %501 = vmatpush1.bf16.xpose.msra.mxu0 0
    %502 = vmatprep.subr.bf16.mxu0 0
    %503 = vmatpush1.bf16.xpose.msra.mxu0 0
    %504 = vmatprep.subr.bf16.mxu0 0
    %505 = vmatpush1.bf16.xpose.msra.mxu0 0
    %506 = vmatprep.subr.bf16.mxu0 0
    %507 = vmatpush1.bf16.xpose.msra.mxu0 0
    %508 = vmatprep.subr.bf16.mxu0 0
    %509 = vmatpush1.bf16.xpose.msra.mxu0 0
    %510 = vmatprep.subr.bf16.mxu0 0
    %511 = vmatpush1.bf16.xpose.msra.mxu0 0
    %512 = vmatprep.subr.bf16.mxu0 0
    %513 = vmatpush1.bf16.xpose.msra.mxu0 0
    %514 = vmatprep.subr.bf16.mxu0 0
    %515 = vmatpush1.bf16.xpose.msra.mxu0 0
    %516 = vmatprep.subr.bf16.mxu0 0
    %517 = vmatpush1.bf16.xpose.msra.mxu0 0
    %518 = vmatprep.subr.bf16.mxu0 0
    %519 = vmatpush1.bf16.xpose.msra.mxu0 0
    %520 = vmatprep.subr.bf16.mxu0 0
    %521 = vmatpush1.bf16.xpose.msra.mxu0 0
    %522 = vmatprep.mubr.bf16.mxu0 0
    %523 = vmatmul.mubr.bf16.gmra.mrb[0].mxu0 %v485
    %v524 = vpop.f32.mrb[0].mxu0
    %v525 = vadd.f32 0.0, %v524
    %v526 = vpop.f32.mrb[0].mxu0
    %v527 = vpop.f32.mrb[0].mxu0
    %v528 = vpop.f32.mrb[0].mxu0
    %529 = vdwg.mxu0
    %530 = vrot.lane.b32.xlu0 %v182, 104
    %v531 = vpop.permute.xlu0 %530
    %532 = vrot.lane.b32.xlu0 %v182, 72
    %v533 = vpop.permute.xlu0 %532
    %v535 = vsel %vm185, %v531, 0
    %v538 = vsel %vm185, %v533, 0
    %540 = vmatprep.subr.bf16.mxu0 0
    %541 = vmatpush1.bf16.xpose.msra.mxu0 %v538
    %542 = vmatprep.subr.bf16.mxu0 0
    %543 = vmatpush1.bf16.xpose.msra.mxu0 0
    %544 = vmatprep.subr.bf16.mxu0 0
    %545 = vmatpush1.bf16.xpose.msra.mxu0 0
    %546 = vmatprep.subr.bf16.mxu0 0
    %547 = vmatpush1.bf16.xpose.msra.mxu0 0
    %548 = vmatprep.subr.bf16.mxu0 0
    %549 = vmatpush1.bf16.xpose.msra.mxu0 0
    %550 = vmatprep.subr.bf16.mxu0 0
    %551 = vmatpush1.bf16.xpose.msra.mxu0 0
    %552 = vmatprep.subr.bf16.mxu0 0
    %553 = vmatpush1.bf16.xpose.msra.mxu0 0
    %554 = vmatprep.subr.bf16.mxu0 0
    %555 = vmatpush1.bf16.xpose.msra.mxu0 0
    %556 = vmatprep.subr.bf16.mxu0 0
    %557 = vmatpush1.bf16.xpose.msra.mxu0 0
    %558 = vmatprep.subr.bf16.mxu0 0
    %559 = vmatpush1.bf16.xpose.msra.mxu0 0
    %560 = vmatprep.subr.bf16.mxu0 0
    %561 = vmatpush1.bf16.xpose.msra.mxu0 0
    %562 = vmatprep.subr.bf16.mxu0 0
    %563 = vmatpush1.bf16.xpose.msra.mxu0 0
    %564 = vmatprep.subr.bf16.mxu0 0
    %565 = vmatpush1.bf16.xpose.msra.mxu0 0
    %566 = vmatprep.subr.bf16.mxu0 0
    %567 = vmatpush1.bf16.xpose.msra.mxu0 0
    %568 = vmatprep.subr.bf16.mxu0 0
    %569 = vmatpush1.bf16.xpose.msra.mxu0 0
    %570 = vmatprep.subr.bf16.mxu0 0
    %571 = vmatpush1.bf16.xpose.msra.mxu0 0
    %572 = vmatprep.mubr.bf16.mxu0 0
    %573 = vmatmul.mubr.bf16.gmra.mrb[0].mxu0 %v535
    %v574 = vpop.f32.mrb[0].mxu0
    %v575 = vadd.f32 0.0, %v574
    %v576 = vpop.f32.mrb[0].mxu0
    %v577 = vpop.f32.mrb[0].mxu0
    %v578 = vpop.f32.mrb[0].mxu0
    %579 = vdwg.mxu0
    %v580 = vmul.f32 %v227, 0.35355338
    %v581 = vmul.f32 %v275, 0.35355338
    %v582 = vmul.f32 %v325, 0.35355338
    %v583 = vmul.f32 %v375, 0.35355338
    %v584 = vmul.f32 %v425, 0.35355338
    %v585 = vmul.f32 %v475, 0.35355338
    %v586 = vmul.f32 %v525, 0.35355338
    %v587 = vmul.f32 %v575, 0.35355338
    %v588 = vlaneseq
    %v589 = vshrl.u32 %v588, 7
    %v590 = vsub.s32 0, %v589
    %v591 = vrot.slane %v103, %v590
    %v592 = vlaneseq
    %v593 = vshrl.u32 %v592, 7
    %v594 = vsub.s32 0, %v593
    %v595 = vrot.slane %v110, %v594
    %v598 = vadd.f32 %v580, %v591
    %v599 = vadd.f32 %v581, %v595
    %v600 = vadd.f32 %v582, %v591
    %v601 = vadd.f32 %v583, %v595
    %v602 = vadd.f32 %v584, %v591
    %v603 = vadd.f32 %v585, %v595
    %v604 = vadd.f32 %v586, %v591
    %v605 = vadd.f32 %v587, %v595
    %v606 = vsel %vm185, %v598, -inf
    %607 = vmax.xlane.f32.xlu0 %v606
    %v608 = vpop.xlane.xlu0 %607
    %v609 = vsel %vm185, %v599, -inf
    %610 = vmax.xlane.f32.xlu0 %v609
    %v611 = vpop.xlane.xlu0 %610
    %v612 = vsel %vm185, %v600, -inf
    %613 = vmax.xlane.f32.xlu0 %v612
    %v614 = vpop.xlane.xlu0 %613
    %v615 = vsel %vm185, %v601, -inf
    %616 = vmax.xlane.f32.xlu0 %v615
    %v617 = vpop.xlane.xlu0 %616
    %v618 = vsel %vm185, %v602, -inf
    %619 = vmax.xlane.f32.xlu0 %v618
    %v620 = vpop.xlane.xlu0 %619
    %v621 = vsel %vm185, %v603, -inf
    %622 = vmax.xlane.f32.xlu0 %v621
    %v623 = vpop.xlane.xlu0 %622
    %v624 = vsel %vm185, %v604, -inf
    %625 = vmax.xlane.f32.xlu0 %v624
    %v626 = vpop.xlane.xlu0 %625
    %v627 = vsel %vm185, %v605, -inf
    %628 = vmax.xlane.f32.xlu0 %v627
    %v629 = vpop.xlane.xlu0 %628
    %v630 = vsub.f32 %v598, %v608
    %v631 = vsub.f32 %v599, %v611
    %v632 = vsub.f32 %v600, %v614
    %v633 = vsub.f32 %v601, %v617
    %v634 = vsub.f32 %v602, %v620
    %v635 = vsub.f32 %v603, %v623
    %v636 = vsub.f32 %v604, %v626
    %v637 = vsub.f32 %v605, %v629
    %v638 = vmul.f32 %v630, 1.442695
    %v639 = vpow.pop %v638
    %v640 = vmul.f32 %v631, 1.442695
    %v641 = vpow.pop %v640
    %v642 = vmul.f32 %v632, 1.442695
    %v643 = vpow.pop %v642
    %v644 = vmul.f32 %v633, 1.442695
    %v645 = vpow.pop %v644
    %v646 = vmul.f32 %v634, 1.442695
    %v647 = vpow.pop %v646
    %v648 = vmul.f32 %v635, 1.442695
    %v649 = vpow.pop %v648
    %v650 = vmul.f32 %v636, 1.442695
    %v651 = vpow.pop %v650
    %v652 = vmul.f32 %v637, 1.442695
    %v653 = vpow.pop %v652
    %v654 = vsel %vm185, %v639, 0.0
    %655 = vadd.xlane.f32.xlu0 %v654
    %v656 = vpop.xlane.xlu0 %655
    %v657 = vsel %vm185, %v641, 0.0
    %658 = vadd.xlane.f32.xlu0 %v657
    %v659 = vpop.xlane.xlu0 %658
    %v660 = vsel %vm185, %v643, 0.0
    %661 = vadd.xlane.f32.xlu0 %v660
    %v662 = vpop.xlane.xlu0 %661
    %v663 = vsel %vm185, %v645, 0.0
    %664 = vadd.xlane.f32.xlu0 %v663
    %v665 = vpop.xlane.xlu0 %664
    %v666 = vsel %vm185, %v647, 0.0
    %667 = vadd.xlane.f32.xlu0 %v666
    %v668 = vpop.xlane.xlu0 %667
    %v669 = vsel %vm185, %v649, 0.0
    %670 = vadd.xlane.f32.xlu0 %v669
    %v671 = vpop.xlane.xlu0 %670
    %v672 = vsel %vm185, %v651, 0.0
    %673 = vadd.xlane.f32.xlu0 %v672
    %v674 = vpop.xlane.xlu0 %673
    %v675 = vsel %vm185, %v653, 0.0
    %676 = vadd.xlane.f32.xlu0 %v675
    %v677 = vpop.xlane.xlu0 %676
    %v678 = vrcp.pop %v656
    %v679 = vrcp.pop %v659
    %v680 = vrcp.pop %v662
    %v681 = vrcp.pop %v665
    %v682 = vrcp.pop %v668
    %v683 = vrcp.pop %v671
    %v684 = vrcp.pop %v674
    %v685 = vrcp.pop %v677
    %v686 = vmul.f32 %v639, %v678
    %v687 = vmul.f32 %v641, %v679
    %v688 = vmul.f32 %v643, %v680
    %v689 = vmul.f32 %v645, %v681
    %v690 = vmul.f32 %v647, %v682
    %v691 = vmul.f32 %v649, %v683
    %v692 = vmul.f32 %v651, %v684
    %v693 = vmul.f32 %v653, %v685
    %v694 = vpack.c.bf16 %v686, %v686
    %v695 = vpack.c.bf16 %v687, %v687
    %v696 = vpack.c.bf16 %v688, %v688
    %v697 = vpack.c.bf16 %v689, %v689
    %v698 = vpack.c.bf16 %v690, %v690
    %v699 = vpack.c.bf16 %v691, %v691
    %v700 = vpack.c.bf16 %v692, %v692
    %v701 = vpack.c.bf16 %v693, %v693
    %702 = vrot.lane.b32.xlu0 %v181, 64
    %v703 = vpop.permute.xlu0 %702
    %v705 = vsel %vm185, %v694, 0
    %vm707 = vcmask 1043456
    %v709 = vsel %vm707, %v703, 0
    %711 = vmatprep.subr.bf16.mxu0 0
    %712 = vmatpush1.bf16.msra.mxu0 %v709
    %713 = vmatprep.subr.bf16.mxu0 0
    %714 = vmatpush1.bf16.msra.mxu0 0
    %715 = vmatprep.subr.bf16.mxu0 0
    %716 = vmatpush1.bf16.msra.mxu0 0
    %717 = vmatprep.subr.bf16.mxu0 0
    %718 = vmatpush1.bf16.msra.mxu0 0
    %719 = vmatprep.subr.bf16.mxu0 0
    %720 = vmatpush1.bf16.msra.mxu0 0
    %721 = vmatprep.subr.bf16.mxu0 0
    %722 = vmatpush1.bf16.msra.mxu0 0
    %723 = vmatprep.subr.bf16.mxu0 0
    %724 = vmatpush1.bf16.msra.mxu0 0
    %725 = vmatprep.subr.bf16.mxu0 0
    %726 = vmatpush1.bf16.msra.mxu0 0
    %727 = vmatprep.subr.bf16.mxu0 0
    %728 = vmatpush1.bf16.msra.mxu0 0
    %729 = vmatprep.subr.bf16.mxu0 0
    %730 = vmatpush1.bf16.msra.mxu0 0
    %731 = vmatprep.subr.bf16.mxu0 0
    %732 = vmatpush1.bf16.msra.mxu0 0
    %733 = vmatprep.subr.bf16.mxu0 0
    %734 = vmatpush1.bf16.msra.mxu0 0
    %735 = vmatprep.subr.bf16.mxu0 0
    %736 = vmatpush1.bf16.msra.mxu0 0
    %737 = vmatprep.subr.bf16.mxu0 0
    %738 = vmatpush1.bf16.msra.mxu0 0
    %739 = vmatprep.subr.bf16.mxu0 0
    %740 = vmatpush1.bf16.msra.mxu0 0
    %741 = vmatprep.subr.bf16.mxu0 0
    %742 = vmatpush1.bf16.msra.mxu0 0
    %743 = vmatprep.mubr.bf16.mxu0 0
    %744 = vmatmul.mubr.bf16.gmra.mrb[0].mxu0 %v705
    %v745 = vpop.f32.mrb[0].mxu0
    %v746 = vadd.f32 0.0, %v745
    %v747 = vpop.f32.mrb[0].mxu0
    %v748 = vpop.f32.mrb[0].mxu0
    %v749 = vpop.f32.mrb[0].mxu0
    %750 = vdwg.mxu0
    %751 = vrot.lane.b32.xlu0 %v182, 64
    %v752 = vpop.permute.xlu0 %751
    %v754 = vsel %vm185, %v695, 0
    %v757 = vsel %vm707, %v752, 0
    %759 = vmatprep.subr.bf16.mxu0 0
    %760 = vmatpush1.bf16.msra.mxu0 %v757
    %761 = vmatprep.subr.bf16.mxu0 0
    %762 = vmatpush1.bf16.msra.mxu0 0
    %763 = vmatprep.subr.bf16.mxu0 0
    %764 = vmatpush1.bf16.msra.mxu0 0
    %765 = vmatprep.subr.bf16.mxu0 0
    %766 = vmatpush1.bf16.msra.mxu0 0
    %767 = vmatprep.subr.bf16.mxu0 0
    %768 = vmatpush1.bf16.msra.mxu0 0
    %769 = vmatprep.subr.bf16.mxu0 0
    %770 = vmatpush1.bf16.msra.mxu0 0
    %771 = vmatprep.subr.bf16.mxu0 0
    %772 = vmatpush1.bf16.msra.mxu0 0
    %773 = vmatprep.subr.bf16.mxu0 0
    %774 = vmatpush1.bf16.msra.mxu0 0
    %775 = vmatprep.subr.bf16.mxu0 0
    %776 = vmatpush1.bf16.msra.mxu0 0
    %777 = vmatprep.subr.bf16.mxu0 0
    %778 = vmatpush1.bf16.msra.mxu0 0
    %779 = vmatprep.subr.bf16.mxu0 0
    %780 = vmatpush1.bf16.msra.mxu0 0
    %781 = vmatprep.subr.bf16.mxu0 0
    %782 = vmatpush1.bf16.msra.mxu0 0
    %783 = vmatprep.subr.bf16.mxu0 0
    %784 = vmatpush1.bf16.msra.mxu0 0
    %785 = vmatprep.subr.bf16.mxu0 0
    %786 = vmatpush1.bf16.msra.mxu0 0
    %787 = vmatprep.subr.bf16.mxu0 0
    %788 = vmatpush1.bf16.msra.mxu0 0
    %789 = vmatprep.subr.bf16.mxu0 0
    %790 = vmatpush1.bf16.msra.mxu0 0
    %791 = vmatprep.mubr.bf16.mxu0 0
    %792 = vmatmul.mubr.bf16.gmra.mrb[0].mxu0 %v754
    %v793 = vpop.f32.mrb[0].mxu0
    %v794 = vadd.f32 0.0, %v793
    %v795 = vpop.f32.mrb[0].mxu0
    %v796 = vpop.f32.mrb[0].mxu0
    %v797 = vpop.f32.mrb[0].mxu0
    %798 = vdwg.mxu0
    %799 = vrot.lane.b32.xlu0 %v181, 56
    %v800 = vpop.permute.xlu0 %799
    %v802 = vsel %vm185, %v696, 0
    %v805 = vsel %vm707, %v800, 0
    %807 = vmatprep.subr.bf16.mxu0 0
    %808 = vmatpush1.bf16.msra.mxu0 %v805
    %809 = vmatprep.subr.bf16.mxu0 0
    %810 = vmatpush1.bf16.msra.mxu0 0
    %811 = vmatprep.subr.bf16.mxu0 0
    %812 = vmatpush1.bf16.msra.mxu0 0
    %813 = vmatprep.subr.bf16.mxu0 0
    %814 = vmatpush1.bf16.msra.mxu0 0
    %815 = vmatprep.subr.bf16.mxu0 0
    %816 = vmatpush1.bf16.msra.mxu0 0
    %817 = vmatprep.subr.bf16.mxu0 0
    %818 = vmatpush1.bf16.msra.mxu0 0
    %819 = vmatprep.subr.bf16.mxu0 0
    %820 = vmatpush1.bf16.msra.mxu0 0
    %821 = vmatprep.subr.bf16.mxu0 0
    %822 = vmatpush1.bf16.msra.mxu0 0
    %823 = vmatprep.subr.bf16.mxu0 0
    %824 = vmatpush1.bf16.msra.mxu0 0
    %825 = vmatprep.subr.bf16.mxu0 0
    %826 = vmatpush1.bf16.msra.mxu0 0
    %827 = vmatprep.subr.bf16.mxu0 0
    %828 = vmatpush1.bf16.msra.mxu0 0
    %829 = vmatprep.subr.bf16.mxu0 0
    %830 = vmatpush1.bf16.msra.mxu0 0
    %831 = vmatprep.subr.bf16.mxu0 0
    %832 = vmatpush1.bf16.msra.mxu0 0
    %833 = vmatprep.subr.bf16.mxu0 0
    %834 = vmatpush1.bf16.msra.mxu0 0
    %835 = vmatprep.subr.bf16.mxu0 0
    %836 = vmatpush1.bf16.msra.mxu0 0
    %837 = vmatprep.subr.bf16.mxu0 0
    %838 = vmatpush1.bf16.msra.mxu0 0
    %839 = vmatprep.mubr.bf16.mxu0 0
    %840 = vmatmul.mubr.bf16.gmra.mrb[0].mxu0 %v802
    %v841 = vpop.f32.mrb[0].mxu0
    %v842 = vadd.f32 0.0, %v841
    %v843 = vpop.f32.mrb[0].mxu0
    %v844 = vpop.f32.mrb[0].mxu0
    %v845 = vpop.f32.mrb[0].mxu0
    %846 = vdwg.mxu0
    %847 = vrot.lane.b32.xlu0 %v182, 56
    %v848 = vpop.permute.xlu0 %847
    %v850 = vsel %vm185, %v697, 0
    %v853 = vsel %vm707, %v848, 0
    %855 = vmatprep.subr.bf16.mxu0 0
    %856 = vmatpush1.bf16.msra.mxu0 %v853
    %857 = vmatprep.subr.bf16.mxu0 0
    %858 = vmatpush1.bf16.msra.mxu0 0
    %859 = vmatprep.subr.bf16.mxu0 0
    %860 = vmatpush1.bf16.msra.mxu0 0
    %861 = vmatprep.subr.bf16.mxu0 0
    %862 = vmatpush1.bf16.msra.mxu0 0
    %863 = vmatprep.subr.bf16.mxu0 0
    %864 = vmatpush1.bf16.msra.mxu0 0
    %865 = vmatprep.subr.bf16.mxu0 0
    %866 = vmatpush1.bf16.msra.mxu0 0
    %867 = vmatprep.subr.bf16.mxu0 0
    %868 = vmatpush1.bf16.msra.mxu0 0
    %869 = vmatprep.subr.bf16.mxu0 0
    %870 = vmatpush1.bf16.msra.mxu0 0
    %871 = vmatprep.subr.bf16.mxu0 0
    %872 = vmatpush1.bf16.msra.mxu0 0
    %873 = vmatprep.subr.bf16.mxu0 0
    %874 = vmatpush1.bf16.msra.mxu0 0
    %875 = vmatprep.subr.bf16.mxu0 0
    %876 = vmatpush1.bf16.msra.mxu0 0
    %877 = vmatprep.subr.bf16.mxu0 0
    %878 = vmatpush1.bf16.msra.mxu0 0
    %879 = vmatprep.subr.bf16.mxu0 0
    %880 = vmatpush1.bf16.msra.mxu0 0
    %881 = vmatprep.subr.bf16.mxu0 0
    %882 = vmatpush1.bf16.msra.mxu0 0
    %883 = vmatprep.subr.bf16.mxu0 0
    %884 = vmatpush1.bf16.msra.mxu0 0
    %885 = vmatprep.subr.bf16.mxu0 0
    %886 = vmatpush1.bf16.msra.mxu0 0
    %887 = vmatprep.mubr.bf16.mxu0 0
    %888 = vmatmul.mubr.bf16.gmra.mrb[0].mxu0 %v850
    %v889 = vpop.f32.mrb[0].mxu0
    %v890 = vadd.f32 0.0, %v889
    %v891 = vpop.f32.mrb[0].mxu0
    %v892 = vpop.f32.mrb[0].mxu0
    %v893 = vpop.f32.mrb[0].mxu0
    %894 = vdwg.mxu0
    %895 = vrot.lane.b32.xlu0 %v181, 48
    %v896 = vpop.permute.xlu0 %895
    %v898 = vsel %vm185, %v698, 0
    %v901 = vsel %vm707, %v896, 0
    %903 = vmatprep.subr.bf16.mxu0 0
    %904 = vmatpush1.bf16.msra.mxu0 %v901
    %905 = vmatprep.subr.bf16.mxu0 0
    %906 = vmatpush1.bf16.msra.mxu0 0
    %907 = vmatprep.subr.bf16.mxu0 0
    %908 = vmatpush1.bf16.msra.mxu0 0
    %909 = vmatprep.subr.bf16.mxu0 0
    %910 = vmatpush1.bf16.msra.mxu0 0
    %911 = vmatprep.subr.bf16.mxu0 0
    %912 = vmatpush1.bf16.msra.mxu0 0
    %913 = vmatprep.subr.bf16.mxu0 0
    %914 = vmatpush1.bf16.msra.mxu0 0
    %915 = vmatprep.subr.bf16.mxu0 0
    %916 = vmatpush1.bf16.msra.mxu0 0
    %917 = vmatprep.subr.bf16.mxu0 0
    %918 = vmatpush1.bf16.msra.mxu0 0
    %919 = vmatprep.subr.bf16.mxu0 0
    %920 = vmatpush1.bf16.msra.mxu0 0
    %921 = vmatprep.subr.bf16.mxu0 0
    %922 = vmatpush1.bf16.msra.mxu0 0
    %923 = vmatprep.subr.bf16.mxu0 0
    %924 = vmatpush1.bf16.msra.mxu0 0
    %925 = vmatprep.subr.bf16.mxu0 0
    %926 = vmatpush1.bf16.msra.mxu0 0
    %927 = vmatprep.subr.bf16.mxu0 0
    %928 = vmatpush1.bf16.msra.mxu0 0
    %929 = vmatprep.subr.bf16.mxu0 0
    %930 = vmatpush1.bf16.msra.mxu0 0
    %931 = vmatprep.subr.bf16.mxu0 0
    %932 = vmatpush1.bf16.msra.mxu0 0
    %933 = vmatprep.subr.bf16.mxu0 0
    %934 = vmatpush1.bf16.msra.mxu0 0
    %935 = vmatprep.mubr.bf16.mxu0 0
    %936 = vmatmul.mubr.bf16.gmra.mrb[0].mxu0 %v898
    %v937 = vpop.f32.mrb[0].mxu0
    %v938 = vadd.f32 0.0, %v937
    %v939 = vpop.f32.mrb[0].mxu0
    %v940 = vpop.f32.mrb[0].mxu0
    %v941 = vpop.f32.mrb[0].mxu0
    %942 = vdwg.mxu0
    %943 = vrot.lane.b32.xlu0 %v182, 48
    %v944 = vpop.permute.xlu0 %943
    %v946 = vsel %vm185, %v699, 0
    %v949 = vsel %vm707, %v944, 0
    %951 = vmatprep.subr.bf16.mxu0 0
    %952 = vmatpush1.bf16.msra.mxu0 %v949
    %953 = vmatprep.subr.bf16.mxu0 0
    %954 = vmatpush1.bf16.msra.mxu0 0
    %955 = vmatprep.subr.bf16.mxu0 0
    %956 = vmatpush1.bf16.msra.mxu0 0
    %957 = vmatprep.subr.bf16.mxu0 0
    %958 = vmatpush1.bf16.msra.mxu0 0
    %959 = vmatprep.subr.bf16.mxu0 0
    %960 = vmatpush1.bf16.msra.mxu0 0
    %961 = vmatprep.subr.bf16.mxu0 0
    %962 = vmatpush1.bf16.msra.mxu0 0
    %963 = vmatprep.subr.bf16.mxu0 0
    %964 = vmatpush1.bf16.msra.mxu0 0
    %965 = vmatprep.subr.bf16.mxu0 0
    %966 = vmatpush1.bf16.msra.mxu0 0
    %967 = vmatprep.subr.bf16.mxu0 0
    %968 = vmatpush1.bf16.msra.mxu0 0
    %969 = vmatprep.subr.bf16.mxu0 0
    %970 = vmatpush1.bf16.msra.mxu0 0
    %971 = vmatprep.subr.bf16.mxu0 0
    %972 = vmatpush1.bf16.msra.mxu0 0
    %973 = vmatprep.subr.bf16.mxu0 0
    %974 = vmatpush1.bf16.msra.mxu0 0
    %975 = vmatprep.subr.bf16.mxu0 0
    %976 = vmatpush1.bf16.msra.mxu0 0
    %977 = vmatprep.subr.bf16.mxu0 0
    %978 = vmatpush1.bf16.msra.mxu0 0
    %979 = vmatprep.subr.bf16.mxu0 0
    %980 = vmatpush1.bf16.msra.mxu0 0
    %981 = vmatprep.subr.bf16.mxu0 0
    %982 = vmatpush1.bf16.msra.mxu0 0
    %983 = vmatprep.mubr.bf16.mxu0 0
    %984 = vmatmul.mubr.bf16.gmra.mrb[0].mxu0 %v946
    %v985 = vpop.f32.mrb[0].mxu0
    %v986 = vadd.f32 0.0, %v985
    %v987 = vpop.f32.mrb[0].mxu0
    %v988 = vpop.f32.mrb[0].mxu0
    %v989 = vpop.f32.mrb[0].mxu0
    %990 = vdwg.mxu0
    %991 = vrot.lane.b32.xlu0 %v181, 40
    %v992 = vpop.permute.xlu0 %991
    %v994 = vsel %vm185, %v700, 0
    %v997 = vsel %vm707, %v992, 0
    %999 = vmatprep.subr.bf16.mxu0 0
    %1000 = vmatpush1.bf16.msra.mxu0 %v997
    %1001 = vmatprep.subr.bf16.mxu0 0
    %1002 = vmatpush1.bf16.msra.mxu0 0
    %1003 = vmatprep.subr.bf16.mxu0 0
    %1004 = vmatpush1.bf16.msra.mxu0 0
    %1005 = vmatprep.subr.bf16.mxu0 0
    %1006 = vmatpush1.bf16.msra.mxu0 0
    %1007 = vmatprep.subr.bf16.mxu0 0
    %1008 = vmatpush1.bf16.msra.mxu0 0
    %1009 = vmatprep.subr.bf16.mxu0 0
    %1010 = vmatpush1.bf16.msra.mxu0 0
    %1011 = vmatprep.subr.bf16.mxu0 0
    %1012 = vmatpush1.bf16.msra.mxu0 0
    %1013 = vmatprep.subr.bf16.mxu0 0
    %1014 = vmatpush1.bf16.msra.mxu0 0
    %1015 = vmatprep.subr.bf16.mxu0 0
    %1016 = vmatpush1.bf16.msra.mxu0 0
    %1017 = vmatprep.subr.bf16.mxu0 0
    %1018 = vmatpush1.bf16.msra.mxu0 0
    %1019 = vmatprep.subr.bf16.mxu0 0
    %1020 = vmatpush1.bf16.msra.mxu0 0
    %1021 = vmatprep.subr.bf16.mxu0 0
    %1022 = vmatpush1.bf16.msra.mxu0 0
    %1023 = vmatprep.subr.bf16.mxu0 0
    %1024 = vmatpush1.bf16.msra.mxu0 0
    %1025 = vmatprep.subr.bf16.mxu0 0
    %1026 = vmatpush1.bf16.msra.mxu0 0
    %1027 = vmatprep.subr.bf16.mxu0 0
    %1028 = vmatpush1.bf16.msra.mxu0 0
    %1029 = vmatprep.subr.bf16.mxu0 0
    %1030 = vmatpush1.bf16.msra.mxu0 0
    %1031 = vmatprep.mubr.bf16.mxu0 0
    %1032 = vmatmul.mubr.bf16.gmra.mrb[0].mxu0 %v994
    %v1033 = vpop.f32.mrb[0].mxu0
    %v1034 = vadd.f32 0.0, %v1033
    %v1035 = vpop.f32.mrb[0].mxu0
    %v1036 = vpop.f32.mrb[0].mxu0
    %v1037 = vpop.f32.mrb[0].mxu0
    %1038 = vdwg.mxu0
    %1039 = vrot.lane.b32.xlu0 %v182, 40
    %v1040 = vpop.permute.xlu0 %1039
    %v1042 = vsel %vm185, %v701, 0
    %v1045 = vsel %vm707, %v1040, 0
    %1047 = vmatprep.subr.bf16.mxu0 0
    %1048 = vmatpush1.bf16.msra.mxu0 %v1045
    %1049 = vmatprep.subr.bf16.mxu0 0
    %1050 = vmatpush1.bf16.msra.mxu0 0
    %1051 = vmatprep.subr.bf16.mxu0 0
    %1052 = vmatpush1.bf16.msra.mxu0 0
    %1053 = vmatprep.subr.bf16.mxu0 0
    %1054 = vmatpush1.bf16.msra.mxu0 0
    %1055 = vmatprep.subr.bf16.mxu0 0
    %1056 = vmatpush1.bf16.msra.mxu0 0
    %1057 = vmatprep.subr.bf16.mxu0 0
    %1058 = vmatpush1.bf16.msra.mxu0 0
    %1059 = vmatprep.subr.bf16.mxu0 0
    %1060 = vmatpush1.bf16.msra.mxu0 0
    %1061 = vmatprep.subr.bf16.mxu0 0
    %1062 = vmatpush1.bf16.msra.mxu0 0
    %1063 = vmatprep.subr.bf16.mxu0 0
    %1064 = vmatpush1.bf16.msra.mxu0 0
    %1065 = vmatprep.subr.bf16.mxu0 0
    %1066 = vmatpush1.bf16.msra.mxu0 0
    %1067 = vmatprep.subr.bf16.mxu0 0
    %1068 = vmatpush1.bf16.msra.mxu0 0
    %1069 = vmatprep.subr.bf16.mxu0 0
    %1070 = vmatpush1.bf16.msra.mxu0 0
    %1071 = vmatprep.subr.bf16.mxu0 0
    %1072 = vmatpush1.bf16.msra.mxu0 0
    %1073 = vmatprep.subr.bf16.mxu0 0
    %1074 = vmatpush1.bf16.msra.mxu0 0
    %1075 = vmatprep.subr.bf16.mxu0 0
    %1076 = vmatpush1.bf16.msra.mxu0 0
    %1077 = vmatprep.subr.bf16.mxu0 0
    %1078 = vmatpush1.bf16.msra.mxu0 0
    %1079 = vmatprep.mubr.bf16.mxu0 0
    %1080 = vmatmul.mubr.bf16.gmra.mrb[0].mxu0 %v1042
    %v1081 = vpop.f32.mrb[0].mxu0
    %v1082 = vadd.f32 0.0, %v1081
    %v1083 = vpop.f32.mrb[0].mxu0
    %v1084 = vpop.f32.mrb[0].mxu0
    %v1085 = vpop.f32.mrb[0].mxu0
    %1086 = vdwg.mxu0
    %1089 = vrot.lane.b32.xlu0 %v842, 8
    %v1090 = vpop.permute.xlu0 %1089
    %1091 = vrot.lane.b32.xlu0 %v890, 8
    %v1092 = vpop.permute.xlu0 %1091
    %1097 = vrot.lane.b32.xlu0 %v938, 16
    %v1098 = vpop.permute.xlu0 %1097
    %1099 = vrot.lane.b32.xlu0 %v986, 16
    %v1100 = vpop.permute.xlu0 %1099
    %1105 = vrot.lane.b32.xlu0 %v1034, 24
    %v1106 = vpop.permute.xlu0 %1105
    %1107 = vrot.lane.b32.xlu0 %v1082, 24
    %v1108 = vpop.permute.xlu0 %1107
    %v1111 = vsel %vm185, %v746, %v1090
    %v1112 = vsel %vm185, %v794, %v1092
    %vm1113 = vcmask 130048
    %v1114 = vsel %vm1113, %v1111, %v1098
    %v1115 = vsel %vm1113, %v1112, %v1100
    %vm1116 = vcmask 195584
    %v1117 = vsel %vm1116, %v1114, %v1106
    %v1118 = vsel %vm1116, %v1115, %v1108
    %v1119 = vpack.c.bf16 %v1118, %v1117
    %v1120 = vld [vmem:[%s4] sm:$0xf]
    %v1121 = vld [vmem:[%s4 + $0x4] sm:$0xf]
    %v1122 = vld [vmem:[%s4 + $0x8] sm:$0xf]
    %v1123 = vld [vmem:[%s4 + $0xc] sm:$0xf]
    %v1124 = vlaneseq
    %v1125 = vshrl.u32 %v1124, 7
    %v1126 = vsub.s32 1, %v1125
    %v1127 = vrot.slane %v111, %v1126
    %v1132 = vunpack.c.l.b16 %v1120
    %v1133 = vunpack.c.l.b16 %v1121
    %v1134 = vunpack.c.l.b16 %v1122
    %v1135 = vunpack.c.l.b16 %v1123
    %v1136 = vpack.c.b16 %v1133, %v1132
    %v1137 = vpack.c.b16 %v1135, %v1134
    %v1141 = vsel %vm47, %v1119, 0
    %1143 = vmatprep.subr.bf16.mxu0 0
    %1144 = vmatpush1.bf16.msra.mxu0 %v1136
    %1145 = vmatprep.subr.bf16.mxu0 0
    %1146 = vmatpush1.bf16.msra.mxu0 %v1137
    %1147 = vmatprep.subr.bf16.mxu0 0
    %1148 = vmatpush1.bf16.msra.mxu0 0
    %1149 = vmatprep.subr.bf16.mxu0 0
    %1150 = vmatpush1.bf16.msra.mxu0 0
    %1151 = vmatprep.subr.bf16.mxu0 0
    %1152 = vmatpush1.bf16.msra.mxu0 0
    %1153 = vmatprep.subr.bf16.mxu0 0
    %1154 = vmatpush1.bf16.msra.mxu0 0
    %1155 = vmatprep.subr.bf16.mxu0 0
    %1156 = vmatpush1.bf16.msra.mxu0 0
    %1157 = vmatprep.subr.bf16.mxu0 0
    %1158 = vmatpush1.bf16.msra.mxu0 0
    %1159 = vmatprep.subr.bf16.mxu0 0
    %1160 = vmatpush1.bf16.msra.mxu0 0
    %1161 = vmatprep.subr.bf16.mxu0 0
    %1162 = vmatpush1.bf16.msra.mxu0 0
    %1163 = vmatprep.subr.bf16.mxu0 0
    %1164 = vmatpush1.bf16.msra.mxu0 0
    %1165 = vmatprep.subr.bf16.mxu0 0
    %1166 = vmatpush1.bf16.msra.mxu0 0
    %1167 = vmatprep.subr.bf16.mxu0 0
    %1168 = vmatpush1.bf16.msra.mxu0 0
    %1169 = vmatprep.subr.bf16.mxu0 0
    %1170 = vmatpush1.bf16.msra.mxu0 0
    %1171 = vmatprep.subr.bf16.mxu0 0
    %1172 = vmatpush1.bf16.msra.mxu0 0
    %1173 = vmatprep.subr.bf16.mxu0 0
    %1174 = vmatpush1.bf16.msra.mxu0 0
    %1175 = vmatprep.mubr.bf16.mxu0 0
    %1176 = vmatmul.mubr.bf16.gmra.mrb[0].mxu0 %v1141
    %v1177 = vpop.f32.mrb[0].mxu0
    %v1178 = vadd.f32 %v1127, %v1177
    %v1179 = vpop.f32.mrb[0].mxu0
    %v1180 = vpop.f32.mrb[0].mxu0
    %v1181 = vadd.f32 %v1127, %v1180
    %v1182 = vpop.f32.mrb[0].mxu0
    %1183 = vdwg.mxu0
    %v1184 = vadd.f32 %v85, %v1178
    %v1185 = vadd.f32 %v86, %v1181
    %v1186 = vsel %vm47, %v1184, 0.0
    %1187 = vadd.xlane.f32.xlu0 %v1186
    %v1188 = vpop.xlane.xlu0 %1187
    %v1189 = vsel %vm47, %v1185, 0.0
    %1190 = vadd.xlane.f32.xlu0 %v1189
    %v1191 = vpop.xlane.xlu0 %1190
    %v1192 = vmul.f32 %v1188, %v54
    %v1193 = vmul.f32 %v1191, %v54
    %v1194 = vsub.f32 %v1184, %v1192
    %v1195 = vsub.f32 %v1185, %v1193
    %v1196 = vmul.f32 %v1194, %v1194
    %v1197 = vmul.f32 %v1195, %v1195
    %v1198 = vsel %vm47, %v1196, 0.0
    %1199 = vadd.xlane.f32.xlu0 %v1198
    %v1200 = vpop.xlane.xlu0 %1199
    %v1201 = vsel %vm47, %v1197, 0.0
    %1202 = vadd.xlane.f32.xlu0 %v1201
    %v1203 = vpop.xlane.xlu0 %1202
    %v1204 = vmul.f32 %v1200, %v54
    %v1205 = vmul.f32 %v1203, %v54
    %v1206 = vadd.f32 %v1204, 1e-12
    %v1207 = vadd.f32 %v1205, 1e-12
    %v1208 = vrsqrt.pop %v1206
    %v1209 = vrsqrt.pop %v1207
    %v1210 = vmul.f32 %v1194, %v1208
    %v1211 = vmul.f32 %v1195, %v1209
    %v1212 = vlaneseq
    %v1213 = vshrl.u32 %v1212, 7
    %v1214 = vsub.s32 2, %v1213
    %v1215 = vrot.slane %v111, %v1214
    %v1216 = vmul.f32 %v1210, %v1215
    %v1217 = vmul.f32 %v1211, %v1215
    %v1218 = vlaneseq
    %v1219 = vshrl.u32 %v1218, 7
    %v1220 = vsub.s32 3, %v1219
    %v1221 = vrot.slane %v111, %v1220
    %v1222 = vadd.f32 %v1216, %v1221
    %v1223 = vadd.f32 %v1217, %v1221
    %v1224 = vpack.c.bf16 %v1223, %v1222
    %v1225 = vld [vmem:[%s5] sm:$0xf]
    %v1226 = vld [vmem:[%s5 + $0x4] sm:$0xf]
    %v1227 = vld [vmem:[%s5 + $0x8] sm:$0xf]
    %v1228 = vld [vmem:[%s5 + $0xc] sm:$0xf]
    %v1229 = vlaneseq
    %v1230 = vshrl.u32 %v1229, 7
    %v1231 = vsub.s32 4, %v1230
    %v1232 = vrot.slane %v111, %v1231
    %v1237 = vunpack.c.l.b16 %v1225
    %v1238 = vunpack.c.l.b16 %v1226
    %v1239 = vunpack.c.l.b16 %v1227
    %v1240 = vunpack.c.l.b16 %v1228
    %v1241 = vpack.c.b16 %v1238, %v1237
    %v1242 = vpack.c.b16 %v1240, %v1239
    %v1246 = vsel %vm47, %v1224, 0
    %1248 = vmatprep.subr.bf16.mxu0 0
    %1249 = vmatpush1.bf16.msra.mxu0 %v1241
    %1250 = vmatprep.subr.bf16.mxu0 0
    %1251 = vmatpush1.bf16.msra.mxu0 %v1242
    %1252 = vmatprep.subr.bf16.mxu0 0
    %1253 = vmatpush1.bf16.msra.mxu0 0
    %1254 = vmatprep.subr.bf16.mxu0 0
    %1255 = vmatpush1.bf16.msra.mxu0 0
    %1256 = vmatprep.subr.bf16.mxu0 0
    %1257 = vmatpush1.bf16.msra.mxu0 0
    %1258 = vmatprep.subr.bf16.mxu0 0
    %1259 = vmatpush1.bf16.msra.mxu0 0
    %1260 = vmatprep.subr.bf16.mxu0 0
    %1261 = vmatpush1.bf16.msra.mxu0 0
    %1262 = vmatprep.subr.bf16.mxu0 0
    %1263 = vmatpush1.bf16.msra.mxu0 0
    %1264 = vmatprep.subr.bf16.mxu0 0
    %1265 = vmatpush1.bf16.msra.mxu0 0
    %1266 = vmatprep.subr.bf16.mxu0 0
    %1267 = vmatpush1.bf16.msra.mxu0 0
    %1268 = vmatprep.subr.bf16.mxu0 0
    %1269 = vmatpush1.bf16.msra.mxu0 0
    %1270 = vmatprep.subr.bf16.mxu0 0
    %1271 = vmatpush1.bf16.msra.mxu0 0
    %1272 = vmatprep.subr.bf16.mxu0 0
    %1273 = vmatpush1.bf16.msra.mxu0 0
    %1274 = vmatprep.subr.bf16.mxu0 0
    %1275 = vmatpush1.bf16.msra.mxu0 0
    %1276 = vmatprep.subr.bf16.mxu0 0
    %1277 = vmatpush1.bf16.msra.mxu0 0
    %1278 = vmatprep.subr.bf16.mxu0 0
    %1279 = vmatpush1.bf16.msra.mxu0 0
    %1280 = vmatprep.mubr.bf16.mxu0 0
    %1281 = vmatmul.mubr.bf16.gmra.mrb[0].mxu0 %v1246
    %v1282 = vpop.f32.mrb[0].mxu0
    %v1283 = vadd.f32 %v1232, %v1282
    %v1284 = vpop.f32.mrb[0].mxu0
    %v1285 = vpop.f32.mrb[0].mxu0
    %v1286 = vadd.f32 %v1232, %v1285
    %v1287 = vpop.f32.mrb[0].mxu0
    %1288 = vdwg.mxu0
    %v1289 = vmul.f32 %v1283, %v1283
    %v1290 = vmul.f32 %v1286, %v1286
    %v1291 = vmul.f32 %v1283, %v1289
    %v1292 = vmul.f32 %v1286, %v1290
    %v1293 = vmul.f32 %v1291, 0.044715
    %v1294 = vmul.f32 %v1292, 0.044715
    %v1295 = vadd.f32 %v1283, %v1293
    %v1296 = vadd.f32 %v1286, %v1294
    %v1297 = vmul.f32 %v1295, 0.7978846
    %v1298 = vmul.f32 %v1296, 0.7978846
    %v1299 = vtanh.pop %v1297
    %v1300 = vtanh.pop %v1298
    %v1301 = vadd.f32 %v1299, 1.0
    %v1302 = vadd.f32 %v1300, 1.0
    %v1303 = vmul.f32 %v1301, 0.5
    %v1304 = vmul.f32 %v1302, 0.5
    %v1305 = vmul.f32 %v1283, %v1303
    %v1306 = vmul.f32 %v1286, %v1304
    %v1307 = vpack.c.bf16 %v1306, %v1305
    %v1308 = vld [vmem:[%s6] sm:$0xf]
    %v1309 = vld [vmem:[%s6 + $0x4] sm:$0xf]
    %v1310 = vld [vmem:[%s6 + $0x8] sm:$0xf]
    %v1311 = vld [vmem:[%s6 + $0xc] sm:$0xf]
    %v1312 = vld [vmem:[%s6 + $0x10] sm:$0xf]
    %v1313 = vld [vmem:[%s6 + $0x14] sm:$0xf]
    %v1314 = vld [vmem:[%s6 + $0x18] sm:$0xf]
    %v1315 = vld [vmem:[%s6 + $0x1c] sm:$0xf]
    %v1316 = vlaneseq
    %v1317 = vshrl.u32 %v1316, 7
    %v1318 = vsub.s32 5, %v1317
    %v1319 = vrot.slane %v111, %v1318
    %v1328 = vunpack.c.l.b16 %v1308
    %v1329 = vunpack.c.l.b16 %v1309
    %v1330 = vunpack.c.l.b16 %v1310
    %v1331 = vunpack.c.l.b16 %v1311
    %v1332 = vunpack.c.l.b16 %v1312
    %v1333 = vunpack.c.l.b16 %v1313
    %v1334 = vunpack.c.l.b16 %v1314
    %v1335 = vunpack.c.l.b16 %v1315
    %v1336 = vpack.c.b16 %v1329, %v1328
    %v1337 = vpack.c.b16 %v1331, %v1330
    %v1338 = vpack.c.b16 %v1333, %v1332
    %v1339 = vpack.c.b16 %v1335, %v1334
    %vm1344 = vcmask 523264
    %v1346 = vsel %vm1344, %v1307, 0
    %1348 = vmatprep.subr.bf16.mxu0 0
    %1349 = vmatpush1.bf16.msra.mxu0 %v1336
    %1350 = vmatprep.subr.bf16.mxu0 0
    %1351 = vmatpush1.bf16.msra.mxu0 %v1337
    %1352 = vmatprep.subr.bf16.mxu0 0
    %1353 = vmatpush1.bf16.msra.mxu0 %v1338
    %1354 = vmatprep.subr.bf16.mxu0 0
    %1355 = vmatpush1.bf16.msra.mxu0 %v1339
    %1356 = vmatprep.subr.bf16.mxu0 0
    %1357 = vmatpush1.bf16.msra.mxu0 0
    %1358 = vmatprep.subr.bf16.mxu0 0
    %1359 = vmatpush1.bf16.msra.mxu0 0
    %1360 = vmatprep.subr.bf16.mxu0 0
    %1361 = vmatpush1.bf16.msra.mxu0 0
    %1362 = vmatprep.subr.bf16.mxu0 0
    %1363 = vmatpush1.bf16.msra.mxu0 0
    %1364 = vmatprep.subr.bf16.mxu0 0
    %1365 = vmatpush1.bf16.msra.mxu0 0
    %1366 = vmatprep.subr.bf16.mxu0 0
    %1367 = vmatpush1.bf16.msra.mxu0 0
    %1368 = vmatprep.subr.bf16.mxu0 0
    %1369 = vmatpush1.bf16.msra.mxu0 0
    %1370 = vmatprep.subr.bf16.mxu0 0
    %1371 = vmatpush1.bf16.msra.mxu0 0
    %1372 = vmatprep.subr.bf16.mxu0 0
    %1373 = vmatpush1.bf16.msra.mxu0 0
    %1374 = vmatprep.subr.bf16.mxu0 0
    %1375 = vmatpush1.bf16.msra.mxu0 0
    %1376 = vmatprep.subr.bf16.mxu0 0
    %1377 = vmatpush1.bf16.msra.mxu0 0
    %1378 = vmatprep.subr.bf16.mxu0 0
    %1379 = vmatpush1.bf16.msra.mxu0 0
    %1380 = vmatprep.mubr.bf16.mxu0 0
    %1381 = vmatmul.mubr.bf16.gmra.mrb[0].mxu0 %v1346
    %v1382 = vpop.f32.mrb[0].mxu0
    %v1383 = vadd.f32 %v1319, %v1382
    %v1384 = vpop.f32.mrb[0].mxu0
    %v1385 = vpop.f32.mrb[0].mxu0
    %v1386 = vadd.f32 %v1319, %v1385
    %v1387 = vpop.f32.mrb[0].mxu0
    %1388 = vdwg.mxu0
    %v1389 = vadd.f32 %v1222, %v1383
    %v1390 = vadd.f32 %v1223, %v1386
    %v1391 = vsel %vm47, %v1389, 0.0
    %1392 = vadd.xlane.f32.xlu0 %v1391
    %v1393 = vpop.xlane.xlu0 %1392
    %v1394 = vsel %vm47, %v1390, 0.0
    %1395 = vadd.xlane.f32.xlu0 %v1394
    %v1396 = vpop.xlane.xlu0 %1395
    %v1397 = vmul.f32 %v1393, %v54
    %v1398 = vmul.f32 %v1396, %v54
    %v1399 = vsub.f32 %v1389, %v1397
    %v1400 = vsub.f32 %v1390, %v1398
    %v1401 = vmul.f32 %v1399, %v1399
    %v1402 = vmul.f32 %v1400, %v1400
    %v1403 = vsel %vm47, %v1401, 0.0
    %1404 = vadd.xlane.f32.xlu0 %v1403
    %v1405 = vpop.xlane.xlu0 %1404
    %v1406 = vsel %vm47, %v1402, 0.0
    %1407 = vadd.xlane.f32.xlu0 %v1406
    %v1408 = vpop.xlane.xlu0 %1407
    %v1409 = vmul.f32 %v1405, %v54
    %v1410 = vmul.f32 %v1408, %v54
    %v1411 = vadd.f32 %v1409, 1e-12
    %v1412 = vadd.f32 %v1410, 1e-12
    %v1413 = vrsqrt.pop %v1411
    %v1414 = vrsqrt.pop %v1412
    %v1415 = vmul.f32 %v1399, %v1413
    %v1416 = vmul.f32 %v1400, %v1414
    %v1417 = vlaneseq
    %v1418 = vshrl.u32 %v1417, 7
    %v1419 = vsub.s32 6, %v1418
    %v1420 = vrot.slane %v111, %v1419
    %v1421 = vmul.f32 %v1415, %v1420
    %v1422 = vmul.f32 %v1416, %v1420
    %v1423 = vlaneseq
    %v1424 = vshrl.u32 %v1423, 7
    %v1425 = vsub.s32 7, %v1424
    %v1426 = vrot.slane %v111, %v1425
    %v1427 = vadd.f32 %v1421, %v1426
    %v1428 = vadd.f32 %v1422, %v1426
    %s1429 = scalar_lea.vmem %s7, 8
    %v1430 = vld [vmem:[%s1429] sm:$0xff]
    %v1431 = vpack.c.bf16 %v1428, %v1427
    %s1432 = scalar_lea.vmem %s3, 16
    %v1433 = vld [vmem:[%s1432] sm:$0xf]
    %v1434 = vld [vmem:[%s1432 + $0x4] sm:$0xf]
    %v1435 = vld [vmem:[%s1432 + $0x8] sm:$0xf]
    %v1436 = vld [vmem:[%s1432 + $0xc] sm:$0xf]
    %v1437 = vlaneseq
    %v1438 = vshrl.u32 %v1437, 7
    %v1439 = vsub.s32 0, %v1438
    %v1440 = vrot.slane %v1430, %v1439
    %v1445 = vunpack.c.l.b16 %v1433
    %v1446 = vunpack.c.l.b16 %v1434
    %v1447 = vunpack.c.l.b16 %v1435
    %v1448 = vunpack.c.l.b16 %v1436
    %v1449 = vpack.c.b16 %v1446, %v1445
    %v1450 = vpack.c.b16 %v1448, %v1447
    %v1454 = vsel %vm47, %v1431, 0
    %1456 = vmatprep.subr.bf16.mxu0 0
    %1457 = vmatpush1.bf16.msra.mxu0 %v1449
    %1458 = vmatprep.subr.bf16.mxu0 0
    %1459 = vmatpush1.bf16.msra.mxu0 %v1450
    %1460 = vmatprep.subr.bf16.mxu0 0
    %1461 = vmatpush1.bf16.msra.mxu0 0
    %1462 = vmatprep.subr.bf16.mxu0 0
    %1463 = vmatpush1.bf16.msra.mxu0 0
    %1464 = vmatprep.subr.bf16.mxu0 0
    %1465 = vmatpush1.bf16.msra.mxu0 0
    %1466 = vmatprep.subr.bf16.mxu0 0
    %1467 = vmatpush1.bf16.msra.mxu0 0
    %1468 = vmatprep.subr.bf16.mxu0 0
    %1469 = vmatpush1.bf16.msra.mxu0 0
    %1470 = vmatprep.subr.bf16.mxu0 0
    %1471 = vmatpush1.bf16.msra.mxu0 0
    %1472 = vmatprep.subr.bf16.mxu0 0
    %1473 = vmatpush1.bf16.msra.mxu0 0
    %1474 = vmatprep.subr.bf16.mxu0 0
    %1475 = vmatpush1.bf16.msra.mxu0 0
    %1476 = vmatprep.subr.bf16.mxu0 0
    %1477 = vmatpush1.bf16.msra.mxu0 0
    %1478 = vmatprep.subr.bf16.mxu0 0
    %1479 = vmatpush1.bf16.msra.mxu0 0
    %1480 = vmatprep.subr.bf16.mxu0 0
    %1481 = vmatpush1.bf16.msra.mxu0 0
    %1482 = vmatprep.subr.bf16.mxu0 0
    %1483 = vmatpush1.bf16.msra.mxu0 0
    %1484 = vmatprep.subr.bf16.mxu0 0
    %1485 = vmatpush1.bf16.msra.mxu0 0
    %1486 = vmatprep.subr.bf16.mxu0 0
    %1487 = vmatpush1.bf16.msra.mxu0 0
    %1488 = vmatprep.mubr.bf16.mxu0 0
    %1489 = vmatmul.mubr.bf16.gmra.mrb[0].mxu0 %v1454
    %v1490 = vpop.f32.mrb[0].mxu0
    %v1491 = vadd.f32 %v1440, %v1490
    %v1492 = vpop.f32.mrb[0].mxu0
    %v1493 = vpop.f32.mrb[0].mxu0
    %v1494 = vadd.f32 %v1440, %v1493
    %v1495 = vpop.f32.mrb[0].mxu0
    %1496 = vdwg.mxu0
    %v1497 = vpack.c.bf16 %v1494, %v1491
    %v1499 = vunpack.c.l.b16 %v1497
    %v1500 = vunpack.c.h.b16 %v1497
    %v1501 = vpack.c.b16 %v1499, %v1499
    %v1502 = vpack.c.b16 %v1500, %v1500
    %1503 = vrot.lane.b32.xlu0 %v1501, 96
    %v1504 = vpop.permute.xlu0 %1503
    %v1506 = vsel %vm185, %v1501, 0
    %v1509 = vsel %vm185, %v1504, 0
    %1511 = vmatprep.subr.bf16.mxu0 0
    %1512 = vmatpush1.bf16.xpose.msra.mxu0 %v1509
    %1513 = vmatprep.subr.bf16.mxu0 0
    %1514 = vmatpush1.bf16.xpose.msra.mxu0 0
    %1515 = vmatprep.subr.bf16.mxu0 0
    %1516 = vmatpush1.bf16.xpose.msra.mxu0 0
    %1517 = vmatprep.subr.bf16.mxu0 0
    %1518 = vmatpush1.bf16.xpose.msra.mxu0 0
    %1519 = vmatprep.subr.bf16.mxu0 0
    %1520 = vmatpush1.bf16.xpose.msra.mxu0 0
    %1521 = vmatprep.subr.bf16.mxu0 0
    %1522 = vmatpush1.bf16.xpose.msra.mxu0 0
    %1523 = vmatprep.subr.bf16.mxu0 0
    %1524 = vmatpush1.bf16.xpose.msra.mxu0 0
    %1525 = vmatprep.subr.bf16.mxu0 0
    %1526 = vmatpush1.bf16.xpose.msra.mxu0 0
    %1527 = vmatprep.subr.bf16.mxu0 0
    %1528 = vmatpush1.bf16.xpose.msra.mxu0 0
    %1529 = vmatprep.subr.bf16.mxu0 0
    %1530 = vmatpush1.bf16.xpose.msra.mxu0 0
    %1531 = vmatprep.subr.bf16.mxu0 0
    %1532 = vmatpush1.bf16.xpose.msra.mxu0 0
    %1533 = vmatprep.subr.bf16.mxu0 0
    %1534 = vmatpush1.bf16.xpose.msra.mxu0 0
    %1535 = vmatprep.subr.bf16.mxu0 0
    %1536 = vmatpush1.bf16.xpose.msra.mxu0 0
    %1537 = vmatprep.subr.bf16.mxu0 0
    %1538 = vmatpush1.bf16.xpose.msra.mxu0 0
    %1539 = vmatprep.subr.bf16.mxu0 0
    %1540 = vmatpush1.bf16.xpose.msra.mxu0 0
    %1541 = vmatprep.subr.bf16.mxu0 0
    %1542 = vmatpush1.bf16.xpose.msra.mxu0 0
    %1543 = vmatprep.mubr.bf16.mxu0 0
    %1544 = vmatmul.mubr.bf16.gmra.mrb[0].mxu0 %v1506
    %v1545 = vpop.f32.mrb[0].mxu0
    %v1546 = vadd.f32 0.0, %v1545
    %v1547 = vpop.f32.mrb[0].mxu0
    %v1548 = vpop.f32.mrb[0].mxu0
    %v1549 = vpop.f32.mrb[0].mxu0
    %1550 = vdwg.mxu0
    %1551 = vrot.lane.b32.xlu0 %v1502, 96
    %v1552 = vpop.permute.xlu0 %1551
    %v1554 = vsel %vm185, %v1502, 0
    %v1557 = vsel %vm185, %v1552, 0
    %1559 = vmatprep.subr.bf16.mxu0 0
    %1560 = vmatpush1.bf16.xpose.msra.mxu0 %v1557
    %1561 = vmatprep.subr.bf16.mxu0 0
    %1562 = vmatpush1.bf16.xpose.msra.mxu0 0
    %1563 = vmatprep.subr.bf16.mxu0 0
    %1564 = vmatpush1.bf16.xpose.msra.mxu0 0
    %1565 = vmatprep.subr.bf16.mxu0 0
    %1566 = vmatpush1.bf16.xpose.msra.mxu0 0
    %1567 = vmatprep.subr.bf16.mxu0 0
    %1568 = vmatpush1.bf16.xpose.msra.mxu0 0
    %1569 = vmatprep.subr.bf16.mxu0 0
    %1570 = vmatpush1.bf16.xpose.msra.mxu0 0
    %1571 = vmatprep.subr.bf16.mxu0 0
    %1572 = vmatpush1.bf16.xpose.msra.mxu0 0
    %1573 = vmatprep.subr.bf16.mxu0 0
    %1574 = vmatpush1.bf16.xpose.msra.mxu0 0
    %1575 = vmatprep.subr.bf16.mxu0 0
    %1576 = vmatpush1.bf16.xpose.msra.mxu0 0
    %1577 = vmatprep.subr.bf16.mxu0 0
    %1578 = vmatpush1.bf16.xpose.msra.mxu0 0
    %1579 = vmatprep.subr.bf16.mxu0 0
    %1580 = vmatpush1.bf16.xpose.msra.mxu0 0
    %1581 = vmatprep.subr.bf16.mxu0 0
    %1582 = vmatpush1.bf16.xpose.msra.mxu0 0
    %1583 = vmatprep.subr.bf16.mxu0 0
    %1584 = vmatpush1.bf16.xpose.msra.mxu0 0
    %1585 = vmatprep.subr.bf16.mxu0 0
    %1586 = vmatpush1.bf16.xpose.msra.mxu0 0
    %1587 = vmatprep.subr.bf16.mxu0 0
    %1588 = vmatpush1.bf16.xpose.msra.mxu0 0
    %1589 = vmatprep.subr.bf16.mxu0 0
    %1590 = vmatpush1.bf16.xpose.msra.mxu0 0
    %1591 = vmatprep.mubr.bf16.mxu0 0
    %1592 = vmatmul.mubr.bf16.gmra.mrb[0].mxu0 %v1554
    %v1593 = vpop.f32.mrb[0].mxu0
    %v1594 = vadd.f32 0.0, %v1593
    %v1595 = vpop.f32.mrb[0].mxu0
    %v1596 = vpop.f32.mrb[0].mxu0
    %v1597 = vpop.f32.mrb[0].mxu0
    %1598 = vdwg.mxu0
    %1599 = vrot.lane.b32.xlu0 %v1501, 120
    %v1600 = vpop.permute.xlu0 %1599
    %1601 = vrot.lane.b32.xlu0 %v1501, 88
    %v1602 = vpop.permute.xlu0 %1601
    %v1604 = vsel %vm185, %v1600, 0
    %v1607 = vsel %vm185, %v1602, 0
    %1609 = vmatprep.subr.bf16.mxu0 0
    %1610 = vmatpush1.bf16.xpose.msra.mxu0 %v1607
    %1611 = vmatprep.subr.bf16.mxu0 0
    %1612 = vmatpush1.bf16.xpose.msra.mxu0 0
    %1613 = vmatprep.subr.bf16.mxu0 0
    %1614 = vmatpush1.bf16.xpose.msra.mxu0 0
    %1615 = vmatprep.subr.bf16.mxu0 0
    %1616 = vmatpush1.bf16.xpose.msra.mxu0 0
    %1617 = vmatprep.subr.bf16.mxu0 0
    %1618 = vmatpush1.bf16.xpose.msra.mxu0 0
    %1619 = vmatprep.subr.bf16.mxu0 0
    %1620 = vmatpush1.bf16.xpose.msra.mxu0 0
    %1621 = vmatprep.subr.bf16.mxu0 0
    %1622 = vmatpush1.bf16.xpose.msra.mxu0 0
    %1623 = vmatprep.subr.bf16.mxu0 0
    %1624 = vmatpush1.bf16.xpose.msra.mxu0 0
    %1625 = vmatprep.subr.bf16.mxu0 0
    %1626 = vmatpush1.bf16.xpose.msra.mxu0 0
    %1627 = vmatprep.subr.bf16.mxu0 0
    %1628 = vmatpush1.bf16.xpose.msra.mxu0 0
    %1629 = vmatprep.subr.bf16.mxu0 0
    %1630 = vmatpush1.bf16.xpose.msra.mxu0 0
    %1631 = vmatprep.subr.bf16.mxu0 0
    %1632 = vmatpush1.bf16.xpose.msra.mxu0 0
    %1633 = vmatprep.subr.bf16.mxu0 0
    %1634 = vmatpush1.bf16.xpose.msra.mxu0 0
    %1635 = vmatprep.subr.bf16.mxu0 0
    %1636 = vmatpush1.bf16.xpose.msra.mxu0 0
    %1637 = vmatprep.subr.bf16.mxu0 0
    %1638 = vmatpush1.bf16.xpose.msra.mxu0 0
    %1639 = vmatprep.subr.bf16.mxu0 0
    %1640 = vmatpush1.bf16.xpose.msra.mxu0 0
    %1641 = vmatprep.mubr.bf16.mxu0 0
    %1642 = vmatmul.mubr.bf16.gmra.mrb[0].mxu0 %v1604
    %v1643 = vpop.f32.mrb[0].mxu0
    %v1644 = vadd.f32 0.0, %v1643
    %v1645 = vpop.f32.mrb[0].mxu0
    %v1646 = vpop.f32.mrb[0].mxu0
    %v1647 = vpop.f32.mrb[0].mxu0
    %1648 = vdwg.mxu0
    %1649 = vrot.lane.b32.xlu0 %v1502, 120
    %v1650 = vpop.permute.xlu0 %1649
    %1651 = vrot.lane.b32.xlu0 %v1502, 88
    %v1652 = vpop.permute.xlu0 %1651
    %v1654 = vsel %vm185, %v1650, 0
    %v1657 = vsel %vm185, %v1652, 0
    %1659 = vmatprep.subr.bf16.mxu0 0
    %1660 = vmatpush1.bf16.xpose.msra.mxu0 %v1657
    %1661 = vmatprep.subr.bf16.mxu0 0
    %1662 = vmatpush1.bf16.xpose.msra.mxu0 0
    %1663 = vmatprep.subr.bf16.mxu0 0
    %1664 = vmatpush1.bf16.xpose.msra.mxu0 0
    %1665 = vmatprep.subr.bf16.mxu0 0
    %1666 = vmatpush1.bf16.xpose.msra.mxu0 0
    %1667 = vmatprep.subr.bf16.mxu0 0
    %1668 = vmatpush1.bf16.xpose.msra.mxu0 0
    %1669 = vmatprep.subr.bf16.mxu0 0
    %1670 = vmatpush1.bf16.xpose.msra.mxu0 0
    %1671 = vmatprep.subr.bf16.mxu0 0
    %1672 = vmatpush1.bf16.xpose.msra.mxu0 0
    %1673 = vmatprep.subr.bf16.mxu0 0
    %1674 = vmatpush1.bf16.xpose.msra.mxu0 0
    %1675 = vmatprep.subr.bf16.mxu0 0
    %1676 = vmatpush1.bf16.xpose.msra.mxu0 0
    %1677 = vmatprep.subr.bf16.mxu0 0
    %1678 = vmatpush1.bf16.xpose.msra.mxu0 0
    %1679 = vmatprep.subr.bf16.mxu0 0
    %1680 = vmatpush1.bf16.xpose.msra.mxu0 0
    %1681 = vmatprep.subr.bf16.mxu0 0
    %1682 = vmatpush1.bf16.xpose.msra.mxu0 0
    %1683 = vmatprep.subr.bf16.mxu0 0
    %1684 = vmatpush1.bf16.xpose.msra.mxu0 0
    %1685 = vmatprep.subr.bf16.mxu0 0
    %1686 = vmatpush1.bf16.xpose.msra.mxu0 0
    %1687 = vmatprep.subr.bf16.mxu0 0
    %1688 = vmatpush1.bf16.xpose.msra.mxu0 0
    %1689 = vmatprep.subr.bf16.mxu0 0
    %1690 = vmatpush1.bf16.xpose.msra.mxu0 0
    %1691 = vmatprep.mubr.bf16.mxu0 0
    %1692 = vmatmul.mubr.bf16.gmra.mrb[0].mxu0 %v1654
    %v1693 = vpop.f32.mrb[0].mxu0
    %v1694 = vadd.f32 0.0, %v1693
    %v1695 = vpop.f32.mrb[0].mxu0
    %v1696 = vpop.f32.mrb[0].mxu0
    %v1697 = vpop.f32.mrb[0].mxu0
    %1698 = vdwg.mxu0
    %1699 = vrot.lane.b32.xlu0 %v1501, 112
    %v1700 = vpop.permute.xlu0 %1699
    %1701 = vrot.lane.b32.xlu0 %v1501, 80
    %v1702 = vpop.permute.xlu0 %1701
    %v1704 = vsel %vm185, %v1700, 0
    %v1707 = vsel %vm185, %v1702, 0
    %1709 = vmatprep.subr.bf16.mxu0 0
    %1710 = vmatpush1.bf16.xpose.msra.mxu0 %v1707
    %1711 = vmatprep.subr.bf16.mxu0 0
    %1712 = vmatpush1.bf16.xpose.msra.mxu0 0
    %1713 = vmatprep.subr.bf16.mxu0 0
    %1714 = vmatpush1.bf16.xpose.msra.mxu0 0
    %1715 = vmatprep.subr.bf16.mxu0 0
    %1716 = vmatpush1.bf16.xpose.msra.mxu0 0
    %1717 = vmatprep.subr.bf16.mxu0 0
    %1718 = vmatpush1.bf16.xpose.msra.mxu0 0
    %1719 = vmatprep.subr.bf16.mxu0 0
    %1720 = vmatpush1.bf16.xpose.msra.mxu0 0
    %1721 = vmatprep.subr.bf16.mxu0 0
    %1722 = vmatpush1.bf16.xpose.msra.mxu0 0
    %1723 = vmatprep.subr.bf16.mxu0 0
    %1724 = vmatpush1.bf16.xpose.msra.mxu0 0
    %1725 = vmatprep.subr.bf16.mxu0 0
    %1726 = vmatpush1.bf16.xpose.msra.mxu0 0
    %1727 = vmatprep.subr.bf16.mxu0 0
    %1728 = vmatpush1.bf16.xpose.msra.mxu0 0
    %1729 = vmatprep.subr.bf16.mxu0 0
    %1730 = vmatpush1.bf16.xpose.msra.mxu0 0
    %1731 = vmatprep.subr.bf16.mxu0 0
    %1732 = vmatpush1.bf16.xpose.msra.mxu0 0
    %1733 = vmatprep.subr.bf16.mxu0 0
    %1734 = vmatpush1.bf16.xpose.msra.mxu0 0
    %1735 = vmatprep.subr.bf16.mxu0 0
    %1736 = vmatpush1.bf16.xpose.msra.mxu0 0
    %1737 = vmatprep.subr.bf16.mxu0 0
    %1738 = vmatpush1.bf16.xpose.msra.mxu0 0
    %1739 = vmatprep.subr.bf16.mxu0 0
    %1740 = vmatpush1.bf16.xpose.msra.mxu0 0
    %1741 = vmatprep.mubr.bf16.mxu0 0
    %1742 = vmatmul.mubr.bf16.gmra.mrb[0].mxu0 %v1704
    %v1743 = vpop.f32.mrb[0].mxu0
    %v1744 = vadd.f32 0.0, %v1743
    %v1745 = vpop.f32.mrb[0].mxu0
    %v1746 = vpop.f32.mrb[0].mxu0
    %v1747 = vpop.f32.mrb[0].mxu0
    %1748 = vdwg.mxu0
    %1749 = vrot.lane.b32.xlu0 %v1502, 112
    %v1750 = vpop.permute.xlu0 %1749
    %1751 = vrot.lane.b32.xlu0 %v1502, 80
    %v1752 = vpop.permute.xlu0 %1751
    %v1754 = vsel %vm185, %v1750, 0
    %v1757 = vsel %vm185, %v1752, 0
    %1759 = vmatprep.subr.bf16.mxu0 0
    %1760 = vmatpush1.bf16.xpose.msra.mxu0 %v1757
    %1761 = vmatprep.subr.bf16.mxu0 0
    %1762 = vmatpush1.bf16.xpose.msra.mxu0 0
    %1763 = vmatprep.subr.bf16.mxu0 0
    %1764 = vmatpush1.bf16.xpose.msra.mxu0 0
    %1765 = vmatprep.subr.bf16.mxu0 0
    %1766 = vmatpush1.bf16.xpose.msra.mxu0 0
    %1767 = vmatprep.subr.bf16.mxu0 0
    %1768 = vmatpush1.bf16.xpose.msra.mxu0 0
    %1769 = vmatprep.subr.bf16.mxu0 0
    %1770 = vmatpush1.bf16.xpose.msra.mxu0 0
    %1771 = vmatprep.subr.bf16.mxu0 0
    %1772 = vmatpush1.bf16.xpose.msra.mxu0 0
    %1773 = vmatprep.subr.bf16.mxu0 0
    %1774 = vmatpush1.bf16.xpose.msra.mxu0 0
    %1775 = vmatprep.subr.bf16.mxu0 0
    %1776 = vmatpush1.bf16.xpose.msra.mxu0 0
    %1777 = vmatprep.subr.bf16.mxu0 0
    %1778 = vmatpush1.bf16.xpose.msra.mxu0 0
    %1779 = vmatprep.subr.bf16.mxu0 0
    %1780 = vmatpush1.bf16.xpose.msra.mxu0 0
    %1781 = vmatprep.subr.bf16.mxu0 0
    %1782 = vmatpush1.bf16.xpose.msra.mxu0 0
    %1783 = vmatprep.subr.bf16.mxu0 0
    %1784 = vmatpush1.bf16.xpose.msra.mxu0 0
    %1785 = vmatprep.subr.bf16.mxu0 0
    %1786 = vmatpush1.bf16.xpose.msra.mxu0 0
    %1787 = vmatprep.subr.bf16.mxu0 0
    %1788 = vmatpush1.bf16.xpose.msra.mxu0 0
    %1789 = vmatprep.subr.bf16.mxu0 0
    %1790 = vmatpush1.bf16.xpose.msra.mxu0 0
    %1791 = vmatprep.mubr.bf16.mxu0 0
    %1792 = vmatmul.mubr.bf16.gmra.mrb[0].mxu0 %v1754
    %v1793 = vpop.f32.mrb[0].mxu0
    %v1794 = vadd.f32 0.0, %v1793
    %v1795 = vpop.f32.mrb[0].mxu0
    %v1796 = vpop.f32.mrb[0].mxu0
    %v1797 = vpop.f32.mrb[0].mxu0
    %1798 = vdwg.mxu0
    %1799 = vrot.lane.b32.xlu0 %v1501, 104
    %v1800 = vpop.permute.xlu0 %1799
    %1801 = vrot.lane.b32.xlu0 %v1501, 72
    %v1802 = vpop.permute.xlu0 %1801
    %v1804 = vsel %vm185, %v1800, 0
    %v1807 = vsel %vm185, %v1802, 0
    %1809 = vmatprep.subr.bf16.mxu0 0
    %1810 = vmatpush1.bf16.xpose.msra.mxu0 %v1807
    %1811 = vmatprep.subr.bf16.mxu0 0
    %1812 = vmatpush1.bf16.xpose.msra.mxu0 0
    %1813 = vmatprep.subr.bf16.mxu0 0
    %1814 = vmatpush1.bf16.xpose.msra.mxu0 0
    %1815 = vmatprep.subr.bf16.mxu0 0
    %1816 = vmatpush1.bf16.xpose.msra.mxu0 0
    %1817 = vmatprep.subr.bf16.mxu0 0
    %1818 = vmatpush1.bf16.xpose.msra.mxu0 0
    %1819 = vmatprep.subr.bf16.mxu0 0
    %1820 = vmatpush1.bf16.xpose.msra.mxu0 0
    %1821 = vmatprep.subr.bf16.mxu0 0
    %1822 = vmatpush1.bf16.xpose.msra.mxu0 0
    %1823 = vmatprep.subr.bf16.mxu0 0
    %1824 = vmatpush1.bf16.xpose.msra.mxu0 0
    %1825 = vmatprep.subr.bf16.mxu0 0
    %1826 = vmatpush1.bf16.xpose.msra.mxu0 0
    %1827 = vmatprep.subr.bf16.mxu0 0
    %1828 = vmatpush1.bf16.xpose.msra.mxu0 0
    %1829 = vmatprep.subr.bf16.mxu0 0
    %1830 = vmatpush1.bf16.xpose.msra.mxu0 0
    %1831 = vmatprep.subr.bf16.mxu0 0
    %1832 = vmatpush1.bf16.xpose.msra.mxu0 0
    %1833 = vmatprep.subr.bf16.mxu0 0
    %1834 = vmatpush1.bf16.xpose.msra.mxu0 0
    %1835 = vmatprep.subr.bf16.mxu0 0
    %1836 = vmatpush1.bf16.xpose.msra.mxu0 0
    %1837 = vmatprep.subr.bf16.mxu0 0
    %1838 = vmatpush1.bf16.xpose.msra.mxu0 0
    %1839 = vmatprep.subr.bf16.mxu0 0
    %1840 = vmatpush1.bf16.xpose.msra.mxu0 0
    %1841 = vmatprep.mubr.bf16.mxu0 0
    %1842 = vmatmul.mubr.bf16.gmra.mrb[0].mxu0 %v1804
    %v1843 = vpop.f32.mrb[0].mxu0
    %v1844 = vadd.f32 0.0, %v1843
    %v1845 = vpop.f32.mrb[0].mxu0
    %v1846 = vpop.f32.mrb[0].mxu0
    %v1847 = vpop.f32.mrb[0].mxu0
    %1848 = vdwg.mxu0
    %1849 = vrot.lane.b32.xlu0 %v1502, 104
    %v1850 = vpop.permute.xlu0 %1849
    %1851 = vrot.lane.b32.xlu0 %v1502, 72
    %v1852 = vpop.permute.xlu0 %1851
    %v1854 = vsel %vm185, %v1850, 0
    %v1857 = vsel %vm185, %v1852, 0
    %1859 = vmatprep.subr.bf16.mxu0 0
    %1860 = vmatpush1.bf16.xpose.msra.mxu0 %v1857
    %1861 = vmatprep.subr.bf16.mxu0 0
    %1862 = vmatpush1.bf16.xpose.msra.mxu0 0
    %1863 = vmatprep.subr.bf16.mxu0 0
    %1864 = vmatpush1.bf16.xpose.msra.mxu0 0
    %1865 = vmatprep.subr.bf16.mxu0 0
    %1866 = vmatpush1.bf16.xpose.msra.mxu0 0
    %1867 = vmatprep.subr.bf16.mxu0 0
    %1868 = vmatpush1.bf16.xpose.msra.mxu0 0
    %1869 = vmatprep.subr.bf16.mxu0 0
    %1870 = vmatpush1.bf16.xpose.msra.mxu0 0
    %1871 = vmatprep.subr.bf16.mxu0 0
    %1872 = vmatpush1.bf16.xpose.msra.mxu0 0
    %1873 = vmatprep.subr.bf16.mxu0 0
    %1874 = vmatpush1.bf16.xpose.msra.mxu0 0
    %1875 = vmatprep.subr.bf16.mxu0 0
    %1876 = vmatpush1.bf16.xpose.msra.mxu0 0
    %1877 = vmatprep.subr.bf16.mxu0 0
    %1878 = vmatpush1.bf16.xpose.msra.mxu0 0
    %1879 = vmatprep.subr.bf16.mxu0 0
    %1880 = vmatpush1.bf16.xpose.msra.mxu0 0
    %1881 = vmatprep.subr.bf16.mxu0 0
    %1882 = vmatpush1.bf16.xpose.msra.mxu0 0
    %1883 = vmatprep.subr.bf16.mxu0 0
    %1884 = vmatpush1.bf16.xpose.msra.mxu0 0
    %1885 = vmatprep.subr.bf16.mxu0 0
    %1886 = vmatpush1.bf16.xpose.msra.mxu0 0
    %1887 = vmatprep.subr.bf16.mxu0 0
    %1888 = vmatpush1.bf16.xpose.msra.mxu0 0
    %1889 = vmatprep.subr.bf16.mxu0 0
    %1890 = vmatpush1.bf16.xpose.msra.mxu0 0
    %1891 = vmatprep.mubr.bf16.mxu0 0
    %1892 = vmatmul.mubr.bf16.gmra.mrb[0].mxu0 %v1854
    %v1893 = vpop.f32.mrb[0].mxu0
    %v1894 = vadd.f32 0.0, %v1893
    %v1895 = vpop.f32.mrb[0].mxu0
    %v1896 = vpop.f32.mrb[0].mxu0
    %v1897 = vpop.f32.mrb[0].mxu0
    %1898 = vdwg.mxu0
    %v1899 = vmul.f32 %v1546, 0.35355338
    %v1900 = vmul.f32 %v1594, 0.35355338
    %v1901 = vmul.f32 %v1644, 0.35355338
    %v1902 = vmul.f32 %v1694, 0.35355338
    %v1903 = vmul.f32 %v1744, 0.35355338
    %v1904 = vmul.f32 %v1794, 0.35355338
    %v1905 = vmul.f32 %v1844, 0.35355338
    %v1906 = vmul.f32 %v1894, 0.35355338
    %v1907 = vadd.f32 %v1899, %v591
    %v1908 = vadd.f32 %v1900, %v595
    %v1909 = vadd.f32 %v1901, %v591
    %v1910 = vadd.f32 %v1902, %v595
    %v1911 = vadd.f32 %v1903, %v591
    %v1912 = vadd.f32 %v1904, %v595
    %v1913 = vadd.f32 %v1905, %v591
    %v1914 = vadd.f32 %v1906, %v595
    %v1915 = vsel %vm185, %v1907, -inf
    %1916 = vmax.xlane.f32.xlu0 %v1915
    %v1917 = vpop.xlane.xlu0 %1916
    %v1918 = vsel %vm185, %v1908, -inf
    %1919 = vmax.xlane.f32.xlu0 %v1918
    %v1920 = vpop.xlane.xlu0 %1919
    %v1921 = vsel %vm185, %v1909, -inf
    %1922 = vmax.xlane.f32.xlu0 %v1921
    %v1923 = vpop.xlane.xlu0 %1922
    %v1924 = vsel %vm185, %v1910, -inf
    %1925 = vmax.xlane.f32.xlu0 %v1924
    %v1926 = vpop.xlane.xlu0 %1925
    %v1927 = vsel %vm185, %v1911, -inf
    %1928 = vmax.xlane.f32.xlu0 %v1927
    %v1929 = vpop.xlane.xlu0 %1928
    %v1930 = vsel %vm185, %v1912, -inf
    %1931 = vmax.xlane.f32.xlu0 %v1930
    %v1932 = vpop.xlane.xlu0 %1931
    %v1933 = vsel %vm185, %v1913, -inf
    %1934 = vmax.xlane.f32.xlu0 %v1933
    %v1935 = vpop.xlane.xlu0 %1934
    %v1936 = vsel %vm185, %v1914, -inf
    %1937 = vmax.xlane.f32.xlu0 %v1936
    %v1938 = vpop.xlane.xlu0 %1937
    %v1939 = vsub.f32 %v1907, %v1917
    %v1940 = vsub.f32 %v1908, %v1920
    %v1941 = vsub.f32 %v1909, %v1923
    %v1942 = vsub.f32 %v1910, %v1926
    %v1943 = vsub.f32 %v1911, %v1929
    %v1944 = vsub.f32 %v1912, %v1932
    %v1945 = vsub.f32 %v1913, %v1935
    %v1946 = vsub.f32 %v1914, %v1938
    %v1947 = vmul.f32 %v1939, 1.442695
    %v1948 = vpow.pop %v1947
    %v1949 = vmul.f32 %v1940, 1.442695
    %v1950 = vpow.pop %v1949
    %v1951 = vmul.f32 %v1941, 1.442695
    %v1952 = vpow.pop %v1951
    %v1953 = vmul.f32 %v1942, 1.442695
    %v1954 = vpow.pop %v1953
    %v1955 = vmul.f32 %v1943, 1.442695
    %v1956 = vpow.pop %v1955
    %v1957 = vmul.f32 %v1944, 1.442695
    %v1958 = vpow.pop %v1957
    %v1959 = vmul.f32 %v1945, 1.442695
    %v1960 = vpow.pop %v1959
    %v1961 = vmul.f32 %v1946, 1.442695
    %v1962 = vpow.pop %v1961
    %v1963 = vsel %vm185, %v1948, 0.0
    %1964 = vadd.xlane.f32.xlu0 %v1963
    %v1965 = vpop.xlane.xlu0 %1964
    %v1966 = vsel %vm185, %v1950, 0.0
    %1967 = vadd.xlane.f32.xlu0 %v1966
    %v1968 = vpop.xlane.xlu0 %1967
    %v1969 = vsel %vm185, %v1952, 0.0
    %1970 = vadd.xlane.f32.xlu0 %v1969
    %v1971 = vpop.xlane.xlu0 %1970
    %v1972 = vsel %vm185, %v1954, 0.0
    %1973 = vadd.xlane.f32.xlu0 %v1972
    %v1974 = vpop.xlane.xlu0 %1973
    %v1975 = vsel %vm185, %v1956, 0.0
    %1976 = vadd.xlane.f32.xlu0 %v1975
    %v1977 = vpop.xlane.xlu0 %1976
    %v1978 = vsel %vm185, %v1958, 0.0
    %1979 = vadd.xlane.f32.xlu0 %v1978
    %v1980 = vpop.xlane.xlu0 %1979
    %v1981 = vsel %vm185, %v1960, 0.0
    %1982 = vadd.xlane.f32.xlu0 %v1981
    %v1983 = vpop.xlane.xlu0 %1982
    %v1984 = vsel %vm185, %v1962, 0.0
    %1985 = vadd.xlane.f32.xlu0 %v1984
    %v1986 = vpop.xlane.xlu0 %1985
    %v1987 = vrcp.pop %v1965
    %v1988 = vrcp.pop %v1968
    %v1989 = vrcp.pop %v1971
    %v1990 = vrcp.pop %v1974
    %v1991 = vrcp.pop %v1977
    %v1992 = vrcp.pop %v1980
    %v1993 = vrcp.pop %v1983
    %v1994 = vrcp.pop %v1986
    %v1995 = vmul.f32 %v1948, %v1987
    %v1996 = vmul.f32 %v1950, %v1988
    %v1997 = vmul.f32 %v1952, %v1989
    %v1998 = vmul.f32 %v1954, %v1990
    %v1999 = vmul.f32 %v1956, %v1991
    %v2000 = vmul.f32 %v1958, %v1992
    %v2001 = vmul.f32 %v1960, %v1993
    %v2002 = vmul.f32 %v1962, %v1994
    %v2003 = vpack.c.bf16 %v1995, %v1995
    %v2004 = vpack.c.bf16 %v1996, %v1996
    %v2005 = vpack.c.bf16 %v1997, %v1997
    %v2006 = vpack.c.bf16 %v1998, %v1998
    %v2007 = vpack.c.bf16 %v1999, %v1999
    %v2008 = vpack.c.bf16 %v2000, %v2000
    %v2009 = vpack.c.bf16 %v2001, %v2001
    %v2010 = vpack.c.bf16 %v2002, %v2002
    %2011 = vrot.lane.b32.xlu0 %v1501, 64
    %v2012 = vpop.permute.xlu0 %2011
    %v2014 = vsel %vm185, %v2003, 0
    %v2017 = vsel %vm707, %v2012, 0
    %2019 = vmatprep.subr.bf16.mxu0 0
    %2020 = vmatpush1.bf16.msra.mxu0 %v2017
    %2021 = vmatprep.subr.bf16.mxu0 0
    %2022 = vmatpush1.bf16.msra.mxu0 0
    %2023 = vmatprep.subr.bf16.mxu0 0
    %2024 = vmatpush1.bf16.msra.mxu0 0
    %2025 = vmatprep.subr.bf16.mxu0 0
    %2026 = vmatpush1.bf16.msra.mxu0 0
    %2027 = vmatprep.subr.bf16.mxu0 0
    %2028 = vmatpush1.bf16.msra.mxu0 0
    %2029 = vmatprep.subr.bf16.mxu0 0
    %2030 = vmatpush1.bf16.msra.mxu0 0
    %2031 = vmatprep.subr.bf16.mxu0 0
    %2032 = vmatpush1.bf16.msra.mxu0 0
    %2033 = vmatprep.subr.bf16.mxu0 0
    %2034 = vmatpush1.bf16.msra.mxu0 0
    %2035 = vmatprep.subr.bf16.mxu0 0
    %2036 = vmatpush1.bf16.msra.mxu0 0
    %2037 = vmatprep.subr.bf16.mxu0 0
    %2038 = vmatpush1.bf16.msra.mxu0 0
    %2039 = vmatprep.subr.bf16.mxu0 0
    %2040 = vmatpush1.bf16.msra.mxu0 0
    %2041 = vmatprep.subr.bf16.mxu0 0
    %2042 = vmatpush1.bf16.msra.mxu0 0
    %2043 = vmatprep.subr.bf16.mxu0 0
    %2044 = vmatpush1.bf16.msra.mxu0 0
    %2045 = vmatprep.subr.bf16.mxu0 0
    %2046 = vmatpush1.bf16.msra.mxu0 0
    %2047 = vmatprep.subr.bf16.mxu0 0
    %2048 = vmatpush1.bf16.msra.mxu0 0
    %2049 = vmatprep.subr.bf16.mxu0 0
    %2050 = vmatpush1.bf16.msra.mxu0 0
    %2051 = vmatprep.mubr.bf16.mxu0 0
    %2052 = vmatmul.mubr.bf16.gmra.mrb[0].mxu0 %v2014
    %v2053 = vpop.f32.mrb[0].mxu0
    %v2054 = vadd.f32 0.0, %v2053
    %v2055 = vpop.f32.mrb[0].mxu0
    %v2056 = vpop.f32.mrb[0].mxu0
    %v2057 = vpop.f32.mrb[0].mxu0
    %2058 = vdwg.mxu0
    %2059 = vrot.lane.b32.xlu0 %v1502, 64
    %v2060 = vpop.permute.xlu0 %2059
    %v2062 = vsel %vm185, %v2004, 0
    %v2065 = vsel %vm707, %v2060, 0
    %2067 = vmatprep.subr.bf16.mxu0 0
    %2068 = vmatpush1.bf16.msra.mxu0 %v2065
    %2069 = vmatprep.subr.bf16.mxu0 0
    %2070 = vmatpush1.bf16.msra.mxu0 0
    %2071 = vmatprep.subr.bf16.mxu0 0
    %2072 = vmatpush1.bf16.msra.mxu0 0
    %2073 = vmatprep.subr.bf16.mxu0 0
    %2074 = vmatpush1.bf16.msra.mxu0 0
    %2075 = vmatprep.subr.bf16.mxu0 0
    %2076 = vmatpush1.bf16.msra.mxu0 0
    %2077 = vmatprep.subr.bf16.mxu0 0
    %2078 = vmatpush1.bf16.msra.mxu0 0
    %2079 = vmatprep.subr.bf16.mxu0 0
    %2080 = vmatpush1.bf16.msra.mxu0 0
    %2081 = vmatprep.subr.bf16.mxu0 0
    %2082 = vmatpush1.bf16.msra.mxu0 0
    %2083 = vmatprep.subr.bf16.mxu0 0
    %2084 = vmatpush1.bf16.msra.mxu0 0
    %2085 = vmatprep.subr.bf16.mxu0 0
    %2086 = vmatpush1.bf16.msra.mxu0 0
    %2087 = vmatprep.subr.bf16.mxu0 0
    %2088 = vmatpush1.bf16.msra.mxu0 0
    %2089 = vmatprep.subr.bf16.mxu0 0
    %2090 = vmatpush1.bf16.msra.mxu0 0
    %2091 = vmatprep.subr.bf16.mxu0 0
    %2092 = vmatpush1.bf16.msra.mxu0 0
    %2093 = vmatprep.subr.bf16.mxu0 0
    %2094 = vmatpush1.bf16.msra.mxu0 0
    %2095 = vmatprep.subr.bf16.mxu0 0
    %2096 = vmatpush1.bf16.msra.mxu0 0
    %2097 = vmatprep.subr.bf16.mxu0 0
    %2098 = vmatpush1.bf16.msra.mxu0 0
    %2099 = vmatprep.mubr.bf16.mxu0 0
    %2100 = vmatmul.mubr.bf16.gmra.mrb[0].mxu0 %v2062
    %v2101 = vpop.f32.mrb[0].mxu0
    %v2102 = vadd.f32 0.0, %v2101
    %v2103 = vpop.f32.mrb[0].mxu0
    %v2104 = vpop.f32.mrb[0].mxu0
    %v2105 = vpop.f32.mrb[0].mxu0
    %2106 = vdwg.mxu0
    %2107 = vrot.lane.b32.xlu0 %v1501, 56
    %v2108 = vpop.permute.xlu0 %2107
    %v2110 = vsel %vm185, %v2005, 0
    %v2113 = vsel %vm707, %v2108, 0
    %2115 = vmatprep.subr.bf16.mxu0 0
    %2116 = vmatpush1.bf16.msra.mxu0 %v2113
    %2117 = vmatprep.subr.bf16.mxu0 0
    %2118 = vmatpush1.bf16.msra.mxu0 0
    %2119 = vmatprep.subr.bf16.mxu0 0
    %2120 = vmatpush1.bf16.msra.mxu0 0
    %2121 = vmatprep.subr.bf16.mxu0 0
    %2122 = vmatpush1.bf16.msra.mxu0 0
    %2123 = vmatprep.subr.bf16.mxu0 0
    %2124 = vmatpush1.bf16.msra.mxu0 0
    %2125 = vmatprep.subr.bf16.mxu0 0
    %2126 = vmatpush1.bf16.msra.mxu0 0
    %2127 = vmatprep.subr.bf16.mxu0 0
    %2128 = vmatpush1.bf16.msra.mxu0 0
    %2129 = vmatprep.subr.bf16.mxu0 0
    %2130 = vmatpush1.bf16.msra.mxu0 0
    %2131 = vmatprep.subr.bf16.mxu0 0
    %2132 = vmatpush1.bf16.msra.mxu0 0
    %2133 = vmatprep.subr.bf16.mxu0 0
    %2134 = vmatpush1.bf16.msra.mxu0 0
    %2135 = vmatprep.subr.bf16.mxu0 0
    %2136 = vmatpush1.bf16.msra.mxu0 0
    %2137 = vmatprep.subr.bf16.mxu0 0
    %2138 = vmatpush1.bf16.msra.mxu0 0
    %2139 = vmatprep.subr.bf16.mxu0 0
    %2140 = vmatpush1.bf16.msra.mxu0 0
    %2141 = vmatprep.subr.bf16.mxu0 0
    %2142 = vmatpush1.bf16.msra.mxu0 0
    %2143 = vmatprep.subr.bf16.mxu0 0
    %2144 = vmatpush1.bf16.msra.mxu0 0
    %2145 = vmatprep.subr.bf16.mxu0 0
    %2146 = vmatpush1.bf16.msra.mxu0 0
    %2147 = vmatprep.mubr.bf16.mxu0 0
    %2148 = vmatmul.mubr.bf16.gmra.mrb[0].mxu0 %v2110
    %v2149 = vpop.f32.mrb[0].mxu0
    %v2150 = vadd.f32 0.0, %v2149
    %v2151 = vpop.f32.mrb[0].mxu0
    %v2152 = vpop.f32.mrb[0].mxu0
    %v2153 = vpop.f32.mrb[0].mxu0
    %2154 = vdwg.mxu0
    %2155 = vrot.lane.b32.xlu0 %v1502, 56
    %v2156 = vpop.permute.xlu0 %2155
    %v2158 = vsel %vm185, %v2006, 0
    %v2161 = vsel %vm707, %v2156, 0
    %2163 = vmatprep.subr.bf16.mxu0 0
    %2164 = vmatpush1.bf16.msra.mxu0 %v2161
    %2165 = vmatprep.subr.bf16.mxu0 0
    %2166 = vmatpush1.bf16.msra.mxu0 0
    %2167 = vmatprep.subr.bf16.mxu0 0
    %2168 = vmatpush1.bf16.msra.mxu0 0
    %2169 = vmatprep.subr.bf16.mxu0 0
    %2170 = vmatpush1.bf16.msra.mxu0 0
    %2171 = vmatprep.subr.bf16.mxu0 0
    %2172 = vmatpush1.bf16.msra.mxu0 0
    %2173 = vmatprep.subr.bf16.mxu0 0
    %2174 = vmatpush1.bf16.msra.mxu0 0
    %2175 = vmatprep.subr.bf16.mxu0 0
    %2176 = vmatpush1.bf16.msra.mxu0 0
    %2177 = vmatprep.subr.bf16.mxu0 0
    %2178 = vmatpush1.bf16.msra.mxu0 0
    %2179 = vmatprep.subr.bf16.mxu0 0
    %2180 = vmatpush1.bf16.msra.mxu0 0
    %2181 = vmatprep.subr.bf16.mxu0 0
    %2182 = vmatpush1.bf16.msra.mxu0 0
    %2183 = vmatprep.subr.bf16.mxu0 0
    %2184 = vmatpush1.bf16.msra.mxu0 0
    %2185 = vmatprep.subr.bf16.mxu0 0
    %2186 = vmatpush1.bf16.msra.mxu0 0
    %2187 = vmatprep.subr.bf16.mxu0 0
    %2188 = vmatpush1.bf16.msra.mxu0 0
    %2189 = vmatprep.subr.bf16.mxu0 0
    %2190 = vmatpush1.bf16.msra.mxu0 0
    %2191 = vmatprep.subr.bf16.mxu0 0
    %2192 = vmatpush1.bf16.msra.mxu0 0
    %2193 = vmatprep.subr.bf16.mxu0 0
    %2194 = vmatpush1.bf16.msra.mxu0 0
    %2195 = vmatprep.mubr.bf16.mxu0 0
    %2196 = vmatmul.mubr.bf16.gmra.mrb[0].mxu0 %v2158
    %v2197 = vpop.f32.mrb[0].mxu0
    %v2198 = vadd.f32 0.0, %v2197
    %v2199 = vpop.f32.mrb[0].mxu0
    %v2200 = vpop.f32.mrb[0].mxu0
    %v2201 = vpop.f32.mrb[0].mxu0
    %2202 = vdwg.mxu0
    %2203 = vrot.lane.b32.xlu0 %v1501, 48
    %v2204 = vpop.permute.xlu0 %2203
    %v2206 = vsel %vm185, %v2007, 0
    %v2209 = vsel %vm707, %v2204, 0
    %2211 = vmatprep.subr.bf16.mxu0 0
    %2212 = vmatpush1.bf16.msra.mxu0 %v2209
    %2213 = vmatprep.subr.bf16.mxu0 0
    %2214 = vmatpush1.bf16.msra.mxu0 0
    %2215 = vmatprep.subr.bf16.mxu0 0
    %2216 = vmatpush1.bf16.msra.mxu0 0
    %2217 = vmatprep.subr.bf16.mxu0 0
    %2218 = vmatpush1.bf16.msra.mxu0 0
    %2219 = vmatprep.subr.bf16.mxu0 0
    %2220 = vmatpush1.bf16.msra.mxu0 0
    %2221 = vmatprep.subr.bf16.mxu0 0
    %2222 = vmatpush1.bf16.msra.mxu0 0
    %2223 = vmatprep.subr.bf16.mxu0 0
    %2224 = vmatpush1.bf16.msra.mxu0 0
    %2225 = vmatprep.subr.bf16.mxu0 0
    %2226 = vmatpush1.bf16.msra.mxu0 0
    %2227 = vmatprep.subr.bf16.mxu0 0
    %2228 = vmatpush1.bf16.msra.mxu0 0
    %2229 = vmatprep.subr.bf16.mxu0 0
    %2230 = vmatpush1.bf16.msra.mxu0 0
    %2231 = vmatprep.subr.bf16.mxu0 0
    %2232 = vmatpush1.bf16.msra.mxu0 0
    %2233 = vmatprep.subr.bf16.mxu0 0
    %2234 = vmatpush1.bf16.msra.mxu0 0
    %2235 = vmatprep.subr.bf16.mxu0 0
    %2236 = vmatpush1.bf16.msra.mxu0 0
    %2237 = vmatprep.subr.bf16.mxu0 0
    %2238 = vmatpush1.bf16.msra.mxu0 0
    %2239 = vmatprep.subr.bf16.mxu0 0
    %2240 = vmatpush1.bf16.msra.mxu0 0
    %2241 = vmatprep.subr.bf16.mxu0 0
    %2242 = vmatpush1.bf16.msra.mxu0 0
    %2243 = vmatprep.mubr.bf16.mxu0 0
    %2244 = vmatmul.mubr.bf16.gmra.mrb[0].mxu0 %v2206
    %v2245 = vpop.f32.mrb[0].mxu0
    %v2246 = vadd.f32 0.0, %v2245
    %v2247 = vpop.f32.mrb[0].mxu0
    %v2248 = vpop.f32.mrb[0].mxu0
    %v2249 = vpop.f32.mrb[0].mxu0
    %2250 = vdwg.mxu0
    %2251 = vrot.lane.b32.xlu0 %v1502, 48
    %v2252 = vpop.permute.xlu0 %2251
    %v2254 = vsel %vm185, %v2008, 0
    %v2257 = vsel %vm707, %v2252, 0
    %2259 = vmatprep.subr.bf16.mxu0 0
    %2260 = vmatpush1.bf16.msra.mxu0 %v2257
    %2261 = vmatprep.subr.bf16.mxu0 0
    %2262 = vmatpush1.bf16.msra.mxu0 0
    %2263 = vmatprep.subr.bf16.mxu0 0
    %2264 = vmatpush1.bf16.msra.mxu0 0
    %2265 = vmatprep.subr.bf16.mxu0 0
    %2266 = vmatpush1.bf16.msra.mxu0 0
    %2267 = vmatprep.subr.bf16.mxu0 0
    %2268 = vmatpush1.bf16.msra.mxu0 0
    %2269 = vmatprep.subr.bf16.mxu0 0
    %2270 = vmatpush1.bf16.msra.mxu0 0
    %2271 = vmatprep.subr.bf16.mxu0 0
    %2272 = vmatpush1.bf16.msra.mxu0 0
    %2273 = vmatprep.subr.bf16.mxu0 0
    %2274 = vmatpush1.bf16.msra.mxu0 0
    %2275 = vmatprep.subr.bf16.mxu0 0
    %2276 = vmatpush1.bf16.msra.mxu0 0
    %2277 = vmatprep.subr.bf16.mxu0 0
    %2278 = vmatpush1.bf16.msra.mxu0 0
    %2279 = vmatprep.subr.bf16.mxu0 0
    %2280 = vmatpush1.bf16.msra.mxu0 0
    %2281 = vmatprep.subr.bf16.mxu0 0
    %2282 = vmatpush1.bf16.msra.mxu0 0
    %2283 = vmatprep.subr.bf16.mxu0 0
    %2284 = vmatpush1.bf16.msra.mxu0 0
    %2285 = vmatprep.subr.bf16.mxu0 0
    %2286 = vmatpush1.bf16.msra.mxu0 0
    %2287 = vmatprep.subr.bf16.mxu0 0
    %2288 = vmatpush1.bf16.msra.mxu0 0
    %2289 = vmatprep.subr.bf16.mxu0 0
    %2290 = vmatpush1.bf16.msra.mxu0 0
    %2291 = vmatprep.mubr.bf16.mxu0 0
    %2292 = vmatmul.mubr.bf16.gmra.mrb[0].mxu0 %v2254
    %v2293 = vpop.f32.mrb[0].mxu0
    %v2294 = vadd.f32 0.0, %v2293
    %v2295 = vpop.f32.mrb[0].mxu0
    %v2296 = vpop.f32.mrb[0].mxu0
    %v2297 = vpop.f32.mrb[0].mxu0
    %2298 = vdwg.mxu0
    %2299 = vrot.lane.b32.xlu0 %v1501, 40
    %v2300 = vpop.permute.xlu0 %2299
    %v2302 = vsel %vm185, %v2009, 0
    %v2305 = vsel %vm707, %v2300, 0
    %2307 = vmatprep.subr.bf16.mxu0 0
    %2308 = vmatpush1.bf16.msra.mxu0 %v2305
    %2309 = vmatprep.subr.bf16.mxu0 0
    %2310 = vmatpush1.bf16.msra.mxu0 0
    %2311 = vmatprep.subr.bf16.mxu0 0
    %2312 = vmatpush1.bf16.msra.mxu0 0
    %2313 = vmatprep.subr.bf16.mxu0 0
    %2314 = vmatpush1.bf16.msra.mxu0 0
    %2315 = vmatprep.subr.bf16.mxu0 0
    %2316 = vmatpush1.bf16.msra.mxu0 0
    %2317 = vmatprep.subr.bf16.mxu0 0
    %2318 = vmatpush1.bf16.msra.mxu0 0
    %2319 = vmatprep.subr.bf16.mxu0 0
    %2320 = vmatpush1.bf16.msra.mxu0 0
    %2321 = vmatprep.subr.bf16.mxu0 0
    %2322 = vmatpush1.bf16.msra.mxu0 0
    %2323 = vmatprep.subr.bf16.mxu0 0
    %2324 = vmatpush1.bf16.msra.mxu0 0
    %2325 = vmatprep.subr.bf16.mxu0 0
    %2326 = vmatpush1.bf16.msra.mxu0 0
    %2327 = vmatprep.subr.bf16.mxu0 0
    %2328 = vmatpush1.bf16.msra.mxu0 0
    %2329 = vmatprep.subr.bf16.mxu0 0
    %2330 = vmatpush1.bf16.msra.mxu0 0
    %2331 = vmatprep.subr.bf16.mxu0 0
    %2332 = vmatpush1.bf16.msra.mxu0 0
    %2333 = vmatprep.subr.bf16.mxu0 0
    %2334 = vmatpush1.bf16.msra.mxu0 0
    %2335 = vmatprep.subr.bf16.mxu0 0
    %2336 = vmatpush1.bf16.msra.mxu0 0
    %2337 = vmatprep.subr.bf16.mxu0 0
    %2338 = vmatpush1.bf16.msra.mxu0 0
    %2339 = vmatprep.mubr.bf16.mxu0 0
    %2340 = vmatmul.mubr.bf16.gmra.mrb[0].mxu0 %v2302
    %v2341 = vpop.f32.mrb[0].mxu0
    %v2342 = vadd.f32 0.0, %v2341
    %v2343 = vpop.f32.mrb[0].mxu0
    %v2344 = vpop.f32.mrb[0].mxu0
    %v2345 = vpop.f32.mrb[0].mxu0
    %2346 = vdwg.mxu0
    %2347 = vrot.lane.b32.xlu0 %v1502, 40
    %v2348 = vpop.permute.xlu0 %2347
    %v2350 = vsel %vm185, %v2010, 0
    %v2353 = vsel %vm707, %v2348, 0
    %2355 = vmatprep.subr.bf16.mxu0 0
    %2356 = vmatpush1.bf16.msra.mxu0 %v2353
    %2357 = vmatprep.subr.bf16.mxu0 0
    %2358 = vmatpush1.bf16.msra.mxu0 0
    %2359 = vmatprep.subr.bf16.mxu0 0
    %2360 = vmatpush1.bf16.msra.mxu0 0
    %2361 = vmatprep.subr.bf16.mxu0 0
    %2362 = vmatpush1.bf16.msra.mxu0 0
    %2363 = vmatprep.subr.bf16.mxu0 0
    %2364 = vmatpush1.bf16.msra.mxu0 0
    %2365 = vmatprep.subr.bf16.mxu0 0
    %2366 = vmatpush1.bf16.msra.mxu0 0
    %2367 = vmatprep.subr.bf16.mxu0 0
    %2368 = vmatpush1.bf16.msra.mxu0 0
    %2369 = vmatprep.subr.bf16.mxu0 0
    %2370 = vmatpush1.bf16.msra.mxu0 0
    %2371 = vmatprep.subr.bf16.mxu0 0
    %2372 = vmatpush1.bf16.msra.mxu0 0
    %2373 = vmatprep.subr.bf16.mxu0 0
    %2374 = vmatpush1.bf16.msra.mxu0 0
    %2375 = vmatprep.subr.bf16.mxu0 0
    %2376 = vmatpush1.bf16.msra.mxu0 0
    %2377 = vmatprep.subr.bf16.mxu0 0
    %2378 = vmatpush1.bf16.msra.mxu0 0
    %2379 = vmatprep.subr.bf16.mxu0 0
    %2380 = vmatpush1.bf16.msra.mxu0 0
    %2381 = vmatprep.subr.bf16.mxu0 0
    %2382 = vmatpush1.bf16.msra.mxu0 0
    %2383 = vmatprep.subr.bf16.mxu0 0
    %2384 = vmatpush1.bf16.msra.mxu0 0
    %2385 = vmatprep.subr.bf16.mxu0 0
    %2386 = vmatpush1.bf16.msra.mxu0 0
    %2387 = vmatprep.mubr.bf16.mxu0 0
    %2388 = vmatmul.mubr.bf16.gmra.mrb[0].mxu0 %v2350
    %v2389 = vpop.f32.mrb[0].mxu0
    %v2390 = vadd.f32 0.0, %v2389
    %v2391 = vpop.f32.mrb[0].mxu0
    %v2392 = vpop.f32.mrb[0].mxu0
    %v2393 = vpop.f32.mrb[0].mxu0
    %2394 = vdwg.mxu0
    %2397 = vrot.lane.b32.xlu0 %v2150, 8
    %v2398 = vpop.permute.xlu0 %2397
    %2399 = vrot.lane.b32.xlu0 %v2198, 8
    %v2400 = vpop.permute.xlu0 %2399
    %2405 = vrot.lane.b32.xlu0 %v2246, 16
    %v2406 = vpop.permute.xlu0 %2405
    %2407 = vrot.lane.b32.xlu0 %v2294, 16
    %v2408 = vpop.permute.xlu0 %2407
    %2413 = vrot.lane.b32.xlu0 %v2342, 24
    %v2414 = vpop.permute.xlu0 %2413
    %2415 = vrot.lane.b32.xlu0 %v2390, 24
    %v2416 = vpop.permute.xlu0 %2415
    %v2419 = vsel %vm185, %v2054, %v2398
    %v2420 = vsel %vm185, %v2102, %v2400
    %v2421 = vsel %vm1113, %v2419, %v2406
    %v2422 = vsel %vm1113, %v2420, %v2408
    %v2423 = vsel %vm1116, %v2421, %v2414
    %v2424 = vsel %vm1116, %v2422, %v2416
    %v2425 = vpack.c.bf16 %v2424, %v2423
    %s2426 = scalar_lea.vmem %s4, 16
    %v2427 = vld [vmem:[%s2426] sm:$0xf]
    %v2428 = vld [vmem:[%s2426 + $0x4] sm:$0xf]
    %v2429 = vld [vmem:[%s2426 + $0x8] sm:$0xf]
    %v2430 = vld [vmem:[%s2426 + $0xc] sm:$0xf]
    %v2431 = vlaneseq
    %v2432 = vshrl.u32 %v2431, 7
    %v2433 = vsub.s32 1, %v2432
    %v2434 = vrot.slane %v1430, %v2433
    %v2439 = vunpack.c.l.b16 %v2427
    %v2440 = vunpack.c.l.b16 %v2428
    %v2441 = vunpack.c.l.b16 %v2429
    %v2442 = vunpack.c.l.b16 %v2430
    %v2443 = vpack.c.b16 %v2440, %v2439
    %v2444 = vpack.c.b16 %v2442, %v2441
    %v2448 = vsel %vm47, %v2425, 0
    %2450 = vmatprep.subr.bf16.mxu0 0
    %2451 = vmatpush1.bf16.msra.mxu0 %v2443
    %2452 = vmatprep.subr.bf16.mxu0 0
    %2453 = vmatpush1.bf16.msra.mxu0 %v2444
    %2454 = vmatprep.subr.bf16.mxu0 0
    %2455 = vmatpush1.bf16.msra.mxu0 0
    %2456 = vmatprep.subr.bf16.mxu0 0
    %2457 = vmatpush1.bf16.msra.mxu0 0
    %2458 = vmatprep.subr.bf16.mxu0 0
    %2459 = vmatpush1.bf16.msra.mxu0 0
    %2460 = vmatprep.subr.bf16.mxu0 0
    %2461 = vmatpush1.bf16.msra.mxu0 0
    %2462 = vmatprep.subr.bf16.mxu0 0
    %2463 = vmatpush1.bf16.msra.mxu0 0
    %2464 = vmatprep.subr.bf16.mxu0 0
    %2465 = vmatpush1.bf16.msra.mxu0 0
    %2466 = vmatprep.subr.bf16.mxu0 0
    %2467 = vmatpush1.bf16.msra.mxu0 0
    %2468 = vmatprep.subr.bf16.mxu0 0
    %2469 = vmatpush1.bf16.msra.mxu0 0
    %2470 = vmatprep.subr.bf16.mxu0 0
    %2471 = vmatpush1.bf16.msra.mxu0 0
    %2472 = vmatprep.subr.bf16.mxu0 0
    %2473 = vmatpush1.bf16.msra.mxu0 0
    %2474 = vmatprep.subr.bf16.mxu0 0
    %2475 = vmatpush1.bf16.msra.mxu0 0
    %2476 = vmatprep.subr.bf16.mxu0 0
    %2477 = vmatpush1.bf16.msra.mxu0 0
    %2478 = vmatprep.subr.bf16.mxu0 0
    %2479 = vmatpush1.bf16.msra.mxu0 0
    %2480 = vmatprep.subr.bf16.mxu0 0
    %2481 = vmatpush1.bf16.msra.mxu0 0
    %2482 = vmatprep.mubr.bf16.mxu0 0
    %2483 = vmatmul.mubr.bf16.gmra.mrb[0].mxu0 %v2448
    %v2484 = vpop.f32.mrb[0].mxu0
    %v2485 = vadd.f32 %v2434, %v2484
    %v2486 = vpop.f32.mrb[0].mxu0
    %v2487 = vpop.f32.mrb[0].mxu0
    %v2488 = vadd.f32 %v2434, %v2487
    %v2489 = vpop.f32.mrb[0].mxu0
    %2490 = vdwg.mxu0
    %v2491 = vadd.f32 %v1427, %v2485
    %v2492 = vadd.f32 %v1428, %v2488
    %v2493 = vsel %vm47, %v2491, 0.0
    %2494 = vadd.xlane.f32.xlu0 %v2493
    %v2495 = vpop.xlane.xlu0 %2494
    %v2496 = vsel %vm47, %v2492, 0.0
    %2497 = vadd.xlane.f32.xlu0 %v2496
    %v2498 = vpop.xlane.xlu0 %2497
    %v2499 = vmul.f32 %v2495, %v54
    %v2500 = vmul.f32 %v2498, %v54
    %v2501 = vsub.f32 %v2491, %v2499
    %v2502 = vsub.f32 %v2492, %v2500
    %v2503 = vmul.f32 %v2501, %v2501
    %v2504 = vmul.f32 %v2502, %v2502
    %v2505 = vsel %vm47, %v2503, 0.0
    %2506 = vadd.xlane.f32.xlu0 %v2505
    %v2507 = vpop.xlane.xlu0 %2506
    %v2508 = vsel %vm47, %v2504, 0.0
    %2509 = vadd.xlane.f32.xlu0 %v2508
    %v2510 = vpop.xlane.xlu0 %2509
    %v2511 = vmul.f32 %v2507, %v54
    %v2512 = vmul.f32 %v2510, %v54
    %v2513 = vadd.f32 %v2511, 1e-12
    %v2514 = vadd.f32 %v2512, 1e-12
    %v2515 = vrsqrt.pop %v2513
    %v2516 = vrsqrt.pop %v2514
    %v2517 = vmul.f32 %v2501, %v2515
    %v2518 = vmul.f32 %v2502, %v2516
    %v2519 = vlaneseq
    %v2520 = vshrl.u32 %v2519, 7
    %v2521 = vsub.s32 2, %v2520
    %v2522 = vrot.slane %v1430, %v2521
    %v2523 = vmul.f32 %v2517, %v2522
    %v2524 = vmul.f32 %v2518, %v2522
    %v2525 = vlaneseq
    %v2526 = vshrl.u32 %v2525, 7
    %v2527 = vsub.s32 3, %v2526
    %v2528 = vrot.slane %v1430, %v2527
    %v2529 = vadd.f32 %v2523, %v2528
    %v2530 = vadd.f32 %v2524, %v2528
    %v2531 = vpack.c.bf16 %v2530, %v2529
    %s2532 = scalar_lea.vmem %s5, 16
    %v2533 = vld [vmem:[%s2532] sm:$0xf]
    %v2534 = vld [vmem:[%s2532 + $0x4] sm:$0xf]
    %v2535 = vld [vmem:[%s2532 + $0x8] sm:$0xf]
    %v2536 = vld [vmem:[%s2532 + $0xc] sm:$0xf]
    %v2537 = vlaneseq
    %v2538 = vshrl.u32 %v2537, 7
    %v2539 = vsub.s32 4, %v2538
    %v2540 = vrot.slane %v1430, %v2539
    %v2545 = vunpack.c.l.b16 %v2533
    %v2546 = vunpack.c.l.b16 %v2534
    %v2547 = vunpack.c.l.b16 %v2535
    %v2548 = vunpack.c.l.b16 %v2536
    %v2549 = vpack.c.b16 %v2546, %v2545
    %v2550 = vpack.c.b16 %v2548, %v2547
    %v2554 = vsel %vm47, %v2531, 0
    %2556 = vmatprep.subr.bf16.mxu0 0
    %2557 = vmatpush1.bf16.msra.mxu0 %v2549
    %2558 = vmatprep.subr.bf16.mxu0 0
    %2559 = vmatpush1.bf16.msra.mxu0 %v2550
    %2560 = vmatprep.subr.bf16.mxu0 0
    %2561 = vmatpush1.bf16.msra.mxu0 0
    %2562 = vmatprep.subr.bf16.mxu0 0
    %2563 = vmatpush1.bf16.msra.mxu0 0
    %2564 = vmatprep.subr.bf16.mxu0 0
    %2565 = vmatpush1.bf16.msra.mxu0 0
    %2566 = vmatprep.subr.bf16.mxu0 0
    %2567 = vmatpush1.bf16.msra.mxu0 0
    %2568 = vmatprep.subr.bf16.mxu0 0
    %2569 = vmatpush1.bf16.msra.mxu0 0
    %2570 = vmatprep.subr.bf16.mxu0 0
    %2571 = vmatpush1.bf16.msra.mxu0 0
    %2572 = vmatprep.subr.bf16.mxu0 0
    %2573 = vmatpush1.bf16.msra.mxu0 0
    %2574 = vmatprep.subr.bf16.mxu0 0
    %2575 = vmatpush1.bf16.msra.mxu0 0
    %2576 = vmatprep.subr.bf16.mxu0 0
    %2577 = vmatpush1.bf16.msra.mxu0 0
    %2578 = vmatprep.subr.bf16.mxu0 0
    %2579 = vmatpush1.bf16.msra.mxu0 0
    %2580 = vmatprep.subr.bf16.mxu0 0
    %2581 = vmatpush1.bf16.msra.mxu0 0
    %2582 = vmatprep.subr.bf16.mxu0 0
    %2583 = vmatpush1.bf16.msra.mxu0 0
    %2584 = vmatprep.subr.bf16.mxu0 0
    %2585 = vmatpush1.bf16.msra.mxu0 0
    %2586 = vmatprep.subr.bf16.mxu0 0
    %2587 = vmatpush1.bf16.msra.mxu0 0
    %2588 = vmatprep.mubr.bf16.mxu0 0
    %2589 = vmatmul.mubr.bf16.gmra.mrb[0].mxu0 %v2554
    %v2590 = vpop.f32.mrb[0].mxu0
    %v2591 = vadd.f32 %v2540, %v2590
    %v2592 = vpop.f32.mrb[0].mxu0
    %v2593 = vpop.f32.mrb[0].mxu0
    %v2594 = vadd.f32 %v2540, %v2593
    %v2595 = vpop.f32.mrb[0].mxu0
    %2596 = vdwg.mxu0
    %v2597 = vmul.f32 %v2591, %v2591
    %v2598 = vmul.f32 %v2594, %v2594
    %v2599 = vmul.f32 %v2591, %v2597
    %v2600 = vmul.f32 %v2594, %v2598
    %v2601 = vmul.f32 %v2599, 0.044715
    %v2602 = vmul.f32 %v2600, 0.044715
    %v2603 = vadd.f32 %v2591, %v2601
    %v2604 = vadd.f32 %v2594, %v2602
    %v2605 = vmul.f32 %v2603, 0.7978846
    %v2606 = vmul.f32 %v2604, 0.7978846
    %v2607 = vtanh.pop %v2605
    %v2608 = vtanh.pop %v2606
    %v2609 = vadd.f32 %v2607, 1.0
    %v2610 = vadd.f32 %v2608, 1.0
    %v2611 = vmul.f32 %v2609, 0.5
    %v2612 = vmul.f32 %v2610, 0.5
    %v2613 = vmul.f32 %v2591, %v2611
    %v2614 = vmul.f32 %v2594, %v2612
    %v2615 = vpack.c.bf16 %v2614, %v2613
    %s2616 = scalar_lea.vmem %s6, 32
    %v2617 = vld [vmem:[%s2616] sm:$0xf]
    %v2618 = vld [vmem:[%s2616 + $0x4] sm:$0xf]
    %v2619 = vld [vmem:[%s2616 + $0x8] sm:$0xf]
    %v2620 = vld [vmem:[%s2616 + $0xc] sm:$0xf]
    %v2621 = vld [vmem:[%s2616 + $0x10] sm:$0xf]
    %v2622 = vld [vmem:[%s2616 + $0x14] sm:$0xf]
    %v2623 = vld [vmem:[%s2616 + $0x18] sm:$0xf]
    %v2624 = vld [vmem:[%s2616 + $0x1c] sm:$0xf]
    %v2625 = vlaneseq
    %v2626 = vshrl.u32 %v2625, 7
    %v2627 = vsub.s32 5, %v2626
    %v2628 = vrot.slane %v1430, %v2627
    %v2637 = vunpack.c.l.b16 %v2617
    %v2638 = vunpack.c.l.b16 %v2618
    %v2639 = vunpack.c.l.b16 %v2619
    %v2640 = vunpack.c.l.b16 %v2620
    %v2641 = vunpack.c.l.b16 %v2621
    %v2642 = vunpack.c.l.b16 %v2622
    %v2643 = vunpack.c.l.b16 %v2623
    %v2644 = vunpack.c.l.b16 %v2624
    %v2645 = vpack.c.b16 %v2638, %v2637
    %v2646 = vpack.c.b16 %v2640, %v2639
    %v2647 = vpack.c.b16 %v2642, %v2641
    %v2648 = vpack.c.b16 %v2644, %v2643
    %v2654 = vsel %vm1344, %v2615, 0
    %2656 = vmatprep.subr.bf16.mxu0 0
    %2657 = vmatpush1.bf16.msra.mxu0 %v2645
    %2658 = vmatprep.subr.bf16.mxu0 0
    %2659 = vmatpush1.bf16.msra.mxu0 %v2646
    %2660 = vmatprep.subr.bf16.mxu0 0
    %2661 = vmatpush1.bf16.msra.mxu0 %v2647
    %2662 = vmatprep.subr.bf16.mxu0 0
    %2663 = vmatpush1.bf16.msra.mxu0 %v2648
    %2664 = vmatprep.subr.bf16.mxu0 0
    %2665 = vmatpush1.bf16.msra.mxu0 0
    %2666 = vmatprep.subr.bf16.mxu0 0
    %2667 = vmatpush1.bf16.msra.mxu0 0
    %2668 = vmatprep.subr.bf16.mxu0 0
    %2669 = vmatpush1.bf16.msra.mxu0 0
    %2670 = vmatprep.subr.bf16.mxu0 0
    %2671 = vmatpush1.bf16.msra.mxu0 0
    %2672 = vmatprep.subr.bf16.mxu0 0
    %2673 = vmatpush1.bf16.msra.mxu0 0
    %2674 = vmatprep.subr.bf16.mxu0 0
    %2675 = vmatpush1.bf16.msra.mxu0 0
    %2676 = vmatprep.subr.bf16.mxu0 0
    %2677 = vmatpush1.bf16.msra.mxu0 0
    %2678 = vmatprep.subr.bf16.mxu0 0
    %2679 = vmatpush1.bf16.msra.mxu0 0
    %2680 = vmatprep.subr.bf16.mxu0 0
    %2681 = vmatpush1.bf16.msra.mxu0 0
    %2682 = vmatprep.subr.bf16.mxu0 0
    %2683 = vmatpush1.bf16.msra.mxu0 0
    %2684 = vmatprep.subr.bf16.mxu0 0
    %2685 = vmatpush1.bf16.msra.mxu0 0
    %2686 = vmatprep.subr.bf16.mxu0 0
    %2687 = vmatpush1.bf16.msra.mxu0 0
    %2688 = vmatprep.mubr.bf16.mxu0 0
    %2689 = vmatmul.mubr.bf16.gmra.mrb[0].mxu0 %v2654
    %v2690 = vpop.f32.mrb[0].mxu0
    %v2691 = vadd.f32 %v2628, %v2690
    %v2692 = vpop.f32.mrb[0].mxu0
    %v2693 = vpop.f32.mrb[0].mxu0
    %v2694 = vadd.f32 %v2628, %v2693
    %v2695 = vpop.f32.mrb[0].mxu0
    %2696 = vdwg.mxu0
    %v2697 = vadd.f32 %v2529, %v2691
    %v2698 = vadd.f32 %v2530, %v2694
    %v2699 = vsel %vm47, %v2697, 0.0
    %2700 = vadd.xlane.f32.xlu0 %v2699
    %v2701 = vpop.xlane.xlu0 %2700
    %v2702 = vsel %vm47, %v2698, 0.0
    %2703 = vadd.xlane.f32.xlu0 %v2702
    %v2704 = vpop.xlane.xlu0 %2703
    %v2705 = vmul.f32 %v2701, %v54
    %v2706 = vmul.f32 %v2704, %v54
    %v2707 = vsub.f32 %v2697, %v2705
    %v2708 = vsub.f32 %v2698, %v2706
    %v2709 = vmul.f32 %v2707, %v2707
    %v2710 = vmul.f32 %v2708, %v2708
    %v2711 = vsel %vm47, %v2709, 0.0
    %2712 = vadd.xlane.f32.xlu0 %v2711
    %v2713 = vpop.xlane.xlu0 %2712
    %v2714 = vsel %vm47, %v2710, 0.0
    %2715 = vadd.xlane.f32.xlu0 %v2714
    %v2716 = vpop.xlane.xlu0 %2715
    %v2717 = vmul.f32 %v2713, %v54
    %v2718 = vmul.f32 %v2716, %v54
    %v2719 = vadd.f32 %v2717, 1e-12
    %v2720 = vadd.f32 %v2718, 1e-12
    %v2721 = vrsqrt.pop %v2719
    %v2722 = vrsqrt.pop %v2720
    %v2723 = vmul.f32 %v2707, %v2721
    %v2724 = vmul.f32 %v2708, %v2722
    %v2725 = vlaneseq
    %v2726 = vshrl.u32 %v2725, 7
    %v2727 = vsub.s32 6, %v2726
    %v2728 = vrot.slane %v1430, %v2727
    %v2729 = vmul.f32 %v2723, %v2728
    %v2730 = vmul.f32 %v2724, %v2728
    %v2731 = vlaneseq
    %v2732 = vshrl.u32 %v2731, 7
    %v2733 = vsub.s32 7, %v2732
    %v2734 = vrot.slane %v1430, %v2733
    %v2735 = vadd.f32 %v2729, %v2734
    %v2736 = vadd.f32 %v2730, %v2734
    %v2737 = vpack.c.bf16 %v2735, %v2735
    %v2738 = vpack.c.bf16 %v2736, %v2736
    %v2739 = vld [vmem:[%s8] sm:$0xf]
    %v2740 = vld [vmem:[%s8 + $0x4] sm:$0xf]
    %v2741 = vld [vmem:[%s8 + $0x8] sm:$0xf]
    %v2742 = vld [vmem:[%s8 + $0xc] sm:$0xf]
    %v2743 = vld [vmem:[%s9] sm:$0x1]
    %v2745 = vlaneseq
    %v2746 = vshrl.u32 %v2745, 7
    %v2747 = vsub.s32 0, %v2746
    %v2748 = vrot.slane %v2743, %v2747
    %v2752 = vunpack.c.l.b16 %v2737
    %v2753 = vunpack.c.l.b16 %v2738
    %v2754 = vrot.slane %v2753, 7
    %vm2755 = vcmask 1041409
    %v2756 = vsel %vm2755, %v2754, %v2752
    %v2757 = vpack.c.b16 %v2756, %v2756
    %v2762 = vunpack.c.l.b16 %v2739
    %v2763 = vunpack.c.l.b16 %v2740
    %v2764 = vunpack.c.l.b16 %v2741
    %v2765 = vunpack.c.l.b16 %v2742
    %v2766 = vpack.c.b16 %v2763, %v2762
    %v2767 = vpack.c.b16 %v2765, %v2764
    %v2771 = vsel %vm47, %v2757, 0
    %2773 = vmatprep.subr.bf16.mxu0 0
    %2774 = vmatpush1.bf16.msra.mxu0 %v2766
    %2775 = vmatprep.subr.bf16.mxu0 0
    %2776 = vmatpush1.bf16.msra.mxu0 %v2767
    %2777 = vmatprep.subr.bf16.mxu0 0
    %2778 = vmatpush1.bf16.msra.mxu0 0
    %2779 = vmatprep.subr.bf16.mxu0 0
    %2780 = vmatpush1.bf16.msra.mxu0 0
    %2781 = vmatprep.subr.bf16.mxu0 0
    %2782 = vmatpush1.bf16.msra.mxu0 0
    %2783 = vmatprep.subr.bf16.mxu0 0
    %2784 = vmatpush1.bf16.msra.mxu0 0
    %2785 = vmatprep.subr.bf16.mxu0 0
    %2786 = vmatpush1.bf16.msra.mxu0 0
    %2787 = vmatprep.subr.bf16.mxu0 0
    %2788 = vmatpush1.bf16.msra.mxu0 0
    %2789 = vmatprep.subr.bf16.mxu0 0
    %2790 = vmatpush1.bf16.msra.mxu0 0
    %2791 = vmatprep.subr.bf16.mxu0 0
    %2792 = vmatpush1.bf16.msra.mxu0 0
    %2793 = vmatprep.subr.bf16.mxu0 0
    %2794 = vmatpush1.bf16.msra.mxu0 0
    %2795 = vmatprep.subr.bf16.mxu0 0
    %2796 = vmatpush1.bf16.msra.mxu0 0
    %2797 = vmatprep.subr.bf16.mxu0 0
    %2798 = vmatpush1.bf16.msra.mxu0 0
    %2799 = vmatprep.subr.bf16.mxu0 0
    %2800 = vmatpush1.bf16.msra.mxu0 0
    %2801 = vmatprep.subr.bf16.mxu0 0
    %2802 = vmatpush1.bf16.msra.mxu0 0
    %2803 = vmatprep.subr.bf16.mxu0 0
    %2804 = vmatpush1.bf16.msra.mxu0 0
    %2805 = vmatprep.mubr.bf16.mxu0 0
    %2806 = vmatmul.mubr.bf16.gmra.mrb[0].mxu0 %v2771
    %v2807 = vpop.f32.mrb[0].mxu0
    %v2808 = vadd.f32 %v2748, %v2807
    %v2809 = vpop.f32.mrb[0].mxu0
    %v2810 = vpop.f32.mrb[0].mxu0
    %v2811 = vpop.f32.mrb[0].mxu0
    %2812 = vdwg.mxu0
    %v2813 = vtanh.pop %v2808
    %v2814 = vpack.c.bf16 %v2813, %v2813
    %v2815 = vld [vmem:[%s10] sm:$0xf]
    %v2816 = vld [vmem:[%s10 + $0x4] sm:$0xf]
    %v2817 = vld [vmem:[%s10 + $0x8] sm:$0xf]
    %v2818 = vld [vmem:[%s10 + $0xc] sm:$0xf]
    %v2819 = vld [vmem:[%s11] sm:$0x1]
    %v2821 = vlaneseq
    %v2822 = vshrl.u32 %v2821, 7
    %v2823 = vsub.s32 0, %v2822
    %v2824 = vrot.slane %v2819, %v2823
    %v2830 = vunpack.c.l.b16 %v2815
    %v2831 = vunpack.c.l.b16 %v2816
    %v2832 = vunpack.c.l.b16 %v2817
    %v2833 = vunpack.c.l.b16 %v2818
    %v2834 = vpack.c.b16 %v2831, %v2830
    %v2835 = vpack.c.b16 %v2833, %v2832
    %v2839 = vsel %vm47, %v2814, 0
    %2841 = vmatprep.subr.bf16.mxu0 0
    %2842 = vmatpush1.bf16.msra.mxu0 %v2834
    %2843 = vmatprep.subr.bf16.mxu0 0
    %2844 = vmatpush1.bf16.msra.mxu0 %v2835
    %2845 = vmatprep.subr.bf16.mxu0 0
    %2846 = vmatpush1.bf16.msra.mxu0 0
    %2847 = vmatprep.subr.bf16.mxu0 0
    %2848 = vmatpush1.bf16.msra.mxu0 0
    %2849 = vmatprep.subr.bf16.mxu0 0
    %2850 = vmatpush1.bf16.msra.mxu0 0
    %2851 = vmatprep.subr.bf16.mxu0 0
    %2852 = vmatpush1.bf16.msra.mxu0 0
    %2853 = vmatprep.subr.bf16.mxu0 0
    %2854 = vmatpush1.bf16.msra.mxu0 0
    %2855 = vmatprep.subr.bf16.mxu0 0
    %2856 = vmatpush1.bf16.msra.mxu0 0
    %2857 = vmatprep.subr.bf16.mxu0 0
    %2858 = vmatpush1.bf16.msra.mxu0 0
    %2859 = vmatprep.subr.bf16.mxu0 0
    %2860 = vmatpush1.bf16.msra.mxu0 0
    %2861 = vmatprep.subr.bf16.mxu0 0
    %2862 = vmatpush1.bf16.msra.mxu0 0
    %2863 = vmatprep.subr.bf16.mxu0 0
    %2864 = vmatpush1.bf16.msra.mxu0 0
    %2865 = vmatprep.subr.bf16.mxu0 0
    %2866 = vmatpush1.bf16.msra.mxu0 0
    %2867 = vmatprep.subr.bf16.mxu0 0
    %2868 = vmatpush1.bf16.msra.mxu0 0
    %2869 = vmatprep.subr.bf16.mxu0 0
    %2870 = vmatpush1.bf16.msra.mxu0 0
    %2871 = vmatprep.subr.bf16.mxu0 0
    %2872 = vmatpush1.bf16.msra.mxu0 0
    %2873 = vmatprep.mubr.bf16.mxu0 0
    %2874 = vmatmul.mubr.bf16.gmra.mrb[0].mxu0 %v2839
    %v2875 = vpop.f32.mrb[0].mxu0
    %v2876 = vadd.f32 %v2824, %v2875
    %v2877 = vpop.f32.mrb[0].mxu0
    %v2878 = vpop.f32.mrb[0].mxu0
    %v2879 = vpop.f32.mrb[0].mxu0
    %2880 = vdwg.mxu0
    %2881 = vst [vmem:[#allocation2] sm:$0x3] %v2876
    // Predicated region
    $region50: #{ayato_forward.1} parent=1 // pred_check
      _
    $region51: #{ayato_forward.1} parent=1 // pred_check_branch
      %2883 = sbr.rel (0) target = $region53
    $region52: #{ayato_forward.1} parent=1 // pred_region
      %s2885 = ssub.s32 32, 32
      %2886 = vsyncadd [#allocation3], %s2885
      %s2888 = sshll.u32 [#allocation2], 4
      %s2889 = int_to_ptr.vmem [resolvable:$true] %s2888
      %2891 = dma.vmem_to_hbm [thread:$0]  %s2889, 32, %s12, [#allocation3]
    $region53: #{ayato_forward.1} parent=1 // pred_fallthru
      _
    // Predicated region
    $region54: #{ayato_forward.1} parent=1 // pred_check
      _
    $region55: #{ayato_forward.1} parent=1 // pred_check_branch
      %2893 = sbr.rel (0) target = $region57
    $region56: #{ayato_forward.1} parent=1 // pred_region
      %2894 = dma.done [#allocation3], 32
    $region57: #{ayato_forward.1} parent=1 // pred_fallthru
      _
    %2895 = vsyncpa [#allocation3], 1

</llo_original>
